<compile_context>
chip_gen: v6e
topology: v6e:2x2x1
jax: 0.10.0
libtpu: 0.0.40
codegen_flags: <defaults>
</compile_context>

<pallas_src>
import functools

import jax
import jax.numpy as jnp
from jax import lax
from jax.experimental import pallas as pl
from jax.experimental.pallas import tpu as pltpu


# ----------------------------------------------------------------------------
# helpers
# ----------------------------------------------------------------------------
def _full_spec(shape):
    """BlockSpec covering the whole array (grid=(1,))."""
    nd = len(shape)
    return pl.BlockSpec(shape, lambda i, _nd=nd: (0,) * _nd)


def _dot(a, b):
    return jnp.dot(a, b, preferred_element_type=jnp.float32)


# ----------------------------------------------------------------------------
# the single fused kernel
# ----------------------------------------------------------------------------
def essrec_fused_kernel(
    ue_ref, ie_ref, acm_ref, acmt_ref, neta_ref,
    icw1_ref, icw2_ref, icb_ref,        # item_concat   (Linear 2E -> E)
    ucw1_ref, ucw2_ref, ucb_ref,        # user_concat   (Linear 2E -> E)
    cuiw1_ref, cuiw2_ref, cuib_ref,     # concat_user_item_layer
    pnw1_ref, pnw2_ref, pnb_ref,        # concat_PN_layer
    cuw1_ref, cuw2_ref, cub_ref,        # concat_user_layer
    user_out_ref, item_out_ref,
    *, gnn_layer_size, gnn_layer_size_k, sim_threshold,
):
    ue = ue_ref[...]          # (U, E)
    ie = ie_ref[...]          # (I, E)
    acm = acm_ref[...]        # (U, I)   row-normalized interaction matrix
    acmt = acmt_ref[...]      # (I, U)   row-normalized transposed interaction
    net_a = neta_ref[...]     # (U, U)   signed social net (+ identity), entries in {-1,0,1}

    def linear2(x1, x2, w1, w2, b):
        # y = cat([x1, x2], 1) @ W.T + b  with W pre-transposed & split at init.
        return _dot(x1, w1) + _dot(x2, w2) + b

    # ---- user_item_graph_convolution ----
    item_rep0 = _dot(acm, ie)                                  # (U, E)
    user_rep0 = _dot(acmt, ue)                                 # (I, E)
    item_init = linear2(ie, _dot(acmt, item_rep0),
                        icw1_ref[...], icw2_ref[...], icb_ref[...])   # (I, E)
    user_init = linear2(ue, _dot(acm, user_rep0),
                        ucw1_ref[...], ucw2_ref[...], ucb_ref[...])   # (U, E)

    # ---- forward trunk ----
    item_rep = _dot(acm, item_init)                            # (U, E)
    e_mat = linear2(user_init, item_rep,
                    cuiw1_ref[...], cuiw2_ref[...], cuib_ref[...])    # (U, E)

    # ---- fused cosine similarity + signed split + degree normalization ----
    # NOTE: item_rep (and hence the signed split / conv matrices) is constant
    # across the outer k-loop in the reference forward(), so it is computed once.
    sumsq = jnp.sum(item_rep * item_rep, axis=1, keepdims=True)
    # 1 / max(||x||, 1e-8)  (F.cosine_similarity eps), via EUP rsqrt.
    inv_norm = lax.rsqrt(jnp.maximum(sumsq, 1e-16))
    xn = item_rep * inv_norm
    c_sim = _dot(xn, jnp.transpose(xn))                        # (U, U) pairwise cosine

    thr = sim_threshold
    p_mask = jnp.logical_and(net_a == 1.0, c_sim > thr)
    n_mask = jnp.logical_and(net_a == -1.0, c_sim <= thr)
    o_mask = jnp.logical_and(net_a != 0.0,
                             jnp.logical_not(jnp.logical_or(p_mask, n_mask)))

    def row_norm(mask):
        m = mask.astype(jnp.float32)
        deg = jnp.sum(m, axis=1, keepdims=True) + 1e-7          # (matrix>0).sum + eps
        return m / deg                                           # D^{-1} @ M

    pcm = row_norm(p_mask)
    ncm = row_norm(n_mask)
    ocm = row_norm(o_mask)
    scm = pcm + ncm     # P/N masks are disjoint -> exact union; saves one matmul per step

    # ---- fused signed-GNN propagation (both loops unrolled at trace time) ----
    p_total = n_total = o_total = None
    cur = e_mat
    for _k in range(gnn_layer_size_k):
        p = _dot(pcm, cur)
        n = _dot(ncm, cur)
        o = _dot(ocm, cur)
        for _i in range(1, gnn_layer_size):
            pno = p + n + o
            p1 = (_dot(pcm, p) + _dot(ncm, n)) * 0.5
            n1 = (_dot(ncm, p) + _dot(pcm, n)) * 0.5
            # mean(PCM@o, NCM@o, OCM@p, OCM@n, OCM@o) == (SCM@o + OCM@(p+n+o)) / 5
            o1 = (_dot(scm, o) + _dot(ocm, pno)) * 0.2
            p, n, o = p1, n1, o1
        if p_total is None:
            p_total, n_total, o_total = p, n, o
        else:
            p_total = p_total + p
            n_total = n_total + n
            o_total = o_total + o
        cur = (p + n + o) * (1.0 / 3.0)

    inv_k = 1.0 / gnn_layer_size_k
    p_avg = p_total * inv_k
    n_avg = n_total * inv_k
    o_avg = o_total * inv_k

    user_pn = linear2(p_avg, n_avg, pnw1_ref[...], pnw2_ref[...], pnb_ref[...])
    user_final = linear2(user_pn, o_avg, cuw1_ref[...], cuw2_ref[...], cub_ref[...])

    user_out_ref[...] = user_final
    item_out_ref[...] = item_init


# ----------------------------------------------------------------------------
# wrapper
# ----------------------------------------------------------------------------
def essrec_forward(prep, ACM, ACM_T, net_A, *,
                   gnn_layer_size, gnn_layer_size_k, sim_threshold):
    U, E = prep["user_emb"].shape
    I = prep["item_emb"].shape[0]

    inputs = (
        prep["user_emb"], prep["item_emb"], ACM, ACM_T, net_A,
        prep["item_concat_w1"], prep["item_concat_w2"], prep["item_concat_b"],
        prep["user_concat_w1"], prep["user_concat_w2"], prep["user_concat_b"],
        prep["cui_w1"], prep["cui_w2"], prep["cui_b"],
        prep["pn_w1"], prep["pn_w2"], prep["pn_b"],
        prep["cu_w1"], prep["cu_w2"], prep["cu_b"],
    )

    kern = functools.partial(
        essrec_fused_kernel,
        gnn_layer_size=int(gnn_layer_size),
        gnn_layer_size_k=int(gnn_layer_size_k),
        sim_threshold=float(sim_threshold),
    )

    # TODO(synk): for non-toy graphs (U >~ 1k) switch the (U,U)x(U,E) products to
    # a tiled BlockSpec with a K-reduction grid axis + f32 VMEM accumulator and
    # bf16 MXU operands; at U=16/E=32 the whole working set is << 1 MiB of VMEM.
    return pl.pallas_call(
        kern,
        out_shape=(jax.ShapeDtypeStruct((U, E), jnp.float32),
                   jax.ShapeDtypeStruct((I, E), jnp.float32)),
        grid=(1,),
        in_specs=[_full_spec(x.shape) for x in inputs],
        out_specs=(_full_spec((U, E)), _full_spec((I, E))),
        compiler_params=pltpu.CompilerParams(
            dimension_semantics=("arbitrary",),
            vmem_limit_bytes=32 * 1024 * 1024),
    )(*inputs)


# ----------------------------------------------------------------------------
# plain-JAX one-time setup matching the PyTorch module __init__
# ----------------------------------------------------------------------------
def get_convolution_matrix_dense(M):
    """D^{-1} @ M with D = diag((M > 0).sum(axis=1) + 1e-7)."""
    deg = jnp.sum((M > 0).astype(jnp.float32), axis=1) + 1e-7
    return M / deg[:, None]


def prepare_linear(W, b, split):
    """nn.Linear weight (out, in1+in2) -> pre-transposed halves (done once)."""
    Wt = jnp.transpose(W)                       # (in1+in2, out)
    return Wt[:split], Wt[split:], b.reshape(1, -1)


# ----------------------------------------------------------------------------
# main
# ----------------------------------------------------------------------------
if __name__ == "__main__":
    n_users, n_items, emb = 16, 24, 32
    gnn_layer_size, gnn_layer_size_k, sim_threshold = 2, 2, 0.0

    key = jax.random.PRNGKey(0)
    ks = jax.random.split(key, 16)

    # synthetic interaction matrix (ratings 1..5, ~30% density)
    mask_r = (jax.random.uniform(ks[0], (n_users, n_items)) < 0.3).astype(jnp.float32)
    ratings = jnp.floor(jax.random.uniform(ks[1], (n_users, n_items)) * 5.0) + 1.0
    R = mask_r * ratings                                            # (U, I)

    # synthetic signed social net (+identity), entries exactly in {-1, 0, 1}
    signs = jnp.where(jax.random.uniform(ks[2], (n_users, n_users)) < 0.5, 1.0, -1.0)
    mask_a = (jax.random.uniform(ks[3], (n_users, n_users)) < 0.25).astype(jnp.float32)
    A = signs * mask_a
    eye = jnp.eye(n_users, dtype=jnp.float32)
    net_A = A * (1.0 - eye) + eye                                   # net_matrix + I

    ACM = get_convolution_matrix_dense(R)                           # (U, I)
    ACM_T = get_convolution_matrix_dense(jnp.transpose(R))          # (I, U)

    def lin(k, out_dim, in_dim):
        kw, kb = jax.random.split(k)
        w = jax.random.normal(kw, (out_dim, in_dim), jnp.float32) * 0.1
        b = jax.random.normal(kb, (out_dim,), jnp.float32) * 0.01
        return w, b

    # nn.Linear-layout parameters ...
    user_emb = jax.random.normal(ks[4], (n_users, emb), jnp.float32) * 0.1
    item_emb = jax.random.normal(ks[5], (n_items, emb), jnp.float32) * 0.1
    uc_w, uc_b = lin(ks[6], emb, 2 * emb)
    ic_w, ic_b = lin(ks[7], emb, 2 * emb)
    cui_w, cui_b = lin(ks[8], emb, 2 * emb)
    pn_w, pn_b = lin(ks[9], emb, 2 * emb)
    cu_w, cu_b = lin(ks[10], emb, 2 * emb)
    # TODO(synk): sim_layer, concat_PON_layer and SCM exist in __init__ but are
    # never used in forward(); they are intentionally not instantiated here.

    # ... pre-transposed/split ONCE so no transpose/slice ops run per forward.
    prep = {"user_emb": user_emb, "item_emb": item_emb}
    prep["user_concat_w1"], prep["user_concat_w2"], prep["user_concat_b"] = prepare_linear(uc_w, uc_b, emb)
    prep["item_concat_w1"], prep["item_concat_w2"], prep["item_concat_b"] = prepare_linear(ic_w, ic_b, emb)
    prep["cui_w1"], prep["cui_w2"], prep["cui_b"] = prepare_linear(cui_w, cui_b, emb)
    prep["pn_w1"], prep["pn_w2"], prep["pn_b"] = prepare_linear(pn_w, pn_b, emb)
    prep["cu_w1"], prep["cu_w2"], prep["cu_b"] = prepare_linear(cu_w, cu_b, emb)

    user_final, item_final = essrec_forward(
        prep, ACM, ACM_T, net_A,
        gnn_layer_size=gnn_layer_size,
        gnn_layer_size_k=gnn_layer_size_k,
        sim_threshold=sim_threshold,
    )
    jax.block_until_ready((user_final, item_final))
    assert user_final.shape == (n_users, emb)
    assert item_final.shape == (n_items, emb)
    print("KERNEL_OK")
</pallas_src>

<mosaic_0001>
module attributes {stable_mosaic.version = 11 : i64} {
  func.func @essrec_fused_kernel(%arg0: i32, %arg1: memref<16x32xf32, #tpu.memory_space<vmem>>, %arg2: memref<24x32xf32, #tpu.memory_space<vmem>>, %arg3: memref<16x24xf32, #tpu.memory_space<vmem>>, %arg4: memref<24x16xf32, #tpu.memory_space<vmem>>, %arg5: memref<16x16xf32, #tpu.memory_space<vmem>>, %arg6: memref<32x32xf32, #tpu.memory_space<vmem>>, %arg7: memref<32x32xf32, #tpu.memory_space<vmem>>, %arg8: memref<1x32xf32, #tpu.memory_space<vmem>>, %arg9: memref<32x32xf32, #tpu.memory_space<vmem>>, %arg10: memref<32x32xf32, #tpu.memory_space<vmem>>, %arg11: memref<1x32xf32, #tpu.memory_space<vmem>>, %arg12: memref<32x32xf32, #tpu.memory_space<vmem>>, %arg13: memref<32x32xf32, #tpu.memory_space<vmem>>, %arg14: memref<1x32xf32, #tpu.memory_space<vmem>>, %arg15: memref<32x32xf32, #tpu.memory_space<vmem>>, %arg16: memref<32x32xf32, #tpu.memory_space<vmem>>, %arg17: memref<1x32xf32, #tpu.memory_space<vmem>>, %arg18: memref<32x32xf32, #tpu.memory_space<vmem>>, %arg19: memref<32x32xf32, #tpu.memory_space<vmem>>, %arg20: memref<1x32xf32, #tpu.memory_space<vmem>>, %arg21: memref<16x32xf32, #tpu.memory_space<vmem>>, %arg22: memref<24x32xf32, #tpu.memory_space<vmem>>) attributes {dimension_semantics = [#tpu.dimension_semantics<arbitrary>], iteration_bounds = array<i64: 1>, scalar_prefetch = 0 : i64, scratch_operands = 0 : i64, tpu.core_type = #tpu.core_type<tc>, window_params = [{pipeline_mode = #tpu.pipeline_mode<synchronous>, transform_indices = @transform_0, window_bounds = array<i64: 16, 32>}, {pipeline_mode = #tpu.pipeline_mode<synchronous>, transform_indices = @transform_1, window_bounds = array<i64: 24, 32>}, {pipeline_mode = #tpu.pipeline_mode<synchronous>, transform_indices = @transform_2, window_bounds = array<i64: 16, 24>}, {pipeline_mode = #tpu.pipeline_mode<synchronous>, transform_indices = @transform_3, window_bounds = array<i64: 24, 16>}, {pipeline_mode = #tpu.pipeline_mode<synchronous>, transform_indices = @transform_4, window_bounds = array<i64: 16, 16>}, {pipeline_mode = #tpu.pipeline_mode<synchronous>, transform_indices = @transform_5, window_bounds = array<i64: 32, 32>}, {pipeline_mode = #tpu.pipeline_mode<synchronous>, transform_indices = @transform_6, window_bounds = array<i64: 32, 32>}, {pipeline_mode = #tpu.pipeline_mode<synchronous>, transform_indices = @transform_7, window_bounds = array<i64: 1, 32>}, {pipeline_mode = #tpu.pipeline_mode<synchronous>, transform_indices = @transform_8, window_bounds = array<i64: 32, 32>}, {pipeline_mode = #tpu.pipeline_mode<synchronous>, transform_indices = @transform_9, window_bounds = array<i64: 32, 32>}, {pipeline_mode = #tpu.pipeline_mode<synchronous>, transform_indices = @transform_10, window_bounds = array<i64: 1, 32>}, {pipeline_mode = #tpu.pipeline_mode<synchronous>, transform_indices = @transform_11, window_bounds = array<i64: 32, 32>}, {pipeline_mode = #tpu.pipeline_mode<synchronous>, transform_indices = @transform_12, window_bounds = array<i64: 32, 32>}, {pipeline_mode = #tpu.pipeline_mode<synchronous>, transform_indices = @transform_13, window_bounds = array<i64: 1, 32>}, {pipeline_mode = #tpu.pipeline_mode<synchronous>, transform_indices = @transform_14, window_bounds = array<i64: 32, 32>}, {pipeline_mode = #tpu.pipeline_mode<synchronous>, transform_indices = @transform_15, window_bounds = array<i64: 32, 32>}, {pipeline_mode = #tpu.pipeline_mode<synchronous>, transform_indices = @transform_16, window_bounds = array<i64: 1, 32>}, {pipeline_mode = #tpu.pipeline_mode<synchronous>, transform_indices = @transform_17, window_bounds = array<i64: 32, 32>}, {pipeline_mode = #tpu.pipeline_mode<synchronous>, transform_indices = @transform_18, window_bounds = array<i64: 32, 32>}, {pipeline_mode = #tpu.pipeline_mode<synchronous>, transform_indices = @transform_19, window_bounds = array<i64: 1, 32>}, {pipeline_mode = #tpu.pipeline_mode<synchronous>, transform_indices = @transform_20, window_bounds = array<i64: 16, 32>}, {pipeline_mode = #tpu.pipeline_mode<synchronous>, transform_indices = @transform_21, window_bounds = array<i64: 24, 32>}]} {
    %c0 = arith.constant 0 : index
    %c0_0 = arith.constant 0 : index
    %0 = vector.load %arg1[%c0, %c0_0] : memref<16x32xf32, #tpu.memory_space<vmem>>, vector<16x32xf32>
    %c0_1 = arith.constant 0 : index
    %c0_2 = arith.constant 0 : index
    %1 = vector.load %arg2[%c0_1, %c0_2] : memref<24x32xf32, #tpu.memory_space<vmem>>, vector<24x32xf32>
    %c0_3 = arith.constant 0 : index
    %c0_4 = arith.constant 0 : index
    %2 = vector.load %arg3[%c0_3, %c0_4] : memref<16x24xf32, #tpu.memory_space<vmem>>, vector<16x24xf32>
    %c0_5 = arith.constant 0 : index
    %c0_6 = arith.constant 0 : index
    %3 = vector.load %arg4[%c0_5, %c0_6] : memref<24x16xf32, #tpu.memory_space<vmem>>, vector<24x16xf32>
    %c0_7 = arith.constant 0 : index
    %c0_8 = arith.constant 0 : index
    %4 = vector.load %arg5[%c0_7, %c0_8] : memref<16x16xf32, #tpu.memory_space<vmem>>, vector<16x16xf32>
    %cst = arith.constant dense<0.000000e+00> : vector<16x32xf32>
    %5 = tpu.matmul %2, %1, %cst {dimension_numbers = #tpu.dot_dimension_numbers<[1], [0], [0], [1], [0, 0, 1, 1], [], []>} : vector<16x24xf32>, vector<24x32xf32>, vector<16x32xf32> -> vector<16x32xf32>
    %cst_9 = arith.constant dense<0.000000e+00> : vector<24x32xf32>
    %6 = tpu.matmul %3, %0, %cst_9 {dimension_numbers = #tpu.dot_dimension_numbers<[1], [0], [0], [1], [0, 0, 1, 1], [], []>} : vector<24x16xf32>, vector<16x32xf32>, vector<24x32xf32> -> vector<24x32xf32>
    %cst_10 = arith.constant dense<0.000000e+00> : vector<24x32xf32>
    %7 = tpu.matmul %3, %5, %cst_10 {dimension_numbers = #tpu.dot_dimension_numbers<[1], [0], [0], [1], [0, 0, 1, 1], [], []>} : vector<24x16xf32>, vector<16x32xf32>, vector<24x32xf32> -> vector<24x32xf32>
    %c0_11 = arith.constant 0 : index
    %c0_12 = arith.constant 0 : index
    %8 = vector.load %arg6[%c0_11, %c0_12] : memref<32x32xf32, #tpu.memory_space<vmem>>, vector<32x32xf32>
    %c0_13 = arith.constant 0 : index
    %c0_14 = arith.constant 0 : index
    %9 = vector.load %arg7[%c0_13, %c0_14] : memref<32x32xf32, #tpu.memory_space<vmem>>, vector<32x32xf32>
    %c0_15 = arith.constant 0 : index
    %c0_16 = arith.constant 0 : index
    %10 = vector.load %arg8[%c0_15, %c0_16] : memref<1x32xf32, #tpu.memory_space<vmem>>, vector<1x32xf32>
    %cst_17 = arith.constant dense<0.000000e+00> : vector<24x32xf32>
    %11 = tpu.matmul %1, %8, %cst_17 {dimension_numbers = #tpu.dot_dimension_numbers<[1], [0], [0], [1], [0, 0, 1, 1], [], []>} : vector<24x32xf32>, vector<32x32xf32>, vector<24x32xf32> -> vector<24x32xf32>
    %cst_18 = arith.constant dense<0.000000e+00> : vector<24x32xf32>
    %12 = tpu.matmul %7, %9, %cst_18 {dimension_numbers = #tpu.dot_dimension_numbers<[1], [0], [0], [1], [0, 0, 1, 1], [], []>} : vector<24x32xf32>, vector<32x32xf32>, vector<24x32xf32> -> vector<24x32xf32>
    %13 = arith.addf %11, %12 : vector<24x32xf32>
    %14 = vector.broadcast %10 : vector<1x32xf32> to vector<24x32xf32>
    %15 = arith.addf %13, %14 : vector<24x32xf32>
    %cst_19 = arith.constant dense<0.000000e+00> : vector<16x32xf32>
    %16 = tpu.matmul %2, %6, %cst_19 {dimension_numbers = #tpu.dot_dimension_numbers<[1], [0], [0], [1], [0, 0, 1, 1], [], []>} : vector<16x24xf32>, vector<24x32xf32>, vector<16x32xf32> -> vector<16x32xf32>
    %c0_20 = arith.constant 0 : index
    %c0_21 = arith.constant 0 : index
    %17 = vector.load %arg9[%c0_20, %c0_21] : memref<32x32xf32, #tpu.memory_space<vmem>>, vector<32x32xf32>
    %c0_22 = arith.constant 0 : index
    %c0_23 = arith.constant 0 : index
    %18 = vector.load %arg10[%c0_22, %c0_23] : memref<32x32xf32, #tpu.memory_space<vmem>>, vector<32x32xf32>
    %c0_24 = arith.constant 0 : index
    %c0_25 = arith.constant 0 : index
    %19 = vector.load %arg11[%c0_24, %c0_25] : memref<1x32xf32, #tpu.memory_space<vmem>>, vector<1x32xf32>
    %cst_26 = arith.constant dense<0.000000e+00> : vector<16x32xf32>
    %20 = tpu.matmul %0, %17, %cst_26 {dimension_numbers = #tpu.dot_dimension_numbers<[1], [0], [0], [1], [0, 0, 1, 1], [], []>} : vector<16x32xf32>, vector<32x32xf32>, vector<16x32xf32> -> vector<16x32xf32>
    %cst_27 = arith.constant dense<0.000000e+00> : vector<16x32xf32>
    %21 = tpu.matmul %16, %18, %cst_27 {dimension_numbers = #tpu.dot_dimension_numbers<[1], [0], [0], [1], [0, 0, 1, 1], [], []>} : vector<16x32xf32>, vector<32x32xf32>, vector<16x32xf32> -> vector<16x32xf32>
    %22 = arith.addf %20, %21 : vector<16x32xf32>
    %23 = vector.broadcast %19 : vector<1x32xf32> to vector<16x32xf32>
    %24 = arith.addf %22, %23 : vector<16x32xf32>
    %cst_28 = arith.constant dense<0.000000e+00> : vector<16x32xf32>
    %25 = tpu.matmul %2, %15, %cst_28 {dimension_numbers = #tpu.dot_dimension_numbers<[1], [0], [0], [1], [0, 0, 1, 1], [], []>} : vector<16x24xf32>, vector<24x32xf32>, vector<16x32xf32> -> vector<16x32xf32>
    %c0_29 = arith.constant 0 : index
    %c0_30 = arith.constant 0 : index
    %26 = vector.load %arg12[%c0_29, %c0_30] : memref<32x32xf32, #tpu.memory_space<vmem>>, vector<32x32xf32>
    %c0_31 = arith.constant 0 : index
    %c0_32 = arith.constant 0 : index
    %27 = vector.load %arg13[%c0_31, %c0_32] : memref<32x32xf32, #tpu.memory_space<vmem>>, vector<32x32xf32>
    %c0_33 = arith.constant 0 : index
    %c0_34 = arith.constant 0 : index
    %28 = vector.load %arg14[%c0_33, %c0_34] : memref<1x32xf32, #tpu.memory_space<vmem>>, vector<1x32xf32>
    %cst_35 = arith.constant dense<0.000000e+00> : vector<16x32xf32>
    %29 = tpu.matmul %24, %26, %cst_35 {dimension_numbers = #tpu.dot_dimension_numbers<[1], [0], [0], [1], [0, 0, 1, 1], [], []>} : vector<16x32xf32>, vector<32x32xf32>, vector<16x32xf32> -> vector<16x32xf32>
    %cst_36 = arith.constant dense<0.000000e+00> : vector<16x32xf32>
    %30 = tpu.matmul %25, %27, %cst_36 {dimension_numbers = #tpu.dot_dimension_numbers<[1], [0], [0], [1], [0, 0, 1, 1], [], []>} : vector<16x32xf32>, vector<32x32xf32>, vector<16x32xf32> -> vector<16x32xf32>
    %31 = arith.addf %29, %30 : vector<16x32xf32>
    %32 = vector.broadcast %28 : vector<1x32xf32> to vector<16x32xf32>
    %33 = arith.addf %31, %32 : vector<16x32xf32>
    %34 = arith.mulf %25, %25 : vector<16x32xf32>
    %cst_37 = arith.constant dense<0.000000e+00> : vector<16xf32>
    %35 = vector.multi_reduction <add>, %34, %cst_37 [1] : vector<16x32xf32> to vector<16xf32>
    %36 = vector.shape_cast %35 : vector<16xf32> to vector<16x1xf32>
    %cst_38 = arith.constant 1.000000e-16 : f32
    %37 = vector.broadcast %cst_38 : f32 to vector<16x1xf32>
    %38 = arith.maximumf %36, %37 : vector<16x1xf32>
    %39 = math.rsqrt %38 : vector<16x1xf32>
    %40 = vector.broadcast %39 : vector<16x1xf32> to vector<16x32xf32>
    %41 = arith.mulf %25, %40 : vector<16x32xf32>
    %42 = tpu.transpose %41, [1, 0] : vector<16x32xf32> -> vector<32x16xf32>
    %cst_39 = arith.constant dense<0.000000e+00> : vector<16x16xf32>
    %43 = tpu.matmul %41, %42, %cst_39 {dimension_numbers = #tpu.dot_dimension_numbers<[1], [0], [0], [1], [0, 0, 1, 1], [], []>} : vector<16x32xf32>, vector<32x16xf32>, vector<16x16xf32> -> vector<16x16xf32>
    %cst_40 = arith.constant 1.000000e+00 : f32
    %44 = vector.broadcast %cst_40 : f32 to vector<16x16xf32>
    %45 = arith.cmpf oeq, %4, %44 : vector<16x16xf32>
    %cst_41 = arith.constant 0.000000e+00 : f32
    %46 = vector.broadcast %cst_41 : f32 to vector<16x16xf32>
    %47 = arith.cmpf ogt, %43, %46 : vector<16x16xf32>
    %48 = arith.andi %45, %47 : vector<16x16xi1>
    %cst_42 = arith.constant -1.000000e+00 : f32
    %49 = vector.broadcast %cst_42 : f32 to vector<16x16xf32>
    %50 = arith.cmpf oeq, %4, %49 : vector<16x16xf32>
    %cst_43 = arith.constant 0.000000e+00 : f32
    %51 = vector.broadcast %cst_43 : f32 to vector<16x16xf32>
    %52 = arith.cmpf ole, %43, %51 : vector<16x16xf32>
    %53 = arith.andi %50, %52 : vector<16x16xi1>
    %cst_44 = arith.constant 0.000000e+00 : f32
    %54 = vector.broadcast %cst_44 : f32 to vector<16x16xf32>
    %55 = arith.cmpf one, %4, %54 : vector<16x16xf32>
    %56 = arith.ori %48, %53 : vector<16x16xi1>
    %cst_45 = arith.constant dense<true> : vector<16x16xi1>
    %57 = arith.xori %56, %cst_45 : vector<16x16xi1>
    %58 = arith.andi %55, %57 : vector<16x16xi1>
    %59 = arith.extui %48 : vector<16x16xi1> to vector<16x16xi32>
    %60 = arith.sitofp %59 : vector<16x16xi32> to vector<16x16xf32>
    %cst_46 = arith.constant dense<0.000000e+00> : vector<16xf32>
    %61 = vector.multi_reduction <add>, %60, %cst_46 [1] : vector<16x16xf32> to vector<16xf32>
    %62 = vector.shape_cast %61 : vector<16xf32> to vector<16x1xf32>
    %cst_47 = arith.constant 1.000000e-07 : f32
    %63 = vector.broadcast %cst_47 : f32 to vector<16x1xf32>
    %64 = arith.addf %62, %63 : vector<16x1xf32>
    %65 = vector.broadcast %64 : vector<16x1xf32> to vector<16x16xf32>
    %66 = arith.divf %60, %65 : vector<16x16xf32>
    %67 = arith.extui %53 : vector<16x16xi1> to vector<16x16xi32>
    %68 = arith.sitofp %67 : vector<16x16xi32> to vector<16x16xf32>
    %cst_48 = arith.constant dense<0.000000e+00> : vector<16xf32>
    %69 = vector.multi_reduction <add>, %68, %cst_48 [1] : vector<16x16xf32> to vector<16xf32>
    %70 = vector.shape_cast %69 : vector<16xf32> to vector<16x1xf32>
    %cst_49 = arith.constant 1.000000e-07 : f32
    %71 = vector.broadcast %cst_49 : f32 to vector<16x1xf32>
    %72 = arith.addf %70, %71 : vector<16x1xf32>
    %73 = vector.broadcast %72 : vector<16x1xf32> to vector<16x16xf32>
    %74 = arith.divf %68, %73 : vector<16x16xf32>
    %75 = arith.extui %58 : vector<16x16xi1> to vector<16x16xi32>
    %76 = arith.sitofp %75 : vector<16x16xi32> to vector<16x16xf32>
    %cst_50 = arith.constant dense<0.000000e+00> : vector<16xf32>
    %77 = vector.multi_reduction <add>, %76, %cst_50 [1] : vector<16x16xf32> to vector<16xf32>
    %78 = vector.shape_cast %77 : vector<16xf32> to vector<16x1xf32>
    %cst_51 = arith.constant 1.000000e-07 : f32
    %79 = vector.broadcast %cst_51 : f32 to vector<16x1xf32>
    %80 = arith.addf %78, %79 : vector<16x1xf32>
    %81 = vector.broadcast %80 : vector<16x1xf32> to vector<16x16xf32>
    %82 = arith.divf %76, %81 : vector<16x16xf32>
    %83 = arith.addf %66, %74 : vector<16x16xf32>
    %cst_52 = arith.constant dense<0.000000e+00> : vector<16x32xf32>
    %84 = tpu.matmul %66, %33, %cst_52 {dimension_numbers = #tpu.dot_dimension_numbers<[1], [0], [0], [1], [0, 0, 1, 1], [], []>} : vector<16x16xf32>, vector<16x32xf32>, vector<16x32xf32> -> vector<16x32xf32>
    %cst_53 = arith.constant dense<0.000000e+00> : vector<16x32xf32>
    %85 = tpu.matmul %74, %33, %cst_53 {dimension_numbers = #tpu.dot_dimension_numbers<[1], [0], [0], [1], [0, 0, 1, 1], [], []>} : vector<16x16xf32>, vector<16x32xf32>, vector<16x32xf32> -> vector<16x32xf32>
    %cst_54 = arith.constant dense<0.000000e+00> : vector<16x32xf32>
    %86 = tpu.matmul %82, %33, %cst_54 {dimension_numbers = #tpu.dot_dimension_numbers<[1], [0], [0], [1], [0, 0, 1, 1], [], []>} : vector<16x16xf32>, vector<16x32xf32>, vector<16x32xf32> -> vector<16x32xf32>
    %87 = arith.addf %84, %85 : vector<16x32xf32>
    %88 = arith.addf %87, %86 : vector<16x32xf32>
    %cst_55 = arith.constant dense<0.000000e+00> : vector<16x32xf32>
    %89 = tpu.matmul %66, %84, %cst_55 {dimension_numbers = #tpu.dot_dimension_numbers<[1], [0], [0], [1], [0, 0, 1, 1], [], []>} : vector<16x16xf32>, vector<16x32xf32>, vector<16x32xf32> -> vector<16x32xf32>
    %cst_56 = arith.constant dense<0.000000e+00> : vector<16x32xf32>
    %90 = tpu.matmul %74, %85, %cst_56 {dimension_numbers = #tpu.dot_dimension_numbers<[1], [0], [0], [1], [0, 0, 1, 1], [], []>} : vector<16x16xf32>, vector<16x32xf32>, vector<16x32xf32> -> vector<16x32xf32>
    %91 = arith.addf %89, %90 : vector<16x32xf32>
    %cst_57 = arith.constant 5.000000e-01 : f32
    %92 = vector.broadcast %cst_57 : f32 to vector<16x32xf32>
    %93 = arith.mulf %91, %92 : vector<16x32xf32>
    %cst_58 = arith.constant dense<0.000000e+00> : vector<16x32xf32>
    %94 = tpu.matmul %74, %84, %cst_58 {dimension_numbers = #tpu.dot_dimension_numbers<[1], [0], [0], [1], [0, 0, 1, 1], [], []>} : vector<16x16xf32>, vector<16x32xf32>, vector<16x32xf32> -> vector<16x32xf32>
    %cst_59 = arith.constant dense<0.000000e+00> : vector<16x32xf32>
    %95 = tpu.matmul %66, %85, %cst_59 {dimension_numbers = #tpu.dot_dimension_numbers<[1], [0], [0], [1], [0, 0, 1, 1], [], []>} : vector<16x16xf32>, vector<16x32xf32>, vector<16x32xf32> -> vector<16x32xf32>
    %96 = arith.addf %94, %95 : vector<16x32xf32>
    %cst_60 = arith.constant 5.000000e-01 : f32
    %97 = vector.broadcast %cst_60 : f32 to vector<16x32xf32>
    %98 = arith.mulf %96, %97 : vector<16x32xf32>
    %cst_61 = arith.constant dense<0.000000e+00> : vector<16x32xf32>
    %99 = tpu.matmul %83, %86, %cst_61 {dimension_numbers = #tpu.dot_dimension_numbers<[1], [0], [0], [1], [0, 0, 1, 1], [], []>} : vector<16x16xf32>, vector<16x32xf32>, vector<16x32xf32> -> vector<16x32xf32>
    %cst_62 = arith.constant dense<0.000000e+00> : vector<16x32xf32>
    %100 = tpu.matmul %82, %88, %cst_62 {dimension_numbers = #tpu.dot_dimension_numbers<[1], [0], [0], [1], [0, 0, 1, 1], [], []>} : vector<16x16xf32>, vector<16x32xf32>, vector<16x32xf32> -> vector<16x32xf32>
    %101 = arith.addf %99, %100 : vector<16x32xf32>
    %cst_63 = arith.constant 2.000000e-01 : f32
    %102 = vector.broadcast %cst_63 : f32 to vector<16x32xf32>
    %103 = arith.mulf %101, %102 : vector<16x32xf32>
    %104 = arith.addf %93, %98 : vector<16x32xf32>
    %105 = arith.addf %104, %103 : vector<16x32xf32>
    %cst_64 = arith.constant 0.333333343 : f32
    %106 = vector.broadcast %cst_64 : f32 to vector<16x32xf32>
    %107 = arith.mulf %105, %106 : vector<16x32xf32>
    %cst_65 = arith.constant dense<0.000000e+00> : vector<16x32xf32>
    %108 = tpu.matmul %66, %107, %cst_65 {dimension_numbers = #tpu.dot_dimension_numbers<[1], [0], [0], [1], [0, 0, 1, 1], [], []>} : vector<16x16xf32>, vector<16x32xf32>, vector<16x32xf32> -> vector<16x32xf32>
    %cst_66 = arith.constant dense<0.000000e+00> : vector<16x32xf32>
    %109 = tpu.matmul %74, %107, %cst_66 {dimension_numbers = #tpu.dot_dimension_numbers<[1], [0], [0], [1], [0, 0, 1, 1], [], []>} : vector<16x16xf32>, vector<16x32xf32>, vector<16x32xf32> -> vector<16x32xf32>
    %cst_67 = arith.constant dense<0.000000e+00> : vector<16x32xf32>
    %110 = tpu.matmul %82, %107, %cst_67 {dimension_numbers = #tpu.dot_dimension_numbers<[1], [0], [0], [1], [0, 0, 1, 1], [], []>} : vector<16x16xf32>, vector<16x32xf32>, vector<16x32xf32> -> vector<16x32xf32>
    %111 = arith.addf %108, %109 : vector<16x32xf32>
    %112 = arith.addf %111, %110 : vector<16x32xf32>
    %cst_68 = arith.constant dense<0.000000e+00> : vector<16x32xf32>
    %113 = tpu.matmul %66, %108, %cst_68 {dimension_numbers = #tpu.dot_dimension_numbers<[1], [0], [0], [1], [0, 0, 1, 1], [], []>} : vector<16x16xf32>, vector<16x32xf32>, vector<16x32xf32> -> vector<16x32xf32>
    %cst_69 = arith.constant dense<0.000000e+00> : vector<16x32xf32>
    %114 = tpu.matmul %74, %109, %cst_69 {dimension_numbers = #tpu.dot_dimension_numbers<[1], [0], [0], [1], [0, 0, 1, 1], [], []>} : vector<16x16xf32>, vector<16x32xf32>, vector<16x32xf32> -> vector<16x32xf32>
    %115 = arith.addf %113, %114 : vector<16x32xf32>
    %cst_70 = arith.constant 5.000000e-01 : f32
    %116 = vector.broadcast %cst_70 : f32 to vector<16x32xf32>
    %117 = arith.mulf %115, %116 : vector<16x32xf32>
    %cst_71 = arith.constant dense<0.000000e+00> : vector<16x32xf32>
    %118 = tpu.matmul %74, %108, %cst_71 {dimension_numbers = #tpu.dot_dimension_numbers<[1], [0], [0], [1], [0, 0, 1, 1], [], []>} : vector<16x16xf32>, vector<16x32xf32>, vector<16x32xf32> -> vector<16x32xf32>
    %cst_72 = arith.constant dense<0.000000e+00> : vector<16x32xf32>
    %119 = tpu.matmul %66, %109, %cst_72 {dimension_numbers = #tpu.dot_dimension_numbers<[1], [0], [0], [1], [0, 0, 1, 1], [], []>} : vector<16x16xf32>, vector<16x32xf32>, vector<16x32xf32> -> vector<16x32xf32>
    %120 = arith.addf %118, %119 : vector<16x32xf32>
    %cst_73 = arith.constant 5.000000e-01 : f32
    %121 = vector.broadcast %cst_73 : f32 to vector<16x32xf32>
    %122 = arith.mulf %120, %121 : vector<16x32xf32>
    %cst_74 = arith.constant dense<0.000000e+00> : vector<16x32xf32>
    %123 = tpu.matmul %83, %110, %cst_74 {dimension_numbers = #tpu.dot_dimension_numbers<[1], [0], [0], [1], [0, 0, 1, 1], [], []>} : vector<16x16xf32>, vector<16x32xf32>, vector<16x32xf32> -> vector<16x32xf32>
    %cst_75 = arith.constant dense<0.000000e+00> : vector<16x32xf32>
    %124 = tpu.matmul %82, %112, %cst_75 {dimension_numbers = #tpu.dot_dimension_numbers<[1], [0], [0], [1], [0, 0, 1, 1], [], []>} : vector<16x16xf32>, vector<16x32xf32>, vector<16x32xf32> -> vector<16x32xf32>
    %125 = arith.addf %123, %124 : vector<16x32xf32>
    %cst_76 = arith.constant 2.000000e-01 : f32
    %126 = vector.broadcast %cst_76 : f32 to vector<16x32xf32>
    %127 = arith.mulf %125, %126 : vector<16x32xf32>
    %128 = arith.addf %93, %117 : vector<16x32xf32>
    %129 = arith.addf %98, %122 : vector<16x32xf32>
    %130 = arith.addf %103, %127 : vector<16x32xf32>
    %cst_77 = arith.constant 5.000000e-01 : f32
    %131 = vector.broadcast %cst_77 : f32 to vector<16x32xf32>
    %132 = arith.mulf %128, %131 : vector<16x32xf32>
    %cst_78 = arith.constant 5.000000e-01 : f32
    %133 = vector.broadcast %cst_78 : f32 to vector<16x32xf32>
    %134 = arith.mulf %129, %133 : vector<16x32xf32>
    %cst_79 = arith.constant 5.000000e-01 : f32
    %135 = vector.broadcast %cst_79 : f32 to vector<16x32xf32>
    %136 = arith.mulf %130, %135 : vector<16x32xf32>
    %c0_80 = arith.constant 0 : index
    %c0_81 = arith.constant 0 : index
    %137 = vector.load %arg15[%c0_80, %c0_81] : memref<32x32xf32, #tpu.memory_space<vmem>>, vector<32x32xf32>
    %c0_82 = arith.constant 0 : index
    %c0_83 = arith.constant 0 : index
    %138 = vector.load %arg16[%c0_82, %c0_83] : memref<32x32xf32, #tpu.memory_space<vmem>>, vector<32x32xf32>
    %c0_84 = arith.constant 0 : index
    %c0_85 = arith.constant 0 : index
    %139 = vector.load %arg17[%c0_84, %c0_85] : memref<1x32xf32, #tpu.memory_space<vmem>>, vector<1x32xf32>
    %cst_86 = arith.constant dense<0.000000e+00> : vector<16x32xf32>
    %140 = tpu.matmul %132, %137, %cst_86 {dimension_numbers = #tpu.dot_dimension_numbers<[1], [0], [0], [1], [0, 0, 1, 1], [], []>} : vector<16x32xf32>, vector<32x32xf32>, vector<16x32xf32> -> vector<16x32xf32>
    %cst_87 = arith.constant dense<0.000000e+00> : vector<16x32xf32>
    %141 = tpu.matmul %134, %138, %cst_87 {dimension_numbers = #tpu.dot_dimension_numbers<[1], [0], [0], [1], [0, 0, 1, 1], [], []>} : vector<16x32xf32>, vector<32x32xf32>, vector<16x32xf32> -> vector<16x32xf32>
    %142 = arith.addf %140, %141 : vector<16x32xf32>
    %143 = vector.broadcast %139 : vector<1x32xf32> to vector<16x32xf32>
    %144 = arith.addf %142, %143 : vector<16x32xf32>
    %c0_88 = arith.constant 0 : index
    %c0_89 = arith.constant 0 : index
    %145 = vector.load %arg18[%c0_88, %c0_89] : memref<32x32xf32, #tpu.memory_space<vmem>>, vector<32x32xf32>
    %c0_90 = arith.constant 0 : index
    %c0_91 = arith.constant 0 : index
    %146 = vector.load %arg19[%c0_90, %c0_91] : memref<32x32xf32, #tpu.memory_space<vmem>>, vector<32x32xf32>
    %c0_92 = arith.constant 0 : index
    %c0_93 = arith.constant 0 : index
    %147 = vector.load %arg20[%c0_92, %c0_93] : memref<1x32xf32, #tpu.memory_space<vmem>>, vector<1x32xf32>
    %cst_94 = arith.constant dense<0.000000e+00> : vector<16x32xf32>
    %148 = tpu.matmul %144, %145, %cst_94 {dimension_numbers = #tpu.dot_dimension_numbers<[1], [0], [0], [1], [0, 0, 1, 1], [], []>} : vector<16x32xf32>, vector<32x32xf32>, vector<16x32xf32> -> vector<16x32xf32>
    %cst_95 = arith.constant dense<0.000000e+00> : vector<16x32xf32>
    %149 = tpu.matmul %136, %146, %cst_95 {dimension_numbers = #tpu.dot_dimension_numbers<[1], [0], [0], [1], [0, 0, 1, 1], [], []>} : vector<16x32xf32>, vector<32x32xf32>, vector<16x32xf32> -> vector<16x32xf32>
    %150 = arith.addf %148, %149 : vector<16x32xf32>
    %151 = vector.broadcast %147 : vector<1x32xf32> to vector<16x32xf32>
    %152 = arith.addf %150, %151 : vector<16x32xf32>
    %c0_96 = arith.constant 0 : index
    %c0_97 = arith.constant 0 : index
    %153 = vector.load %arg21[%c0_96, %c0_97] : memref<16x32xf32, #tpu.memory_space<vmem>>, vector<16x32xf32>
    tpu.vector_store %arg21[%c0_96, %c0_97], %152 {strides = array<i32>} : memref<16x32xf32, #tpu.memory_space<vmem>>, vector<16x32xf32>,
    %c0_98 = arith.constant 0 : index
    %c0_99 = arith.constant 0 : index
    %154 = vector.load %arg22[%c0_98, %c0_99] : memref<24x32xf32, #tpu.memory_space<vmem>>, vector<24x32xf32>
    tpu.vector_store %arg22[%c0_98, %c0_99], %15 {strides = array<i32>} : memref<24x32xf32, #tpu.memory_space<vmem>>, vector<24x32xf32>,
    return
  }
  func.func @transform_0(%arg0: i32) -> (i32, i32) {
    %c0_i32 = arith.constant 0 : i32
    %c0_i32_0 = arith.constant 0 : i32
    %c0_i32_1 = arith.constant 0 : i32
    return %c0_i32, %c0_i32_0 : i32, i32
  }
  func.func @transform_1(%arg0: i32) -> (i32, i32) {
    %c0_i32 = arith.constant 0 : i32
    %c0_i32_0 = arith.constant 0 : i32
    %c0_i32_1 = arith.constant 0 : i32
    return %c0_i32, %c0_i32_0 : i32, i32
  }
  func.func @transform_2(%arg0: i32) -> (i32, i32) {
    %c0_i32 = arith.constant 0 : i32
    %c0_i32_0 = arith.constant 0 : i32
    %c0_i32_1 = arith.constant 0 : i32
    return %c0_i32, %c0_i32_0 : i32, i32
  }
  func.func @transform_3(%arg0: i32) -> (i32, i32) {
    %c0_i32 = arith.constant 0 : i32
    %c0_i32_0 = arith.constant 0 : i32
    %c0_i32_1 = arith.constant 0 : i32
    return %c0_i32, %c0_i32_0 : i32, i32
  }
  func.func @transform_4(%arg0: i32) -> (i32, i32) {
    %c0_i32 = arith.constant 0 : i32
    %c0_i32_0 = arith.constant 0 : i32
    %c0_i32_1 = arith.constant 0 : i32
    return %c0_i32, %c0_i32_0 : i32, i32
  }
  func.func @transform_5(%arg0: i32) -> (i32, i32) {
    %c0_i32 = arith.constant 0 : i32
    %c0_i32_0 = arith.constant 0 : i32
    %c0_i32_1 = arith.constant 0 : i32
    return %c0_i32, %c0_i32_0 : i32, i32
  }
  func.func @transform_6(%arg0: i32) -> (i32, i32) {
    %c0_i32 = arith.constant 0 : i32
    %c0_i32_0 = arith.constant 0 : i32
    %c0_i32_1 = arith.constant 0 : i32
    return %c0_i32, %c0_i32_0 : i32, i32
  }
  func.func @transform_7(%arg0: i32) -> (i32, i32) {
    %c0_i32 = arith.constant 0 : i32
    %c0_i32_0 = arith.constant 0 : i32
    %c0_i32_1 = arith.constant 0 : i32
    return %c0_i32, %c0_i32_0 : i32, i32
  }
  func.func @transform_8(%arg0: i32) -> (i32, i32) {
    %c0_i32 = arith.constant 0 : i32
    %c0_i32_0 = arith.constant 0 : i32
    %c0_i32_1 = arith.constant 0 : i32
    return %c0_i32, %c0_i32_0 : i32, i32
  }
  func.func @transform_9(%arg0: i32) -> (i32, i32) {
    %c0_i32 = arith.constant 0 : i32
    %c0_i32_0 = arith.constant 0 : i32
    %c0_i32_1 = arith.constant 0 : i32
    return %c0_i32, %c0_i32_0 : i32, i32
  }
  func.func @transform_10(%arg0: i32) -> (i32, i32) {
    %c0_i32 = arith.constant 0 : i32
    %c0_i32_0 = arith.constant 0 : i32
    %c0_i32_1 = arith.constant 0 : i32
    return %c0_i32, %c0_i32_0 : i32, i32
  }
  func.func @transform_11(%arg0: i32) -> (i32, i32) {
    %c0_i32 = arith.constant 0 : i32
    %c0_i32_0 = arith.constant 0 : i32
    %c0_i32_1 = arith.constant 0 : i32
    return %c0_i32, %c0_i32_0 : i32, i32
  }
  func.func @transform_12(%arg0: i32) -> (i32, i32) {
    %c0_i32 = arith.constant 0 : i32
    %c0_i32_0 = arith.constant 0 : i32
    %c0_i32_1 = arith.constant 0 : i32
    return %c0_i32, %c0_i32_0 : i32, i32
  }
  func.func @transform_13(%arg0: i32) -> (i32, i32) {
    %c0_i32 = arith.constant 0 : i32
    %c0_i32_0 = arith.constant 0 : i32
    %c0_i32_1 = arith.constant 0 : i32
    return %c0_i32, %c0_i32_0 : i32, i32
  }
  func.func @transform_14(%arg0: i32) -> (i32, i32) {
    %c0_i32 = arith.constant 0 : i32
    %c0_i32_0 = arith.constant 0 : i32
    %c0_i32_1 = arith.constant 0 : i32
    return %c0_i32, %c0_i32_0 : i32, i32
  }
  func.func @transform_15(%arg0: i32) -> (i32, i32) {
    %c0_i32 = arith.constant 0 : i32
    %c0_i32_0 = arith.constant 0 : i32
    %c0_i32_1 = arith.constant 0 : i32
    return %c0_i32, %c0_i32_0 : i32, i32
  }
  func.func @transform_16(%arg0: i32) -> (i32, i32) {
    %c0_i32 = arith.constant 0 : i32
    %c0_i32_0 = arith.constant 0 : i32
    %c0_i32_1 = arith.constant 0 : i32
    return %c0_i32, %c0_i32_0 : i32, i32
  }
  func.func @transform_17(%arg0: i32) -> (i32, i32) {
    %c0_i32 = arith.constant 0 : i32
    %c0_i32_0 = arith.constant 0 : i32
    %c0_i32_1 = arith.constant 0 : i32
    return %c0_i32, %c0_i32_0 : i32, i32
  }
  func.func @transform_18(%arg0: i32) -> (i32, i32) {
    %c0_i32 = arith.constant 0 : i32
    %c0_i32_0 = arith.constant 0 : i32
    %c0_i32_1 = arith.constant 0 : i32
    return %c0_i32, %c0_i32_0 : i32, i32
  }
  func.func @transform_19(%arg0: i32) -> (i32, i32) {
    %c0_i32 = arith.constant 0 : i32
    %c0_i32_0 = arith.constant 0 : i32
    %c0_i32_1 = arith.constant 0 : i32
    return %c0_i32, %c0_i32_0 : i32, i32
  }
  func.func @transform_20(%arg0: i32) -> (i32, i32) {
    %c0_i32 = arith.constant 0 : i32
    %c0_i32_0 = arith.constant 0 : i32
    %c0_i32_1 = arith.constant 0 : i32
    return %c0_i32, %c0_i32_0 : i32, i32
  }
  func.func @transform_21(%arg0: i32) -> (i32, i32) {
    %c0_i32 = arith.constant 0 : i32
    %c0_i32_0 = arith.constant 0 : i32
    %c0_i32_1 = arith.constant 0 : i32
    return %c0_i32, %c0_i32_0 : i32, i32
  }
}

</mosaic_0001>

<llo_original>
// kernel: tpu_custom_call.1
$region0: #{tpu_custom_call.1}
  #allocation0 [shape = 'u32[]', space=smem, size = 0x4, offset = 0x4, fixed_abs, tag = 'smem constant byte address 0x4 - core index']
  #allocation1 [shape = 'u32[144,128]{1,0:T(1,128)}', space=vmem, size = 0x12000, scoped, tag = 'internal scratch']
  %s0 = inlined_call_operand.hbm [shape: f32[16,32], index: 0, kind: input, shape index: {}]
  %s1 = inlined_call_operand.hbm [shape: f32[24,32], index: 1, kind: input, shape index: {}]
  %s2 = inlined_call_operand.hbm [shape: f32[16,24], index: 2, kind: input, shape index: {}]
  %s3 = inlined_call_operand.vmem [shape: f32[24,16], index: 3, kind: input, shape index: {}]
  %s4 = inlined_call_operand.hbm [shape: f32[16,16], index: 4, kind: input, shape index: {}]
  %s5 = inlined_call_operand.vmem [shape: f32[32,32], index: 5, kind: input, shape index: {}]
  %s6 = inlined_call_operand.hbm [shape: f32[32,32], index: 6, kind: input, shape index: {}]
  %s7 = inlined_call_operand.vmem [shape: f32[1,32], index: 7, kind: input, shape index: {}]
  %s8 = inlined_call_operand.hbm [shape: f32[32,32], index: 8, kind: input, shape index: {}]
  %s9 = inlined_call_operand.hbm [shape: f32[32,32], index: 9, kind: input, shape index: {}]
  %s10 = inlined_call_operand.hbm [shape: f32[1,32], index: 10, kind: input, shape index: {}]
  %s11 = inlined_call_operand.hbm [shape: f32[32,32], index: 11, kind: input, shape index: {}]
  %s12 = inlined_call_operand.hbm [shape: f32[32,32], index: 12, kind: input, shape index: {}]
  %s13 = inlined_call_operand.hbm [shape: f32[1,32], index: 13, kind: input, shape index: {}]
  %s14 = inlined_call_operand.vmem [shape: f32[32,32], index: 14, kind: input, shape index: {}]
  %s15 = inlined_call_operand.hbm [shape: f32[32,32], index: 15, kind: input, shape index: {}]
  %s16 = inlined_call_operand.vmem [shape: f32[1,32], index: 16, kind: input, shape index: {}]
  %s17 = inlined_call_operand.hbm [shape: f32[32,32], index: 17, kind: input, shape index: {}]
  %s18 = inlined_call_operand.hbm [shape: f32[32,32], index: 18, kind: input, shape index: {}]
  %s19 = inlined_call_operand.vmem [shape: f32[1,32], index: 19, kind: input, shape index: {}]
  %s20 = inlined_call_operand.hbm [shape: f32[16,32], index: 20, kind: output, shape index: {0}]
  %s21 = inlined_call_operand.hbm [shape: f32[24,32], index: 21, kind: output, shape index: {1}]
  %22 = xla_tuple %s20, %s21
  %s23 = sld [smem:[#allocation0]]
  $region154: #{tpu_custom_call.1} parent=0
    _
  %s25 = ssub.s32 1, %s23
  %s26 = scalar_select 0, %s25, %s23
  $region1: #{tpu_custom_call.1} parent=0
    #allocation2 [shape = 'u8[8192]{0}', space=vmem, size = 0x2000, scoped, tag = 'input window, operand 0, single buffered']
    #allocation3 [shape = 's32[1]{0}', space=sflag, size = 0x4, scoped, tag = 'scoped memory for tpu_custom_call.1']
    #allocation4 [shape = 's32[1]{0}', space=sflag, size = 0x4, scoped, tag = 'scoped memory for tpu_custom_call.1']
    #allocation5 [shape = 'u8[12288]{0}', space=vmem, size = 0x3000, scoped, tag = 'input window, operand 1, single buffered']
    #allocation6 [shape = 's32[1]{0}', space=sflag, size = 0x4, scoped, tag = 'scoped memory for tpu_custom_call.1']
    #allocation7 [shape = 'u8[8192]{0}', space=vmem, size = 0x2000, scoped, tag = 'input window, operand 2, single buffered']
    #allocation8 [shape = 'u8[8192]{0}', space=vmem, size = 0x2000, scoped, tag = 'input window, operand 4, single buffered']
    #allocation9 [shape = 's32[1]{0}', space=sflag, size = 0x4, scoped, tag = 'scoped memory for tpu_custom_call.1']
    #allocation10 [shape = 'u8[16384]{0}', space=vmem, size = 0x4000, scoped, tag = 'input window, operand 6, single buffered']
    #allocation11 [shape = 'u8[16384]{0}', space=vmem, size = 0x4000, scoped, tag = 'input window, operand 8, single buffered']
    #allocation12 [shape = 's32[1]{0}', space=sflag, size = 0x4, scoped, tag = 'scoped memory for tpu_custom_call.1']
    #allocation13 [shape = 'u8[16384]{0}', space=vmem, size = 0x4000, scoped, tag = 'input window, operand 9, single buffered']
    #allocation14 [shape = 'u8[512]{0}', space=vmem, size = 0x400, scoped, tag = 'input window, operand 10, single buffered']
    #allocation15 [shape = 's32[1]{0}', space=sflag, size = 0x4, scoped, tag = 'scoped memory for tpu_custom_call.1']
    #allocation16 [shape = 'u8[16384]{0}', space=vmem, size = 0x4000, scoped, tag = 'input window, operand 11, single buffered']
    #allocation17 [shape = 'u8[16384]{0}', space=vmem, size = 0x4000, scoped, tag = 'input window, operand 12, single buffered']
    #allocation18 [shape = 's32[1]{0}', space=sflag, size = 0x4, scoped, tag = 'scoped memory for tpu_custom_call.1']
    #allocation19 [shape = 'u8[512]{0}', space=vmem, size = 0x400, scoped, tag = 'input window, operand 13, single buffered']
    #allocation20 [shape = 'u8[16384]{0}', space=vmem, size = 0x4000, scoped, tag = 'input window, operand 15, single buffered']
    #allocation21 [shape = 's32[1]{0}', space=sflag, size = 0x4, scoped, tag = 'scoped memory for tpu_custom_call.1']
    #allocation22 [shape = 'u8[16384]{0}', space=vmem, size = 0x4000, scoped, tag = 'input window, operand 17, single buffered']
    #allocation23 [shape = 'u8[16384]{0}', space=vmem, size = 0x4000, scoped, tag = 'input window, operand 18, single buffered']
    #allocation24 [shape = 's32[1]{0}', space=sflag, size = 0x4, scoped, tag = 'scoped memory for tpu_custom_call.1']
    #allocation25 [shape = 'u8[8192]{0}', space=vmem, size = 0x2000, scoped, tag = 'output window, operand 0, single buffered']
    #allocation26 [shape = 'u8[12288]{0}', space=vmem, size = 0x3000, scoped, tag = 'output window, operand 1, single buffered']
    #allocation27 [shape = 's32[1]{0}', space=sflag, size = 0x4, scoped, tag = 'scoped memory for tpu_custom_call.1']
    %27 = vsyncpa [#allocation3], 0
    %28 = vsyncpa [#allocation6], 0
    %29 = vsyncpa [#allocation9], 0
    %30 = vsyncpa [#allocation12], 0
    %31 = vsyncpa [#allocation15], 0
    %32 = vsyncpa [#allocation18], 0
    %33 = vsyncpa [#allocation21], 0
    %34 = vsyncpa [#allocation24], 0
    %35 = vsyncpa [#allocation4], 0
    %36 = vsyncpa [#allocation27], 0
    // Predicated region
    $region2: #{tpu_custom_call.1} parent=1 // pred_check
      _
    $region3: #{tpu_custom_call.1} parent=1 // pred_check_branch
      %38 = sbr.rel (0) target = $region5
    $region4: #{tpu_custom_call.1} parent=1 // pred_region
      %s40 = ssub.s32 256, 256
      %41 = vsyncadd [#allocation3], %s40
      %s42 = sshll.u32 [#allocation2], 4
      %s43 = int_to_ptr.vmem [resolvable:$true] %s42
      %48 = dma.hbm_to_vmem [thread:$0]  %s0, 256, %s43, [#allocation3], 128, 128, 8
    $region5: #{tpu_custom_call.1} parent=1 // pred_fallthru
      _
    // Predicated region
    $region6: #{tpu_custom_call.1} parent=1 // pred_check
      _
    $region7: #{tpu_custom_call.1} parent=1 // pred_check_branch
      %50 = sbr.rel (0) target = $region9
    $region8: #{tpu_custom_call.1} parent=1 // pred_region
      %s52 = ssub.s32 384, 384
      %53 = vsyncadd [#allocation6], %s52
      %s54 = sshll.u32 [#allocation5], 4
      %s55 = int_to_ptr.vmem [resolvable:$true] %s54
      %60 = dma.hbm_to_vmem [thread:$0]  %s1, 384, %s55, [#allocation6], 128, 128, 8
    $region9: #{tpu_custom_call.1} parent=1 // pred_fallthru
      _
    // Predicated region
    $region10: #{tpu_custom_call.1} parent=1 // pred_check
      _
    $region11: #{tpu_custom_call.1} parent=1 // pred_check_branch
      %62 = sbr.rel (0) target = $region13
    $region12: #{tpu_custom_call.1} parent=1 // pred_region
      %s64 = ssub.s32 256, 256
      %65 = vsyncadd [#allocation6], %s64
      %s66 = sshll.u32 [#allocation7], 4
      %s67 = int_to_ptr.vmem [resolvable:$true] %s66
      %72 = dma.hbm_to_vmem [thread:$0]  %s2, 256, %s67, [#allocation6], 128, 128, 8
    $region13: #{tpu_custom_call.1} parent=1 // pred_fallthru
      _
    // Predicated region
    $region14: #{tpu_custom_call.1} parent=1 // pred_check
      _
    $region15: #{tpu_custom_call.1} parent=1 // pred_check_branch
      %74 = sbr.rel (0) target = $region17
    $region16: #{tpu_custom_call.1} parent=1 // pred_region
      _
    $region17: #{tpu_custom_call.1} parent=1 // pred_fallthru
      _
    // Predicated region
    $region18: #{tpu_custom_call.1} parent=1 // pred_check
      _
    $region19: #{tpu_custom_call.1} parent=1 // pred_check_branch
      %76 = sbr.rel (0) target = $region21
    $region20: #{tpu_custom_call.1} parent=1 // pred_region
      %s78 = ssub.s32 256, 256
      %79 = vsyncadd [#allocation9], %s78
      %s80 = sshll.u32 [#allocation8], 4
      %s81 = int_to_ptr.vmem [resolvable:$true] %s80
      %86 = dma.hbm_to_vmem [thread:$0]  %s4, 256, %s81, [#allocation9], 128, 128, 8
    $region21: #{tpu_custom_call.1} parent=1 // pred_fallthru
      _
    // Predicated region
    $region22: #{tpu_custom_call.1} parent=1 // pred_check
      _
    $region23: #{tpu_custom_call.1} parent=1 // pred_check_branch
      %88 = sbr.rel (0) target = $region25
    $region24: #{tpu_custom_call.1} parent=1 // pred_region
      _
    $region25: #{tpu_custom_call.1} parent=1 // pred_fallthru
      _
    // Predicated region
    $region26: #{tpu_custom_call.1} parent=1 // pred_check
      _
    $region27: #{tpu_custom_call.1} parent=1 // pred_check_branch
      %90 = sbr.rel (0) target = $region29
    $region28: #{tpu_custom_call.1} parent=1 // pred_region
      %s92 = ssub.s32 512, 512
      %93 = vsyncadd [#allocation9], %s92
      %s94 = sshll.u32 [#allocation10], 4
      %s95 = int_to_ptr.vmem [resolvable:$true] %s94
      %100 = dma.hbm_to_vmem [thread:$0]  %s6, 512, %s95, [#allocation9], 128, 128, 8
    $region29: #{tpu_custom_call.1} parent=1 // pred_fallthru
      _
    // Predicated region
    $region30: #{tpu_custom_call.1} parent=1 // pred_check
      _
    $region31: #{tpu_custom_call.1} parent=1 // pred_check_branch
      %102 = sbr.rel (0) target = $region33
    $region32: #{tpu_custom_call.1} parent=1 // pred_region
      _
    $region33: #{tpu_custom_call.1} parent=1 // pred_fallthru
      _
    // Predicated region
    $region34: #{tpu_custom_call.1} parent=1 // pred_check
      _
    $region35: #{tpu_custom_call.1} parent=1 // pred_check_branch
      %104 = sbr.rel (0) target = $region37
    $region36: #{tpu_custom_call.1} parent=1 // pred_region
      %s106 = ssub.s32 512, 512
      %107 = vsyncadd [#allocation12], %s106
      %s108 = sshll.u32 [#allocation11], 4
      %s109 = int_to_ptr.vmem [resolvable:$true] %s108
      %114 = dma.hbm_to_vmem [thread:$0]  %s8, 512, %s109, [#allocation12], 128, 128, 8
    $region37: #{tpu_custom_call.1} parent=1 // pred_fallthru
      _
    // Predicated region
    $region38: #{tpu_custom_call.1} parent=1 // pred_check
      _
    $region39: #{tpu_custom_call.1} parent=1 // pred_check_branch
      %116 = sbr.rel (0) target = $region41
    $region40: #{tpu_custom_call.1} parent=1 // pred_region
      %s118 = ssub.s32 512, 512
      %119 = vsyncadd [#allocation12], %s118
      %s120 = sshll.u32 [#allocation13], 4
      %s121 = int_to_ptr.vmem [resolvable:$true] %s120
      %126 = dma.hbm_to_vmem [thread:$0]  %s9, 512, %s121, [#allocation12], 128, 128, 8
    $region41: #{tpu_custom_call.1} parent=1 // pred_fallthru
      _
    // Predicated region
    $region42: #{tpu_custom_call.1} parent=1 // pred_check
      _
    $region43: #{tpu_custom_call.1} parent=1 // pred_check_branch
      %128 = sbr.rel (0) target = $region45
    $region44: #{tpu_custom_call.1} parent=1 // pred_region
      %s130 = ssub.s32 16, 16
      %131 = vsyncadd [#allocation15], %s130
      %s133 = sshll.u32 [#allocation14], 4
      %s134 = int_to_ptr.vmem [resolvable:$true] %s133
      %136 = dma.hbm_to_vmem [thread:$0]  %s10, 16, %s134, [#allocation15]
    $region45: #{tpu_custom_call.1} parent=1 // pred_fallthru
      _
    // Predicated region
    $region46: #{tpu_custom_call.1} parent=1 // pred_check
      _
    $region47: #{tpu_custom_call.1} parent=1 // pred_check_branch
      %138 = sbr.rel (0) target = $region49
    $region48: #{tpu_custom_call.1} parent=1 // pred_region
      %s140 = ssub.s32 512, 512
      %141 = vsyncadd [#allocation15], %s140
      %s142 = sshll.u32 [#allocation16], 4
      %s143 = int_to_ptr.vmem [resolvable:$true] %s142
      %148 = dma.hbm_to_vmem [thread:$0]  %s11, 512, %s143, [#allocation15], 128, 128, 8
    $region49: #{tpu_custom_call.1} parent=1 // pred_fallthru
      _
    // Predicated region
    $region50: #{tpu_custom_call.1} parent=1 // pred_check
      _
    $region51: #{tpu_custom_call.1} parent=1 // pred_check_branch
      %150 = sbr.rel (0) target = $region53
    $region52: #{tpu_custom_call.1} parent=1 // pred_region
      %s152 = ssub.s32 512, 512
      %153 = vsyncadd [#allocation18], %s152
      %s154 = sshll.u32 [#allocation17], 4
      %s155 = int_to_ptr.vmem [resolvable:$true] %s154
      %160 = dma.hbm_to_vmem [thread:$0]  %s12, 512, %s155, [#allocation18], 128, 128, 8
    $region53: #{tpu_custom_call.1} parent=1 // pred_fallthru
      _
    // Predicated region
    $region54: #{tpu_custom_call.1} parent=1 // pred_check
      _
    $region55: #{tpu_custom_call.1} parent=1 // pred_check_branch
      %162 = sbr.rel (0) target = $region57
    $region56: #{tpu_custom_call.1} parent=1 // pred_region
      %s164 = ssub.s32 16, 16
      %165 = vsyncadd [#allocation18], %s164
      %s167 = sshll.u32 [#allocation19], 4
      %s168 = int_to_ptr.vmem [resolvable:$true] %s167
      %170 = dma.hbm_to_vmem [thread:$0]  %s13, 16, %s168, [#allocation18]
    $region57: #{tpu_custom_call.1} parent=1 // pred_fallthru
      _
    // Predicated region
    $region58: #{tpu_custom_call.1} parent=1 // pred_check
      _
    $region59: #{tpu_custom_call.1} parent=1 // pred_check_branch
      %172 = sbr.rel (0) target = $region61
    $region60: #{tpu_custom_call.1} parent=1 // pred_region
      _
    $region61: #{tpu_custom_call.1} parent=1 // pred_fallthru
      _
    // Predicated region
    $region62: #{tpu_custom_call.1} parent=1 // pred_check
      _
    $region63: #{tpu_custom_call.1} parent=1 // pred_check_branch
      %174 = sbr.rel (0) target = $region65
    $region64: #{tpu_custom_call.1} parent=1 // pred_region
      %s176 = ssub.s32 512, 512
      %177 = vsyncadd [#allocation21], %s176
      %s178 = sshll.u32 [#allocation20], 4
      %s179 = int_to_ptr.vmem [resolvable:$true] %s178
      %184 = dma.hbm_to_vmem [thread:$0]  %s15, 512, %s179, [#allocation21], 128, 128, 8
    $region65: #{tpu_custom_call.1} parent=1 // pred_fallthru
      _
    // Predicated region
    $region66: #{tpu_custom_call.1} parent=1 // pred_check
      _
    $region67: #{tpu_custom_call.1} parent=1 // pred_check_branch
      %186 = sbr.rel (0) target = $region69
    $region68: #{tpu_custom_call.1} parent=1 // pred_region
      _
    $region69: #{tpu_custom_call.1} parent=1 // pred_fallthru
      _
    // Predicated region
    $region70: #{tpu_custom_call.1} parent=1 // pred_check
      _
    $region71: #{tpu_custom_call.1} parent=1 // pred_check_branch
      %188 = sbr.rel (0) target = $region73
    $region72: #{tpu_custom_call.1} parent=1 // pred_region
      %s190 = ssub.s32 512, 512
      %191 = vsyncadd [#allocation21], %s190
      %s192 = sshll.u32 [#allocation22], 4
      %s193 = int_to_ptr.vmem [resolvable:$true] %s192
      %198 = dma.hbm_to_vmem [thread:$0]  %s17, 512, %s193, [#allocation21], 128, 128, 8
    $region73: #{tpu_custom_call.1} parent=1 // pred_fallthru
      _
    // Predicated region
    $region74: #{tpu_custom_call.1} parent=1 // pred_check
      _
    $region75: #{tpu_custom_call.1} parent=1 // pred_check_branch
      %200 = sbr.rel (0) target = $region77
    $region76: #{tpu_custom_call.1} parent=1 // pred_region
      %s202 = ssub.s32 512, 512
      %203 = vsyncadd [#allocation24], %s202
      %s204 = sshll.u32 [#allocation23], 4
      %s205 = int_to_ptr.vmem [resolvable:$true] %s204
      %210 = dma.hbm_to_vmem [thread:$0]  %s18, 512, %s205, [#allocation24], 128, 128, 8
    $region77: #{tpu_custom_call.1} parent=1 // pred_fallthru
      _
    // Predicated region
    $region78: #{tpu_custom_call.1} parent=1 // pred_check
      _
    $region79: #{tpu_custom_call.1} parent=1 // pred_check_branch
      %212 = sbr.rel (0) target = $region81
    $region80: #{tpu_custom_call.1} parent=1 // pred_region
      _
    $region81: #{tpu_custom_call.1} parent=1 // pred_fallthru
      _
    // Predicated region
    $region82: #{tpu_custom_call.1} parent=1 // pred_check
      _
    $region83: #{tpu_custom_call.1} parent=1 // pred_check_branch
      %214 = sbr.rel (0) target = $region85
    $region84: #{tpu_custom_call.1} parent=1 // pred_region
      %215 = dma.done [#allocation3], 256
    $region85: #{tpu_custom_call.1} parent=1 // pred_fallthru
      _
    // Predicated region
    $region86: #{tpu_custom_call.1} parent=1 // pred_check
      _
    $region87: #{tpu_custom_call.1} parent=1 // pred_check_branch
      %217 = sbr.rel (0) target = $region89
    $region88: #{tpu_custom_call.1} parent=1 // pred_region
      %218 = dma.done [#allocation6], 384
    $region89: #{tpu_custom_call.1} parent=1 // pred_fallthru
      _
    // Predicated region
    $region90: #{tpu_custom_call.1} parent=1 // pred_check
      _
    $region91: #{tpu_custom_call.1} parent=1 // pred_check_branch
      %220 = sbr.rel (0) target = $region93
    $region92: #{tpu_custom_call.1} parent=1 // pred_region
      %221 = dma.done [#allocation6], 256
    $region93: #{tpu_custom_call.1} parent=1 // pred_fallthru
      _
    // Predicated region
    $region94: #{tpu_custom_call.1} parent=1 // pred_check
      _
    $region95: #{tpu_custom_call.1} parent=1 // pred_check_branch
      %223 = sbr.rel (0) target = $region97
    $region96: #{tpu_custom_call.1} parent=1 // pred_region
      %224 = dma.done [#allocation9], 256
    $region97: #{tpu_custom_call.1} parent=1 // pred_fallthru
      _
    // Predicated region
    $region98: #{tpu_custom_call.1} parent=1 // pred_check
      _
    $region99: #{tpu_custom_call.1} parent=1 // pred_check_branch
      %226 = sbr.rel (0) target = $region101
    $region100: #{tpu_custom_call.1} parent=1 // pred_region
      %227 = dma.done [#allocation9], 512
    $region101: #{tpu_custom_call.1} parent=1 // pred_fallthru
      _
    // Predicated region
    $region102: #{tpu_custom_call.1} parent=1 // pred_check
      _
    $region103: #{tpu_custom_call.1} parent=1 // pred_check_branch
      %229 = sbr.rel (0) target = $region105
    $region104: #{tpu_custom_call.1} parent=1 // pred_region
      %230 = dma.done [#allocation12], 512
    $region105: #{tpu_custom_call.1} parent=1 // pred_fallthru
      _
    // Predicated region
    $region106: #{tpu_custom_call.1} parent=1 // pred_check
      _
    $region107: #{tpu_custom_call.1} parent=1 // pred_check_branch
      %232 = sbr.rel (0) target = $region109
    $region108: #{tpu_custom_call.1} parent=1 // pred_region
      %233 = dma.done [#allocation12], 512
    $region109: #{tpu_custom_call.1} parent=1 // pred_fallthru
      _
    // Predicated region
    $region110: #{tpu_custom_call.1} parent=1 // pred_check
      _
    $region111: #{tpu_custom_call.1} parent=1 // pred_check_branch
      %235 = sbr.rel (0) target = $region113
    $region112: #{tpu_custom_call.1} parent=1 // pred_region
      %236 = dma.done [#allocation15], 16
    $region113: #{tpu_custom_call.1} parent=1 // pred_fallthru
      _
    // Predicated region
    $region114: #{tpu_custom_call.1} parent=1 // pred_check
      _
    $region115: #{tpu_custom_call.1} parent=1 // pred_check_branch
      %238 = sbr.rel (0) target = $region117
    $region116: #{tpu_custom_call.1} parent=1 // pred_region
      %239 = dma.done [#allocation15], 512
    $region117: #{tpu_custom_call.1} parent=1 // pred_fallthru
      _
    // Predicated region
    $region118: #{tpu_custom_call.1} parent=1 // pred_check
      _
    $region119: #{tpu_custom_call.1} parent=1 // pred_check_branch
      %241 = sbr.rel (0) target = $region121
    $region120: #{tpu_custom_call.1} parent=1 // pred_region
      %242 = dma.done [#allocation18], 512
    $region121: #{tpu_custom_call.1} parent=1 // pred_fallthru
      _
    // Predicated region
    $region122: #{tpu_custom_call.1} parent=1 // pred_check
      _
    $region123: #{tpu_custom_call.1} parent=1 // pred_check_branch
      %244 = sbr.rel (0) target = $region125
    $region124: #{tpu_custom_call.1} parent=1 // pred_region
      %245 = dma.done [#allocation18], 16
    $region125: #{tpu_custom_call.1} parent=1 // pred_fallthru
      _
    // Predicated region
    $region126: #{tpu_custom_call.1} parent=1 // pred_check
      _
    $region127: #{tpu_custom_call.1} parent=1 // pred_check_branch
      %247 = sbr.rel (0) target = $region129
    $region128: #{tpu_custom_call.1} parent=1 // pred_region
      %248 = dma.done [#allocation21], 512
    $region129: #{tpu_custom_call.1} parent=1 // pred_fallthru
      _
    // Predicated region
    $region130: #{tpu_custom_call.1} parent=1 // pred_check
      _
    $region131: #{tpu_custom_call.1} parent=1 // pred_check_branch
      %250 = sbr.rel (0) target = $region133
    $region132: #{tpu_custom_call.1} parent=1 // pred_region
      %251 = dma.done [#allocation21], 512
    $region133: #{tpu_custom_call.1} parent=1 // pred_fallthru
      _
    // Predicated region
    $region134: #{tpu_custom_call.1} parent=1 // pred_check
      _
    $region135: #{tpu_custom_call.1} parent=1 // pred_check_branch
      %253 = sbr.rel (0) target = $region137
    $region136: #{tpu_custom_call.1} parent=1 // pred_region
      %254 = dma.done [#allocation24], 512
    $region137: #{tpu_custom_call.1} parent=1 // pred_fallthru
      _
    %v255 = vld [vmem:[#allocation2] sm:$0xff]
    %v256 = vld [vmem:[#allocation2 + $0x8] sm:$0xff]
    %v257 = vld [vmem:[#allocation5] sm:$0xff]
    %v258 = vld [vmem:[#allocation5 + $0x8] sm:$0xff]
    %v259 = vld [vmem:[#allocation5 + $0x10] sm:$0xff]
    %v260 = vld [vmem:[#allocation7] sm:$0xff]
    %v261 = vld [vmem:[#allocation7 + $0x8] sm:$0xff]
    %v262 = vld [vmem:[%s3] sm:$0xff]
    %v263 = vld [vmem:[%s3 + $0x8] sm:$0xff]
    %v264 = vld [vmem:[%s3 + $0x10] sm:$0xff]
    %v265 = vld [vmem:[#allocation8] sm:$0xff]
    %v266 = vld [vmem:[#allocation8 + $0x8] sm:$0xff]
    %vm267 = vcmask 195584
    %v269 = vsel %vm267, %v260, 0
    %v272 = vsel %vm267, %v261, 0
    %274 = vmatprep.subr.mxu0 0.0
    %275 = vmatpush1.msra.mxu0 0.0
    %276 = vmatprep.subr.mxu0 0.0
    %277 = vmatpush1.msra.mxu0 0.0
    %278 = vmatprep.subr.mxu0 0.0
    %279 = vmatpush1.msra.mxu0 0.0
    %280 = vmatprep.subr.mxu0 0.0
    %281 = vmatpush1.msra.mxu0 0.0
    %282 = vmatprep.subr.mxu0 0.0
    %283 = vmatpush1.msra.mxu0 0.0
    %284 = vmatprep.subr.mxu0 0.0
    %285 = vmatpush1.msra.mxu0 0.0
    %286 = vmatprep.subr.mxu0 0.0
    %287 = vmatpush1.msra.mxu0 0.0
    %288 = vmatprep.subr.mxu0 0.0
    %289 = vmatpush1.msra.mxu0 0.0
    %290 = vmatprep.subr.mxu0 0.0
    %291 = vmatpush1.msra.mxu0 0.0
    %292 = vmatprep.subr.mxu0 0.0
    %293 = vmatpush1.msra.mxu0 0.0
    %294 = vmatprep.subr.mxu0 0.0
    %295 = vmatpush1.msra.mxu0 0.0
    %296 = vmatprep.subr.mxu0 0.0
    %297 = vmatpush1.msra.mxu0 0.0
    %298 = vmatprep.subr.mxu0 0.0
    %299 = vmatpush1.msra.mxu0 0.0
    %300 = vmatprep.subr.mxu0 0.0
    %301 = vmatpush1.msra.mxu0 %v259
    %302 = vmatprep.subr.mxu0 0.0
    %303 = vmatpush1.msra.mxu0 %v258
    %304 = vmatprep.subr.mxu0 0.0
    %305 = vmatpush1.msra.mxu0 %v257
    %306 = vmatprep.subr.mxu0 0.0
    %307 = vmatpush2.msra.mxu0 0.0
    %308 = vmatprep.subr.mxu0 0.0
    %309 = vmatpush2.msra.mxu0 0.0
    %310 = vmatprep.subr.mxu0 0.0
    %311 = vmatpush2.msra.mxu0 0.0
    %312 = vmatprep.subr.mxu0 0.0
    %313 = vmatpush2.msra.mxu0 0.0
    %314 = vmatprep.subr.mxu0 0.0
    %315 = vmatpush2.msra.mxu0 0.0
    %316 = vmatprep.subr.mxu0 0.0
    %317 = vmatpush2.msra.mxu0 0.0
    %318 = vmatprep.subr.mxu0 0.0
    %319 = vmatpush2.msra.mxu0 0.0
    %320 = vmatprep.subr.mxu0 0.0
    %321 = vmatpush2.msra.mxu0 0.0
    %322 = vmatprep.subr.mxu0 0.0
    %323 = vmatpush2.msra.mxu0 0.0
    %324 = vmatprep.subr.mxu0 0.0
    %325 = vmatpush2.msra.mxu0 0.0
    %326 = vmatprep.subr.mxu0 0.0
    %327 = vmatpush2.msra.mxu0 0.0
    %328 = vmatprep.subr.mxu0 0.0
    %329 = vmatpush2.msra.mxu0 0.0
    %330 = vmatprep.subr.mxu0 0.0
    %331 = vmatpush2.msra.mxu0 0.0
    %332 = vmatprep.subr.mxu0 0.0
    %333 = vmatpush2.msra.mxu0 0.0
    %334 = vmatprep.subr.mxu0 0.0
    %335 = vmatpush2.msra.mxu0 0.0
    %336 = vmatprep.subr.mxu0 0.0
    %337 = vmatpush2.msra.mxu0 0.0
    %338 = vmatprep.mubr.f32.mxu0 0.0
    %339 = vmatmul.mubr.f32.gmra.mxu0 %v269
    %v340 = vpop.f32.mrf.mxu0
    %v341 = vadd.f32 0.0, %v340
    %v342 = vpop.f32.mrf.mxu0
    %343 = vmatprep.mubr.f32.mxu0 0.0
    %344 = vmatmul.mubr.f32.gmra.mxu0 %v272
    %v345 = vpop.f32.mrf.mxu0
    %v346 = vadd.f32 0.0, %v345
    %v347 = vpop.f32.mrf.mxu0
    %348 = vdwg.mxu0
    %vm349 = vcmask 130048
    %v351 = vsel %vm349, %v262, 0
    %v354 = vsel %vm349, %v263, 0
    %v357 = vsel %vm349, %v264, 0
    %359 = vmatprep.subr.mxu0 0.0
    %360 = vmatpush1.msra.mxu0 0.0
    %361 = vmatprep.subr.mxu0 0.0
    %362 = vmatpush1.msra.mxu0 0.0
    %363 = vmatprep.subr.mxu0 0.0
    %364 = vmatpush1.msra.mxu0 0.0
    %365 = vmatprep.subr.mxu0 0.0
    %366 = vmatpush1.msra.mxu0 0.0
    %367 = vmatprep.subr.mxu0 0.0
    %368 = vmatpush1.msra.mxu0 0.0
    %369 = vmatprep.subr.mxu0 0.0
    %370 = vmatpush1.msra.mxu0 0.0
    %371 = vmatprep.subr.mxu0 0.0
    %372 = vmatpush1.msra.mxu0 0.0
    %373 = vmatprep.subr.mxu0 0.0
    %374 = vmatpush1.msra.mxu0 0.0
    %375 = vmatprep.subr.mxu0 0.0
    %376 = vmatpush1.msra.mxu0 0.0
    %377 = vmatprep.subr.mxu0 0.0
    %378 = vmatpush1.msra.mxu0 0.0
    %379 = vmatprep.subr.mxu0 0.0
    %380 = vmatpush1.msra.mxu0 0.0
    %381 = vmatprep.subr.mxu0 0.0
    %382 = vmatpush1.msra.mxu0 0.0
    %383 = vmatprep.subr.mxu0 0.0
    %384 = vmatpush1.msra.mxu0 0.0
    %385 = vmatprep.subr.mxu0 0.0
    %386 = vmatpush1.msra.mxu0 0.0
    %387 = vmatprep.subr.mxu0 0.0
    %388 = vmatpush1.msra.mxu0 %v256
    %389 = vmatprep.subr.mxu0 0.0
    %390 = vmatpush1.msra.mxu0 %v255
    %391 = vmatprep.subr.mxu0 0.0
    %392 = vmatpush2.msra.mxu0 0.0
    %393 = vmatprep.subr.mxu0 0.0
    %394 = vmatpush2.msra.mxu0 0.0
    %395 = vmatprep.subr.mxu0 0.0
    %396 = vmatpush2.msra.mxu0 0.0
    %397 = vmatprep.subr.mxu0 0.0
    %398 = vmatpush2.msra.mxu0 0.0
    %399 = vmatprep.subr.mxu0 0.0
    %400 = vmatpush2.msra.mxu0 0.0
    %401 = vmatprep.subr.mxu0 0.0
    %402 = vmatpush2.msra.mxu0 0.0
    %403 = vmatprep.subr.mxu0 0.0
    %404 = vmatpush2.msra.mxu0 0.0
    %405 = vmatprep.subr.mxu0 0.0
    %406 = vmatpush2.msra.mxu0 0.0
    %407 = vmatprep.subr.mxu0 0.0
    %408 = vmatpush2.msra.mxu0 0.0
    %409 = vmatprep.subr.mxu0 0.0
    %410 = vmatpush2.msra.mxu0 0.0
    %411 = vmatprep.subr.mxu0 0.0
    %412 = vmatpush2.msra.mxu0 0.0
    %413 = vmatprep.subr.mxu0 0.0
    %414 = vmatpush2.msra.mxu0 0.0
    %415 = vmatprep.subr.mxu0 0.0
    %416 = vmatpush2.msra.mxu0 0.0
    %417 = vmatprep.subr.mxu0 0.0
    %418 = vmatpush2.msra.mxu0 0.0
    %419 = vmatprep.subr.mxu0 0.0
    %420 = vmatpush2.msra.mxu0 0.0
    %421 = vmatprep.subr.mxu0 0.0
    %422 = vmatpush2.msra.mxu0 0.0
    %423 = vmatprep.mubr.f32.mxu0 0.0
    %424 = vmatmul.mubr.f32.gmra.mxu0 %v351
    %v425 = vpop.f32.mrf.mxu0
    %v426 = vadd.f32 0.0, %v425
    %v427 = vpop.f32.mrf.mxu0
    %428 = vmatprep.mubr.f32.mxu0 0.0
    %429 = vmatmul.mubr.f32.gmra.mxu0 %v354
    %v430 = vpop.f32.mrf.mxu0
    %v431 = vadd.f32 0.0, %v430
    %v432 = vpop.f32.mrf.mxu0
    %433 = vmatprep.mubr.f32.mxu0 0.0
    %434 = vmatmul.mubr.f32.gmra.mxu0 %v357
    %v435 = vpop.f32.mrf.mxu0
    %v436 = vadd.f32 0.0, %v435
    %v437 = vpop.f32.mrf.mxu0
    %438 = vdwg.mxu0
    %439 = vmatprep.subr.mxu0 0.0
    %440 = vmatpush1.msra.mxu0 0.0
    %441 = vmatprep.subr.mxu0 0.0
    %442 = vmatpush1.msra.mxu0 0.0
    %443 = vmatprep.subr.mxu0 0.0
    %444 = vmatpush1.msra.mxu0 0.0
    %445 = vmatprep.subr.mxu0 0.0
    %446 = vmatpush1.msra.mxu0 0.0
    %447 = vmatprep.subr.mxu0 0.0
    %448 = vmatpush1.msra.mxu0 0.0
    %449 = vmatprep.subr.mxu0 0.0
    %450 = vmatpush1.msra.mxu0 0.0
    %451 = vmatprep.subr.mxu0 0.0
    %452 = vmatpush1.msra.mxu0 0.0
    %453 = vmatprep.subr.mxu0 0.0
    %454 = vmatpush1.msra.mxu0 0.0
    %455 = vmatprep.subr.mxu0 0.0
    %456 = vmatpush1.msra.mxu0 0.0
    %457 = vmatprep.subr.mxu0 0.0
    %458 = vmatpush1.msra.mxu0 0.0
    %459 = vmatprep.subr.mxu0 0.0
    %460 = vmatpush1.msra.mxu0 0.0
    %461 = vmatprep.subr.mxu0 0.0
    %462 = vmatpush1.msra.mxu0 0.0
    %463 = vmatprep.subr.mxu0 0.0
    %464 = vmatpush1.msra.mxu0 0.0
    %465 = vmatprep.subr.mxu0 0.0
    %466 = vmatpush1.msra.mxu0 0.0
    %467 = vmatprep.subr.mxu0 0.0
    %468 = vmatpush1.msra.mxu0 %v346
    %469 = vmatprep.subr.mxu0 0.0
    %470 = vmatpush1.msra.mxu0 %v341
    %471 = vmatprep.subr.mxu0 0.0
    %472 = vmatpush2.msra.mxu0 0.0
    %473 = vmatprep.subr.mxu0 0.0
    %474 = vmatpush2.msra.mxu0 0.0
    %475 = vmatprep.subr.mxu0 0.0
    %476 = vmatpush2.msra.mxu0 0.0
    %477 = vmatprep.subr.mxu0 0.0
    %478 = vmatpush2.msra.mxu0 0.0
    %479 = vmatprep.subr.mxu0 0.0
    %480 = vmatpush2.msra.mxu0 0.0
    %481 = vmatprep.subr.mxu0 0.0
    %482 = vmatpush2.msra.mxu0 0.0
    %483 = vmatprep.subr.mxu0 0.0
    %484 = vmatpush2.msra.mxu0 0.0
    %485 = vmatprep.subr.mxu0 0.0
    %486 = vmatpush2.msra.mxu0 0.0
    %487 = vmatprep.subr.mxu0 0.0
    %488 = vmatpush2.msra.mxu0 0.0
    %489 = vmatprep.subr.mxu0 0.0
    %490 = vmatpush2.msra.mxu0 0.0
    %491 = vmatprep.subr.mxu0 0.0
    %492 = vmatpush2.msra.mxu0 0.0
    %493 = vmatprep.subr.mxu0 0.0
    %494 = vmatpush2.msra.mxu0 0.0
    %495 = vmatprep.subr.mxu0 0.0
    %496 = vmatpush2.msra.mxu0 0.0
    %497 = vmatprep.subr.mxu0 0.0
    %498 = vmatpush2.msra.mxu0 0.0
    %499 = vmatprep.subr.mxu0 0.0
    %500 = vmatpush2.msra.mxu0 0.0
    %501 = vmatprep.subr.mxu0 0.0
    %502 = vmatpush2.msra.mxu0 0.0
    %503 = vmatprep.mubr.f32.mxu0 0.0
    %504 = vmatmul.mubr.f32.gmra.mxu0 %v351
    %v505 = vpop.f32.mrf.mxu0
    %v506 = vadd.f32 0.0, %v505
    %v507 = vpop.f32.mrf.mxu0
    %508 = vmatprep.mubr.f32.mxu0 0.0
    %509 = vmatmul.mubr.f32.gmra.mxu0 %v354
    %v510 = vpop.f32.mrf.mxu0
    %v511 = vadd.f32 0.0, %v510
    %v512 = vpop.f32.mrf.mxu0
    %513 = vmatprep.mubr.f32.mxu0 0.0
    %514 = vmatmul.mubr.f32.gmra.mxu0 %v357
    %v515 = vpop.f32.mrf.mxu0
    %v516 = vadd.f32 0.0, %v515
    %v517 = vpop.f32.mrf.mxu0
    %518 = vdwg.mxu0
    %v519 = vld [vmem:[%s5] sm:$0xff]
    %v520 = vld [vmem:[%s5 + $0x8] sm:$0xff]
    %v521 = vld [vmem:[%s5 + $0x10] sm:$0xff]
    %v522 = vld [vmem:[%s5 + $0x18] sm:$0xff]
    %v523 = vld [vmem:[#allocation10] sm:$0xff]
    %v524 = vld [vmem:[#allocation10 + $0x8] sm:$0xff]
    %v525 = vld [vmem:[#allocation10 + $0x10] sm:$0xff]
    %v526 = vld [vmem:[#allocation10 + $0x18] sm:$0xff]
    %v527 = vld [vmem:[%s7] sm:$0x1]
    %vm528 = vcmask 261120
    %v530 = vsel %vm528, %v506, 0
    %v533 = vsel %vm528, %v511, 0
    %v536 = vsel %vm528, %v516, 0
    %538 = vmatprep.subr.mxu0 0.0
    %539 = vmatpush1.msra.mxu0 0.0
    %540 = vmatprep.subr.mxu0 0.0
    %541 = vmatpush1.msra.mxu0 0.0
    %542 = vmatprep.subr.mxu0 0.0
    %543 = vmatpush1.msra.mxu0 0.0
    %544 = vmatprep.subr.mxu0 0.0
    %545 = vmatpush1.msra.mxu0 0.0
    %546 = vmatprep.subr.mxu0 0.0
    %547 = vmatpush1.msra.mxu0 0.0
    %548 = vmatprep.subr.mxu0 0.0
    %549 = vmatpush1.msra.mxu0 0.0
    %550 = vmatprep.subr.mxu0 0.0
    %551 = vmatpush1.msra.mxu0 0.0
    %552 = vmatprep.subr.mxu0 0.0
    %553 = vmatpush1.msra.mxu0 0.0
    %554 = vmatprep.subr.mxu0 0.0
    %555 = vmatpush1.msra.mxu0 0.0
    %556 = vmatprep.subr.mxu0 0.0
    %557 = vmatpush1.msra.mxu0 0.0
    %558 = vmatprep.subr.mxu0 0.0
    %559 = vmatpush1.msra.mxu0 0.0
    %560 = vmatprep.subr.mxu0 0.0
    %561 = vmatpush1.msra.mxu0 0.0
    %562 = vmatprep.subr.mxu0 0.0
    %563 = vmatpush1.msra.mxu0 %v526
    %564 = vmatprep.subr.mxu0 0.0
    %565 = vmatpush1.msra.mxu0 %v525
    %566 = vmatprep.subr.mxu0 0.0
    %567 = vmatpush1.msra.mxu0 %v524
    %568 = vmatprep.subr.mxu0 0.0
    %569 = vmatpush1.msra.mxu0 %v523
    %570 = vmatprep.subr.mxu0 0.0
    %571 = vmatpush2.msra.mxu0 0.0
    %572 = vmatprep.subr.mxu0 0.0
    %573 = vmatpush2.msra.mxu0 0.0
    %574 = vmatprep.subr.mxu0 0.0
    %575 = vmatpush2.msra.mxu0 0.0
    %576 = vmatprep.subr.mxu0 0.0
    %577 = vmatpush2.msra.mxu0 0.0
    %578 = vmatprep.subr.mxu0 0.0
    %579 = vmatpush2.msra.mxu0 0.0
    %580 = vmatprep.subr.mxu0 0.0
    %581 = vmatpush2.msra.mxu0 0.0
    %582 = vmatprep.subr.mxu0 0.0
    %583 = vmatpush2.msra.mxu0 0.0
    %584 = vmatprep.subr.mxu0 0.0
    %585 = vmatpush2.msra.mxu0 0.0
    %586 = vmatprep.subr.mxu0 0.0
    %587 = vmatpush2.msra.mxu0 0.0
    %588 = vmatprep.subr.mxu0 0.0
    %589 = vmatpush2.msra.mxu0 0.0
    %590 = vmatprep.subr.mxu0 0.0
    %591 = vmatpush2.msra.mxu0 0.0
    %592 = vmatprep.subr.mxu0 0.0
    %593 = vmatpush2.msra.mxu0 0.0
    %594 = vmatprep.subr.mxu0 0.0
    %595 = vmatpush2.msra.mxu0 0.0
    %596 = vmatprep.subr.mxu0 0.0
    %597 = vmatpush2.msra.mxu0 0.0
    %598 = vmatprep.subr.mxu0 0.0
    %599 = vmatpush2.msra.mxu0 0.0
    %600 = vmatprep.subr.mxu0 0.0
    %601 = vmatpush2.msra.mxu0 0.0
    %602 = vmatprep.mubr.f32.mxu0 0.0
    %603 = vmatmul.mubr.f32.gmra.mxu0 %v530
    %v604 = vpop.f32.mrf.mxu0
    %v605 = vadd.f32 0.0, %v604
    %v606 = vpop.f32.mrf.mxu0
    %607 = vmatprep.mubr.f32.mxu0 0.0
    %608 = vmatmul.mubr.f32.gmra.mxu0 %v533
    %v609 = vpop.f32.mrf.mxu0
    %v610 = vadd.f32 0.0, %v609
    %v611 = vpop.f32.mrf.mxu0
    %612 = vmatprep.mubr.f32.mxu0 0.0
    %613 = vmatmul.mubr.f32.gmra.mxu0 %v536
    %v614 = vpop.f32.mrf.mxu0
    %v615 = vadd.f32 0.0, %v614
    %v616 = vpop.f32.mrf.mxu0
    %617 = vdwg.mxu0
    %v619 = vsel %vm528, %v257, 0
    %v622 = vsel %vm528, %v258, 0
    %v625 = vsel %vm528, %v259, 0
    %627 = vmatprep.subr.mxu0 0.0
    %628 = vmatpush1.msra.mxu0 0.0
    %629 = vmatprep.subr.mxu0 0.0
    %630 = vmatpush1.msra.mxu0 0.0
    %631 = vmatprep.subr.mxu0 0.0
    %632 = vmatpush1.msra.mxu0 0.0
    %633 = vmatprep.subr.mxu0 0.0
    %634 = vmatpush1.msra.mxu0 0.0
    %635 = vmatprep.subr.mxu0 0.0
    %636 = vmatpush1.msra.mxu0 0.0
    %637 = vmatprep.subr.mxu0 0.0
    %638 = vmatpush1.msra.mxu0 0.0
    %639 = vmatprep.subr.mxu0 0.0
    %640 = vmatpush1.msra.mxu0 0.0
    %641 = vmatprep.subr.mxu0 0.0
    %642 = vmatpush1.msra.mxu0 0.0
    %643 = vmatprep.subr.mxu0 0.0
    %644 = vmatpush1.msra.mxu0 0.0
    %645 = vmatprep.subr.mxu0 0.0
    %646 = vmatpush1.msra.mxu0 0.0
    %647 = vmatprep.subr.mxu0 0.0
    %648 = vmatpush1.msra.mxu0 0.0
    %649 = vmatprep.subr.mxu0 0.0
    %650 = vmatpush1.msra.mxu0 0.0
    %651 = vmatprep.subr.mxu0 0.0
    %652 = vmatpush1.msra.mxu0 %v522
    %653 = vmatprep.subr.mxu0 0.0
    %654 = vmatpush1.msra.mxu0 %v521
    %655 = vmatprep.subr.mxu0 0.0
    %656 = vmatpush1.msra.mxu0 %v520
    %657 = vmatprep.subr.mxu0 0.0
    %658 = vmatpush1.msra.mxu0 %v519
    %659 = vmatprep.subr.mxu0 0.0
    %660 = vmatpush2.msra.mxu0 0.0
    %661 = vmatprep.subr.mxu0 0.0
    %662 = vmatpush2.msra.mxu0 0.0
    %663 = vmatprep.subr.mxu0 0.0
    %664 = vmatpush2.msra.mxu0 0.0
    %665 = vmatprep.subr.mxu0 0.0
    %666 = vmatpush2.msra.mxu0 0.0
    %667 = vmatprep.subr.mxu0 0.0
    %668 = vmatpush2.msra.mxu0 0.0
    %669 = vmatprep.subr.mxu0 0.0
    %670 = vmatpush2.msra.mxu0 0.0
    %671 = vmatprep.subr.mxu0 0.0
    %672 = vmatpush2.msra.mxu0 0.0
    %673 = vmatprep.subr.mxu0 0.0
    %674 = vmatpush2.msra.mxu0 0.0
    %675 = vmatprep.subr.mxu0 0.0
    %676 = vmatpush2.msra.mxu0 0.0
    %677 = vmatprep.subr.mxu0 0.0
    %678 = vmatpush2.msra.mxu0 0.0
    %679 = vmatprep.subr.mxu0 0.0
    %680 = vmatpush2.msra.mxu0 0.0
    %681 = vmatprep.subr.mxu0 0.0
    %682 = vmatpush2.msra.mxu0 0.0
    %683 = vmatprep.subr.mxu0 0.0
    %684 = vmatpush2.msra.mxu0 0.0
    %685 = vmatprep.subr.mxu0 0.0
    %686 = vmatpush2.msra.mxu0 0.0
    %687 = vmatprep.subr.mxu0 0.0
    %688 = vmatpush2.msra.mxu0 0.0
    %689 = vmatprep.subr.mxu0 0.0
    %690 = vmatpush2.msra.mxu0 0.0
    %691 = vmatprep.mubr.f32.mxu0 0.0
    %692 = vmatmul.mubr.f32.gmra.mxu0 %v619
    %v693 = vpop.f32.mrf.mxu0
    %v694 = vadd.f32 %v605, %v693
    %v695 = vpop.f32.mrf.mxu0
    %696 = vmatprep.mubr.f32.mxu0 0.0
    %697 = vmatmul.mubr.f32.gmra.mxu0 %v622
    %v698 = vpop.f32.mrf.mxu0
    %v699 = vadd.f32 %v610, %v698
    %v700 = vpop.f32.mrf.mxu0
    %701 = vmatprep.mubr.f32.mxu0 0.0
    %702 = vmatmul.mubr.f32.gmra.mxu0 %v625
    %v703 = vpop.f32.mrf.mxu0
    %v704 = vadd.f32 %v615, %v703
    %v705 = vpop.f32.mrf.mxu0
    %706 = vdwg.mxu0
    %v708 = vlaneseq
    %v709 = vshrl.u32 %v708, 7
    %v710 = vsub.s32 0, %v709
    %v711 = vrot.slane %v527, %v710
    %v713 = vadd.f32 %v694, %v711
    %v714 = vadd.f32 %v699, %v711
    %v715 = vadd.f32 %v704, %v711
    %716 = vmatprep.subr.mxu0 0.0
    %717 = vmatpush1.msra.mxu0 0.0
    %718 = vmatprep.subr.mxu0 0.0
    %719 = vmatpush1.msra.mxu0 0.0
    %720 = vmatprep.subr.mxu0 0.0
    %721 = vmatpush1.msra.mxu0 0.0
    %722 = vmatprep.subr.mxu0 0.0
    %723 = vmatpush1.msra.mxu0 0.0
    %724 = vmatprep.subr.mxu0 0.0
    %725 = vmatpush1.msra.mxu0 0.0
    %726 = vmatprep.subr.mxu0 0.0
    %727 = vmatpush1.msra.mxu0 0.0
    %728 = vmatprep.subr.mxu0 0.0
    %729 = vmatpush1.msra.mxu0 0.0
    %730 = vmatprep.subr.mxu0 0.0
    %731 = vmatpush1.msra.mxu0 0.0
    %732 = vmatprep.subr.mxu0 0.0
    %733 = vmatpush1.msra.mxu0 0.0
    %734 = vmatprep.subr.mxu0 0.0
    %735 = vmatpush1.msra.mxu0 0.0
    %736 = vmatprep.subr.mxu0 0.0
    %737 = vmatpush1.msra.mxu0 0.0
    %738 = vmatprep.subr.mxu0 0.0
    %739 = vmatpush1.msra.mxu0 0.0
    %740 = vmatprep.subr.mxu0 0.0
    %741 = vmatpush1.msra.mxu0 0.0
    %742 = vmatprep.subr.mxu0 0.0
    %743 = vmatpush1.msra.mxu0 %v436
    %744 = vmatprep.subr.mxu0 0.0
    %745 = vmatpush1.msra.mxu0 %v431
    %746 = vmatprep.subr.mxu0 0.0
    %747 = vmatpush1.msra.mxu0 %v426
    %748 = vmatprep.subr.mxu0 0.0
    %749 = vmatpush2.msra.mxu0 0.0
    %750 = vmatprep.subr.mxu0 0.0
    %751 = vmatpush2.msra.mxu0 0.0
    %752 = vmatprep.subr.mxu0 0.0
    %753 = vmatpush2.msra.mxu0 0.0
    %754 = vmatprep.subr.mxu0 0.0
    %755 = vmatpush2.msra.mxu0 0.0
    %756 = vmatprep.subr.mxu0 0.0
    %757 = vmatpush2.msra.mxu0 0.0
    %758 = vmatprep.subr.mxu0 0.0
    %759 = vmatpush2.msra.mxu0 0.0
    %760 = vmatprep.subr.mxu0 0.0
    %761 = vmatpush2.msra.mxu0 0.0
    %762 = vmatprep.subr.mxu0 0.0
    %763 = vmatpush2.msra.mxu0 0.0
    %764 = vmatprep.subr.mxu0 0.0
    %765 = vmatpush2.msra.mxu0 0.0
    %766 = vmatprep.subr.mxu0 0.0
    %767 = vmatpush2.msra.mxu0 0.0
    %768 = vmatprep.subr.mxu0 0.0
    %769 = vmatpush2.msra.mxu0 0.0
    %770 = vmatprep.subr.mxu0 0.0
    %771 = vmatpush2.msra.mxu0 0.0
    %772 = vmatprep.subr.mxu0 0.0
    %773 = vmatpush2.msra.mxu0 0.0
    %774 = vmatprep.subr.mxu0 0.0
    %775 = vmatpush2.msra.mxu0 0.0
    %776 = vmatprep.subr.mxu0 0.0
    %777 = vmatpush2.msra.mxu0 0.0
    %778 = vmatprep.subr.mxu0 0.0
    %779 = vmatpush2.msra.mxu0 0.0
    %780 = vmatprep.mubr.f32.mxu0 0.0
    %781 = vmatmul.mubr.f32.gmra.mxu0 %v269
    %v782 = vpop.f32.mrf.mxu0
    %v783 = vadd.f32 0.0, %v782
    %v784 = vpop.f32.mrf.mxu0
    %785 = vmatprep.mubr.f32.mxu0 0.0
    %786 = vmatmul.mubr.f32.gmra.mxu0 %v272
    %v787 = vpop.f32.mrf.mxu0
    %v788 = vadd.f32 0.0, %v787
    %v789 = vpop.f32.mrf.mxu0
    %790 = vdwg.mxu0
    %v791 = vld [vmem:[#allocation11] sm:$0xff]
    %v792 = vld [vmem:[#allocation11 + $0x8] sm:$0xff]
    %v793 = vld [vmem:[#allocation11 + $0x10] sm:$0xff]
    %v794 = vld [vmem:[#allocation11 + $0x18] sm:$0xff]
    %v795 = vld [vmem:[#allocation13] sm:$0xff]
    %v796 = vld [vmem:[#allocation13 + $0x8] sm:$0xff]
    %v797 = vld [vmem:[#allocation13 + $0x10] sm:$0xff]
    %v798 = vld [vmem:[#allocation13 + $0x18] sm:$0xff]
    %v799 = vld [vmem:[#allocation14] sm:$0x1]
    %v801 = vsel %vm528, %v783, 0
    %v804 = vsel %vm528, %v788, 0
    %806 = vmatprep.subr.mxu0 0.0
    %807 = vmatpush1.msra.mxu0 0.0
    %808 = vmatprep.subr.mxu0 0.0
    %809 = vmatpush1.msra.mxu0 0.0
    %810 = vmatprep.subr.mxu0 0.0
    %811 = vmatpush1.msra.mxu0 0.0
    %812 = vmatprep.subr.mxu0 0.0
    %813 = vmatpush1.msra.mxu0 0.0
    %814 = vmatprep.subr.mxu0 0.0
    %815 = vmatpush1.msra.mxu0 0.0
    %816 = vmatprep.subr.mxu0 0.0
    %817 = vmatpush1.msra.mxu0 0.0
    %818 = vmatprep.subr.mxu0 0.0
    %819 = vmatpush1.msra.mxu0 0.0
    %820 = vmatprep.subr.mxu0 0.0
    %821 = vmatpush1.msra.mxu0 0.0
    %822 = vmatprep.subr.mxu0 0.0
    %823 = vmatpush1.msra.mxu0 0.0
    %824 = vmatprep.subr.mxu0 0.0
    %825 = vmatpush1.msra.mxu0 0.0
    %826 = vmatprep.subr.mxu0 0.0
    %827 = vmatpush1.msra.mxu0 0.0
    %828 = vmatprep.subr.mxu0 0.0
    %829 = vmatpush1.msra.mxu0 0.0
    %830 = vmatprep.subr.mxu0 0.0
    %831 = vmatpush1.msra.mxu0 %v798
    %832 = vmatprep.subr.mxu0 0.0
    %833 = vmatpush1.msra.mxu0 %v797
    %834 = vmatprep.subr.mxu0 0.0
    %835 = vmatpush1.msra.mxu0 %v796
    %836 = vmatprep.subr.mxu0 0.0
    %837 = vmatpush1.msra.mxu0 %v795
    %838 = vmatprep.subr.mxu0 0.0
    %839 = vmatpush2.msra.mxu0 0.0
    %840 = vmatprep.subr.mxu0 0.0
    %841 = vmatpush2.msra.mxu0 0.0
    %842 = vmatprep.subr.mxu0 0.0
    %843 = vmatpush2.msra.mxu0 0.0
    %844 = vmatprep.subr.mxu0 0.0
    %845 = vmatpush2.msra.mxu0 0.0
    %846 = vmatprep.subr.mxu0 0.0
    %847 = vmatpush2.msra.mxu0 0.0
    %848 = vmatprep.subr.mxu0 0.0
    %849 = vmatpush2.msra.mxu0 0.0
    %850 = vmatprep.subr.mxu0 0.0
    %851 = vmatpush2.msra.mxu0 0.0
    %852 = vmatprep.subr.mxu0 0.0
    %853 = vmatpush2.msra.mxu0 0.0
    %854 = vmatprep.subr.mxu0 0.0
    %855 = vmatpush2.msra.mxu0 0.0
    %856 = vmatprep.subr.mxu0 0.0
    %857 = vmatpush2.msra.mxu0 0.0
    %858 = vmatprep.subr.mxu0 0.0
    %859 = vmatpush2.msra.mxu0 0.0
    %860 = vmatprep.subr.mxu0 0.0
    %861 = vmatpush2.msra.mxu0 0.0
    %862 = vmatprep.subr.mxu0 0.0
    %863 = vmatpush2.msra.mxu0 0.0
    %864 = vmatprep.subr.mxu0 0.0
    %865 = vmatpush2.msra.mxu0 0.0
    %866 = vmatprep.subr.mxu0 0.0
    %867 = vmatpush2.msra.mxu0 0.0
    %868 = vmatprep.subr.mxu0 0.0
    %869 = vmatpush2.msra.mxu0 0.0
    %870 = vmatprep.mubr.f32.mxu0 0.0
    %871 = vmatmul.mubr.f32.gmra.mxu0 %v801
    %v872 = vpop.f32.mrf.mxu0
    %v873 = vadd.f32 0.0, %v872
    %v874 = vpop.f32.mrf.mxu0
    %875 = vmatprep.mubr.f32.mxu0 0.0
    %876 = vmatmul.mubr.f32.gmra.mxu0 %v804
    %v877 = vpop.f32.mrf.mxu0
    %v878 = vadd.f32 0.0, %v877
    %v879 = vpop.f32.mrf.mxu0
    %880 = vdwg.mxu0
    %v882 = vsel %vm528, %v255, 0
    %v885 = vsel %vm528, %v256, 0
    %887 = vmatprep.subr.mxu0 0.0
    %888 = vmatpush1.msra.mxu0 0.0
    %889 = vmatprep.subr.mxu0 0.0
    %890 = vmatpush1.msra.mxu0 0.0
    %891 = vmatprep.subr.mxu0 0.0
    %892 = vmatpush1.msra.mxu0 0.0
    %893 = vmatprep.subr.mxu0 0.0
    %894 = vmatpush1.msra.mxu0 0.0
    %895 = vmatprep.subr.mxu0 0.0
    %896 = vmatpush1.msra.mxu0 0.0
    %897 = vmatprep.subr.mxu0 0.0
    %898 = vmatpush1.msra.mxu0 0.0
    %899 = vmatprep.subr.mxu0 0.0
    %900 = vmatpush1.msra.mxu0 0.0
    %901 = vmatprep.subr.mxu0 0.0
    %902 = vmatpush1.msra.mxu0 0.0
    %903 = vmatprep.subr.mxu0 0.0
    %904 = vmatpush1.msra.mxu0 0.0
    %905 = vmatprep.subr.mxu0 0.0
    %906 = vmatpush1.msra.mxu0 0.0
    %907 = vmatprep.subr.mxu0 0.0
    %908 = vmatpush1.msra.mxu0 0.0
    %909 = vmatprep.subr.mxu0 0.0
    %910 = vmatpush1.msra.mxu0 0.0
    %911 = vmatprep.subr.mxu0 0.0
    %912 = vmatpush1.msra.mxu0 %v794
    %913 = vmatprep.subr.mxu0 0.0
    %914 = vmatpush1.msra.mxu0 %v793
    %915 = vmatprep.subr.mxu0 0.0
    %916 = vmatpush1.msra.mxu0 %v792
    %917 = vmatprep.subr.mxu0 0.0
    %918 = vmatpush1.msra.mxu0 %v791
    %919 = vmatprep.subr.mxu0 0.0
    %920 = vmatpush2.msra.mxu0 0.0
    %921 = vmatprep.subr.mxu0 0.0
    %922 = vmatpush2.msra.mxu0 0.0
    %923 = vmatprep.subr.mxu0 0.0
    %924 = vmatpush2.msra.mxu0 0.0
    %925 = vmatprep.subr.mxu0 0.0
    %926 = vmatpush2.msra.mxu0 0.0
    %927 = vmatprep.subr.mxu0 0.0
    %928 = vmatpush2.msra.mxu0 0.0
    %929 = vmatprep.subr.mxu0 0.0
    %930 = vmatpush2.msra.mxu0 0.0
    %931 = vmatprep.subr.mxu0 0.0
    %932 = vmatpush2.msra.mxu0 0.0
    %933 = vmatprep.subr.mxu0 0.0
    %934 = vmatpush2.msra.mxu0 0.0
    %935 = vmatprep.subr.mxu0 0.0
    %936 = vmatpush2.msra.mxu0 0.0
    %937 = vmatprep.subr.mxu0 0.0
    %938 = vmatpush2.msra.mxu0 0.0
    %939 = vmatprep.subr.mxu0 0.0
    %940 = vmatpush2.msra.mxu0 0.0
    %941 = vmatprep.subr.mxu0 0.0
    %942 = vmatpush2.msra.mxu0 0.0
    %943 = vmatprep.subr.mxu0 0.0
    %944 = vmatpush2.msra.mxu0 0.0
    %945 = vmatprep.subr.mxu0 0.0
    %946 = vmatpush2.msra.mxu0 0.0
    %947 = vmatprep.subr.mxu0 0.0
    %948 = vmatpush2.msra.mxu0 0.0
    %949 = vmatprep.subr.mxu0 0.0
    %950 = vmatpush2.msra.mxu0 0.0
    %951 = vmatprep.mubr.f32.mxu0 0.0
    %952 = vmatmul.mubr.f32.gmra.mxu0 %v882
    %v953 = vpop.f32.mrf.mxu0
    %v954 = vadd.f32 %v873, %v953
    %v955 = vpop.f32.mrf.mxu0
    %956 = vmatprep.mubr.f32.mxu0 0.0
    %957 = vmatmul.mubr.f32.gmra.mxu0 %v885
    %v958 = vpop.f32.mrf.mxu0
    %v959 = vadd.f32 %v878, %v958
    %v960 = vpop.f32.mrf.mxu0
    %961 = vdwg.mxu0
    %v963 = vlaneseq
    %v964 = vshrl.u32 %v963, 7
    %v965 = vsub.s32 0, %v964
    %v966 = vrot.slane %v799, %v965
    %v968 = vadd.f32 %v954, %v966
    %v969 = vadd.f32 %v959, %v966
    %970 = vmatprep.subr.mxu0 0.0
    %971 = vmatpush1.msra.mxu0 0.0
    %972 = vmatprep.subr.mxu0 0.0
    %973 = vmatpush1.msra.mxu0 0.0
    %974 = vmatprep.subr.mxu0 0.0
    %975 = vmatpush1.msra.mxu0 0.0
    %976 = vmatprep.subr.mxu0 0.0
    %977 = vmatpush1.msra.mxu0 0.0
    %978 = vmatprep.subr.mxu0 0.0
    %979 = vmatpush1.msra.mxu0 0.0
    %980 = vmatprep.subr.mxu0 0.0
    %981 = vmatpush1.msra.mxu0 0.0
    %982 = vmatprep.subr.mxu0 0.0
    %983 = vmatpush1.msra.mxu0 0.0
    %984 = vmatprep.subr.mxu0 0.0
    %985 = vmatpush1.msra.mxu0 0.0
    %986 = vmatprep.subr.mxu0 0.0
    %987 = vmatpush1.msra.mxu0 0.0
    %988 = vmatprep.subr.mxu0 0.0
    %989 = vmatpush1.msra.mxu0 0.0
    %990 = vmatprep.subr.mxu0 0.0
    %991 = vmatpush1.msra.mxu0 0.0
    %992 = vmatprep.subr.mxu0 0.0
    %993 = vmatpush1.msra.mxu0 0.0
    %994 = vmatprep.subr.mxu0 0.0
    %995 = vmatpush1.msra.mxu0 0.0
    %996 = vmatprep.subr.mxu0 0.0
    %997 = vmatpush1.msra.mxu0 %v715
    %998 = vmatprep.subr.mxu0 0.0
    %999 = vmatpush1.msra.mxu0 %v714
    %1000 = vmatprep.subr.mxu0 0.0
    %1001 = vmatpush1.msra.mxu0 %v713
    %1002 = vmatprep.subr.mxu0 0.0
    %1003 = vmatpush2.msra.mxu0 0.0
    %1004 = vmatprep.subr.mxu0 0.0
    %1005 = vmatpush2.msra.mxu0 0.0
    %1006 = vmatprep.subr.mxu0 0.0
    %1007 = vmatpush2.msra.mxu0 0.0
    %1008 = vmatprep.subr.mxu0 0.0
    %1009 = vmatpush2.msra.mxu0 0.0
    %1010 = vmatprep.subr.mxu0 0.0
    %1011 = vmatpush2.msra.mxu0 0.0
    %1012 = vmatprep.subr.mxu0 0.0
    %1013 = vmatpush2.msra.mxu0 0.0
    %1014 = vmatprep.subr.mxu0 0.0
    %1015 = vmatpush2.msra.mxu0 0.0
    %1016 = vmatprep.subr.mxu0 0.0
    %1017 = vmatpush2.msra.mxu0 0.0
    %1018 = vmatprep.subr.mxu0 0.0
    %1019 = vmatpush2.msra.mxu0 0.0
    %1020 = vmatprep.subr.mxu0 0.0
    %1021 = vmatpush2.msra.mxu0 0.0
    %1022 = vmatprep.subr.mxu0 0.0
    %1023 = vmatpush2.msra.mxu0 0.0
    %1024 = vmatprep.subr.mxu0 0.0
    %1025 = vmatpush2.msra.mxu0 0.0
    %1026 = vmatprep.subr.mxu0 0.0
    %1027 = vmatpush2.msra.mxu0 0.0
    %1028 = vmatprep.subr.mxu0 0.0
    %1029 = vmatpush2.msra.mxu0 0.0
    %1030 = vmatprep.subr.mxu0 0.0
    %1031 = vmatpush2.msra.mxu0 0.0
    %1032 = vmatprep.subr.mxu0 0.0
    %1033 = vmatpush2.msra.mxu0 0.0
    %1034 = vmatprep.mubr.f32.mxu0 0.0
    %1035 = vmatmul.mubr.f32.gmra.mxu0 %v269
    %v1036 = vpop.f32.mrf.mxu0
    %v1037 = vadd.f32 0.0, %v1036
    %v1038 = vpop.f32.mrf.mxu0
    %1039 = vmatprep.mubr.f32.mxu0 0.0
    %1040 = vmatmul.mubr.f32.gmra.mxu0 %v272
    %v1041 = vpop.f32.mrf.mxu0
    %v1042 = vadd.f32 0.0, %v1041
    %v1043 = vpop.f32.mrf.mxu0
    %1044 = vdwg.mxu0
    %v1045 = vld [vmem:[#allocation16] sm:$0xff]
    %v1046 = vld [vmem:[#allocation16 + $0x8] sm:$0xff]
    %v1047 = vld [vmem:[#allocation16 + $0x10] sm:$0xff]
    %v1048 = vld [vmem:[#allocation16 + $0x18] sm:$0xff]
    %v1049 = vld [vmem:[#allocation17] sm:$0xff]
    %v1050 = vld [vmem:[#allocation17 + $0x8] sm:$0xff]
    %v1051 = vld [vmem:[#allocation17 + $0x10] sm:$0xff]
    %v1052 = vld [vmem:[#allocation17 + $0x18] sm:$0xff]
    %v1053 = vld [vmem:[#allocation19] sm:$0x1]
    %v1055 = vsel %vm528, %v1037, 0
    %v1058 = vsel %vm528, %v1042, 0
    %1060 = vmatprep.subr.mxu0 0.0
    %1061 = vmatpush1.msra.mxu0 0.0
    %1062 = vmatprep.subr.mxu0 0.0
    %1063 = vmatpush1.msra.mxu0 0.0
    %1064 = vmatprep.subr.mxu0 0.0
    %1065 = vmatpush1.msra.mxu0 0.0
    %1066 = vmatprep.subr.mxu0 0.0
    %1067 = vmatpush1.msra.mxu0 0.0
    %1068 = vmatprep.subr.mxu0 0.0
    %1069 = vmatpush1.msra.mxu0 0.0
    %1070 = vmatprep.subr.mxu0 0.0
    %1071 = vmatpush1.msra.mxu0 0.0
    %1072 = vmatprep.subr.mxu0 0.0
    %1073 = vmatpush1.msra.mxu0 0.0
    %1074 = vmatprep.subr.mxu0 0.0
    %1075 = vmatpush1.msra.mxu0 0.0
    %1076 = vmatprep.subr.mxu0 0.0
    %1077 = vmatpush1.msra.mxu0 0.0
    %1078 = vmatprep.subr.mxu0 0.0
    %1079 = vmatpush1.msra.mxu0 0.0
    %1080 = vmatprep.subr.mxu0 0.0
    %1081 = vmatpush1.msra.mxu0 0.0
    %1082 = vmatprep.subr.mxu0 0.0
    %1083 = vmatpush1.msra.mxu0 0.0
    %1084 = vmatprep.subr.mxu0 0.0
    %1085 = vmatpush1.msra.mxu0 %v1052
    %1086 = vmatprep.subr.mxu0 0.0
    %1087 = vmatpush1.msra.mxu0 %v1051
    %1088 = vmatprep.subr.mxu0 0.0
    %1089 = vmatpush1.msra.mxu0 %v1050
    %1090 = vmatprep.subr.mxu0 0.0
    %1091 = vmatpush1.msra.mxu0 %v1049
    %1092 = vmatprep.subr.mxu0 0.0
    %1093 = vmatpush2.msra.mxu0 0.0
    %1094 = vmatprep.subr.mxu0 0.0
    %1095 = vmatpush2.msra.mxu0 0.0
    %1096 = vmatprep.subr.mxu0 0.0
    %1097 = vmatpush2.msra.mxu0 0.0
    %1098 = vmatprep.subr.mxu0 0.0
    %1099 = vmatpush2.msra.mxu0 0.0
    %1100 = vmatprep.subr.mxu0 0.0
    %1101 = vmatpush2.msra.mxu0 0.0
    %1102 = vmatprep.subr.mxu0 0.0
    %1103 = vmatpush2.msra.mxu0 0.0
    %1104 = vmatprep.subr.mxu0 0.0
    %1105 = vmatpush2.msra.mxu0 0.0
    %1106 = vmatprep.subr.mxu0 0.0
    %1107 = vmatpush2.msra.mxu0 0.0
    %1108 = vmatprep.subr.mxu0 0.0
    %1109 = vmatpush2.msra.mxu0 0.0
    %1110 = vmatprep.subr.mxu0 0.0
    %1111 = vmatpush2.msra.mxu0 0.0
    %1112 = vmatprep.subr.mxu0 0.0
    %1113 = vmatpush2.msra.mxu0 0.0
    %1114 = vmatprep.subr.mxu0 0.0
    %1115 = vmatpush2.msra.mxu0 0.0
    %1116 = vmatprep.subr.mxu0 0.0
    %1117 = vmatpush2.msra.mxu0 0.0
    %1118 = vmatprep.subr.mxu0 0.0
    %1119 = vmatpush2.msra.mxu0 0.0
    %1120 = vmatprep.subr.mxu0 0.0
    %1121 = vmatpush2.msra.mxu0 0.0
    %1122 = vmatprep.subr.mxu0 0.0
    %1123 = vmatpush2.msra.mxu0 0.0
    %1124 = vmatprep.mubr.f32.mxu0 0.0
    %1125 = vmatmul.mubr.f32.gmra.mxu0 %v1055
    %v1126 = vpop.f32.mrf.mxu0
    %v1127 = vadd.f32 0.0, %v1126
    %v1128 = vpop.f32.mrf.mxu0
    %1129 = vmatprep.mubr.f32.mxu0 0.0
    %1130 = vmatmul.mubr.f32.gmra.mxu0 %v1058
    %v1131 = vpop.f32.mrf.mxu0
    %v1132 = vadd.f32 0.0, %v1131
    %v1133 = vpop.f32.mrf.mxu0
    %1134 = vdwg.mxu0
    %v1136 = vsel %vm528, %v968, 0
    %v1139 = vsel %vm528, %v969, 0
    %1141 = vmatprep.subr.mxu0 0.0
    %1142 = vmatpush1.msra.mxu0 0.0
    %1143 = vmatprep.subr.mxu0 0.0
    %1144 = vmatpush1.msra.mxu0 0.0
    %1145 = vmatprep.subr.mxu0 0.0
    %1146 = vmatpush1.msra.mxu0 0.0
    %1147 = vmatprep.subr.mxu0 0.0
    %1148 = vmatpush1.msra.mxu0 0.0
    %1149 = vmatprep.subr.mxu0 0.0
    %1150 = vmatpush1.msra.mxu0 0.0
    %1151 = vmatprep.subr.mxu0 0.0
    %1152 = vmatpush1.msra.mxu0 0.0
    %1153 = vmatprep.subr.mxu0 0.0
    %1154 = vmatpush1.msra.mxu0 0.0
    %1155 = vmatprep.subr.mxu0 0.0
    %1156 = vmatpush1.msra.mxu0 0.0
    %1157 = vmatprep.subr.mxu0 0.0
    %1158 = vmatpush1.msra.mxu0 0.0
    %1159 = vmatprep.subr.mxu0 0.0
    %1160 = vmatpush1.msra.mxu0 0.0
    %1161 = vmatprep.subr.mxu0 0.0
    %1162 = vmatpush1.msra.mxu0 0.0
    %1163 = vmatprep.subr.mxu0 0.0
    %1164 = vmatpush1.msra.mxu0 0.0
    %1165 = vmatprep.subr.mxu0 0.0
    %1166 = vmatpush1.msra.mxu0 %v1048
    %1167 = vmatprep.subr.mxu0 0.0
    %1168 = vmatpush1.msra.mxu0 %v1047
    %1169 = vmatprep.subr.mxu0 0.0
    %1170 = vmatpush1.msra.mxu0 %v1046
    %1171 = vmatprep.subr.mxu0 0.0
    %1172 = vmatpush1.msra.mxu0 %v1045
    %1173 = vmatprep.subr.mxu0 0.0
    %1174 = vmatpush2.msra.mxu0 0.0
    %1175 = vmatprep.subr.mxu0 0.0
    %1176 = vmatpush2.msra.mxu0 0.0
    %1177 = vmatprep.subr.mxu0 0.0
    %1178 = vmatpush2.msra.mxu0 0.0
    %1179 = vmatprep.subr.mxu0 0.0
    %1180 = vmatpush2.msra.mxu0 0.0
    %1181 = vmatprep.subr.mxu0 0.0
    %1182 = vmatpush2.msra.mxu0 0.0
    %1183 = vmatprep.subr.mxu0 0.0
    %1184 = vmatpush2.msra.mxu0 0.0
    %1185 = vmatprep.subr.mxu0 0.0
    %1186 = vmatpush2.msra.mxu0 0.0
    %1187 = vmatprep.subr.mxu0 0.0
    %1188 = vmatpush2.msra.mxu0 0.0
    %1189 = vmatprep.subr.mxu0 0.0
    %1190 = vmatpush2.msra.mxu0 0.0
    %1191 = vmatprep.subr.mxu0 0.0
    %1192 = vmatpush2.msra.mxu0 0.0
    %1193 = vmatprep.subr.mxu0 0.0
    %1194 = vmatpush2.msra.mxu0 0.0
    %1195 = vmatprep.subr.mxu0 0.0
    %1196 = vmatpush2.msra.mxu0 0.0
    %1197 = vmatprep.subr.mxu0 0.0
    %1198 = vmatpush2.msra.mxu0 0.0
    %1199 = vmatprep.subr.mxu0 0.0
    %1200 = vmatpush2.msra.mxu0 0.0
    %1201 = vmatprep.subr.mxu0 0.0
    %1202 = vmatpush2.msra.mxu0 0.0
    %1203 = vmatprep.subr.mxu0 0.0
    %1204 = vmatpush2.msra.mxu0 0.0
    %1205 = vmatprep.mubr.f32.mxu0 0.0
    %1206 = vmatmul.mubr.f32.gmra.mxu0 %v1136
    %v1207 = vpop.f32.mrf.mxu0
    %v1208 = vadd.f32 %v1127, %v1207
    %v1209 = vpop.f32.mrf.mxu0
    %1210 = vmatprep.mubr.f32.mxu0 0.0
    %1211 = vmatmul.mubr.f32.gmra.mxu0 %v1139
    %v1212 = vpop.f32.mrf.mxu0
    %v1213 = vadd.f32 %v1132, %v1212
    %v1214 = vpop.f32.mrf.mxu0
    %1215 = vdwg.mxu0
    %v1217 = vlaneseq
    %v1218 = vshrl.u32 %v1217, 7
    %v1219 = vsub.s32 0, %v1218
    %v1220 = vrot.slane %v1053, %v1219
    %v1222 = vadd.f32 %v1208, %v1220
    %v1223 = vadd.f32 %v1213, %v1220
    %v1224 = vmul.f32 %v1037, %v1037
    %v1225 = vmul.f32 %v1042, %v1042
    %v1226 = vsel %vm528, %v1224, 0.0
    %1227 = vadd.xlane.f32.xlu0 %v1226
    %v1228 = vpop.xlane.xlu0 %1227
    %v1229 = vsel %vm528, %v1225, 0.0
    %1230 = vadd.xlane.f32.xlu0 %v1229
    %v1231 = vpop.xlane.xlu0 %1230
    %v1232 = vmax.f32 %v1228, 1e-16
    %v1233 = vmax.f32 %v1231, 1e-16
    %v1234 = vrsqrt.pop %v1232
    %v1235 = vrsqrt.pop %v1233
    %v1236 = vmul.f32 %v1037, %v1234
    %v1237 = vmul.f32 %v1042, %v1235
    %v1239 = vsel %vm528, %v1236, 0
    %v1242 = vsel %vm528, %v1237, 0
    %1244 = vmatprep.subr.mxu0 0.0
    %1245 = vmatpush1.xpose.msra.mxu0 0.0
    %1246 = vmatprep.subr.mxu0 0.0
    %1247 = vmatpush1.xpose.msra.mxu0 0.0
    %1248 = vmatprep.subr.mxu0 0.0
    %1249 = vmatpush1.xpose.msra.mxu0 0.0
    %1250 = vmatprep.subr.mxu0 0.0
    %1251 = vmatpush1.xpose.msra.mxu0 0.0
    %1252 = vmatprep.subr.mxu0 0.0
    %1253 = vmatpush1.xpose.msra.mxu0 0.0
    %1254 = vmatprep.subr.mxu0 0.0
    %1255 = vmatpush1.xpose.msra.mxu0 0.0
    %1256 = vmatprep.subr.mxu0 0.0
    %1257 = vmatpush1.xpose.msra.mxu0 0.0
    %1258 = vmatprep.subr.mxu0 0.0
    %1259 = vmatpush1.xpose.msra.mxu0 0.0
    %1260 = vmatprep.subr.mxu0 0.0
    %1261 = vmatpush1.xpose.msra.mxu0 0.0
    %1262 = vmatprep.subr.mxu0 0.0
    %1263 = vmatpush1.xpose.msra.mxu0 0.0
    %1264 = vmatprep.subr.mxu0 0.0
    %1265 = vmatpush1.xpose.msra.mxu0 0.0
    %1266 = vmatprep.subr.mxu0 0.0
    %1267 = vmatpush1.xpose.msra.mxu0 0.0
    %1268 = vmatprep.subr.mxu0 0.0
    %1269 = vmatpush1.xpose.msra.mxu0 0.0
    %1270 = vmatprep.subr.mxu0 0.0
    %1271 = vmatpush1.xpose.msra.mxu0 0.0
    %1272 = vmatprep.subr.mxu0 0.0
    %1273 = vmatpush1.xpose.msra.mxu0 %v1242
    %1274 = vmatprep.subr.mxu0 0.0
    %1275 = vmatpush1.xpose.msra.mxu0 %v1239
    %1276 = vmatprep.subr.mxu0 0.0
    %1277 = vmatpush2.xpose.msra.mxu0 0.0
    %1278 = vmatprep.subr.mxu0 0.0
    %1279 = vmatpush2.xpose.msra.mxu0 0.0
    %1280 = vmatprep.subr.mxu0 0.0
    %1281 = vmatpush2.xpose.msra.mxu0 0.0
    %1282 = vmatprep.subr.mxu0 0.0
    %1283 = vmatpush2.xpose.msra.mxu0 0.0
    %1284 = vmatprep.subr.mxu0 0.0
    %1285 = vmatpush2.xpose.msra.mxu0 0.0
    %1286 = vmatprep.subr.mxu0 0.0
    %1287 = vmatpush2.xpose.msra.mxu0 0.0
    %1288 = vmatprep.subr.mxu0 0.0
    %1289 = vmatpush2.xpose.msra.mxu0 0.0
    %1290 = vmatprep.subr.mxu0 0.0
    %1291 = vmatpush2.xpose.msra.mxu0 0.0
    %1292 = vmatprep.subr.mxu0 0.0
    %1293 = vmatpush2.xpose.msra.mxu0 0.0
    %1294 = vmatprep.subr.mxu0 0.0
    %1295 = vmatpush2.xpose.msra.mxu0 0.0
    %1296 = vmatprep.subr.mxu0 0.0
    %1297 = vmatpush2.xpose.msra.mxu0 0.0
    %1298 = vmatprep.subr.mxu0 0.0
    %1299 = vmatpush2.xpose.msra.mxu0 0.0
    %1300 = vmatprep.subr.mxu0 0.0
    %1301 = vmatpush2.xpose.msra.mxu0 0.0
    %1302 = vmatprep.subr.mxu0 0.0
    %1303 = vmatpush2.xpose.msra.mxu0 0.0
    %1304 = vmatprep.subr.mxu0 0.0
    %1305 = vmatpush2.xpose.msra.mxu0 0.0
    %1306 = vmatprep.subr.mxu0 0.0
    %1307 = vmatpush2.xpose.msra.mxu0 0.0
    %1308 = vmatprep.mubr.f32.mxu0 0.0
    %1309 = vmatmul.mubr.f32.gmra.mxu0 %v1239
    %v1310 = vpop.f32.mrf.mxu0
    %v1311 = vadd.f32 0.0, %v1310
    %v1312 = vpop.f32.mrf.mxu0
    %1313 = vmatprep.mubr.f32.mxu0 0.0
    %1314 = vmatmul.mubr.f32.gmra.mxu0 %v1242
    %v1315 = vpop.f32.mrf.mxu0
    %v1316 = vadd.f32 0.0, %v1315
    %v1317 = vpop.f32.mrf.mxu0
    %1318 = vdwg.mxu0
    %vm1319 = vcmp.eq.f32.partialorder %v265, 1.0
    %vm1320 = vcmp.eq.f32.partialorder %v266, 1.0
    %vm1321 = vcmp.gt.f32.partialorder %v1311, 0.0
    %vm1322 = vcmp.gt.f32.partialorder %v1316, 0.0
    %vm1323 = vmand %vm1319, %vm1321
    %vm1324 = vmand %vm1320, %vm1322
    %vm1325 = vcmp.eq.f32.partialorder %v265, -1.0
    %vm1326 = vcmp.eq.f32.partialorder %v266, -1.0
    %vm1327 = vcmp.le.f32.partialorder %v1311, 0.0
    %vm1328 = vcmp.le.f32.partialorder %v1316, 0.0
    %vm1329 = vmand %vm1325, %vm1327
    %vm1330 = vmand %vm1326, %vm1328
    %vm1331 = vcmp.ne.f32.partialorder %v265, 0.0
    %vm1332 = vcmp.ne.f32.partialorder %v266, 0.0
    %vm1333 = vmor %vm1323, %vm1329
    %vm1334 = vmor %vm1324, %vm1330
    %vm1335 = vmxor %vm1333, 1
    %vm1336 = vmxor %vm1334, 1
    %vm1337 = vmand %vm1331, %vm1335
    %vm1338 = vmand %vm1332, %vm1336
    %v1339 = vsel %vm1323, 1, 0
    %v1340 = vsel %vm1324, 1, 0
    %v1341 = vcvt.s32.f32 %v1339
    %v1342 = vcvt.s32.f32 %v1340
    %v1343 = vsel %vm349, %v1341, 0.0
    %1344 = vadd.xlane.f32.xlu0 %v1343
    %v1345 = vpop.xlane.xlu0 %1344
    %v1346 = vsel %vm349, %v1342, 0.0
    %1347 = vadd.xlane.f32.xlu0 %v1346
    %v1348 = vpop.xlane.xlu0 %1347
    %v1349 = vadd.f32 %v1345, 1e-07
    %v1350 = vadd.f32 %v1348, 1e-07
    %v1351 = vrcp.pop %v1349
    %v1352 = vmul.f32 %v1341, %v1351
    %v1353 = vrcp.pop %v1350
    %v1354 = vmul.f32 %v1342, %v1353
    %v1355 = vsel %vm1329, 1, 0
    %v1356 = vsel %vm1330, 1, 0
    %v1357 = vcvt.s32.f32 %v1355
    %v1358 = vcvt.s32.f32 %v1356
    %v1359 = vsel %vm349, %v1357, 0.0
    %1360 = vadd.xlane.f32.xlu0 %v1359
    %v1361 = vpop.xlane.xlu0 %1360
    %v1362 = vsel %vm349, %v1358, 0.0
    %1363 = vadd.xlane.f32.xlu0 %v1362
    %v1364 = vpop.xlane.xlu0 %1363
    %v1365 = vadd.f32 %v1361, 1e-07
    %v1366 = vadd.f32 %v1364, 1e-07
    %v1367 = vrcp.pop %v1365
    %v1368 = vmul.f32 %v1357, %v1367
    %v1369 = vrcp.pop %v1366
    %v1370 = vmul.f32 %v1358, %v1369
    %v1371 = vsel %vm1337, 1, 0
    %v1372 = vsel %vm1338, 1, 0
    %v1373 = vcvt.s32.f32 %v1371
    %v1374 = vcvt.s32.f32 %v1372
    %v1375 = vsel %vm349, %v1373, 0.0
    %1376 = vadd.xlane.f32.xlu0 %v1375
    %v1377 = vpop.xlane.xlu0 %1376
    %v1378 = vsel %vm349, %v1374, 0.0
    %1379 = vadd.xlane.f32.xlu0 %v1378
    %v1380 = vpop.xlane.xlu0 %1379
    %v1381 = vadd.f32 %v1377, 1e-07
    %v1382 = vadd.f32 %v1380, 1e-07
    %v1383 = vrcp.pop %v1381
    %v1384 = vmul.f32 %v1373, %v1383
    %v1385 = vrcp.pop %v1382
    %v1386 = vmul.f32 %v1374, %v1385
    %v1387 = vadd.f32 %v1352, %v1368
    %v1388 = vadd.f32 %v1354, %v1370
    %v1390 = vsel %vm349, %v1352, 0
    %v1393 = vsel %vm349, %v1354, 0
    %1395 = vmatprep.subr.mxu0 0.0
    %1396 = vmatpush1.msra.mxu0 0.0
    %1397 = vmatprep.subr.mxu0 0.0
    %1398 = vmatpush1.msra.mxu0 0.0
    %1399 = vmatprep.subr.mxu0 0.0
    %1400 = vmatpush1.msra.mxu0 0.0
    %1401 = vmatprep.subr.mxu0 0.0
    %1402 = vmatpush1.msra.mxu0 0.0
    %1403 = vmatprep.subr.mxu0 0.0
    %1404 = vmatpush1.msra.mxu0 0.0
    %1405 = vmatprep.subr.mxu0 0.0
    %1406 = vmatpush1.msra.mxu0 0.0
    %1407 = vmatprep.subr.mxu0 0.0
    %1408 = vmatpush1.msra.mxu0 0.0
    %1409 = vmatprep.subr.mxu0 0.0
    %1410 = vmatpush1.msra.mxu0 0.0
    %1411 = vmatprep.subr.mxu0 0.0
    %1412 = vmatpush1.msra.mxu0 0.0
    %1413 = vmatprep.subr.mxu0 0.0
    %1414 = vmatpush1.msra.mxu0 0.0
    %1415 = vmatprep.subr.mxu0 0.0
    %1416 = vmatpush1.msra.mxu0 0.0
    %1417 = vmatprep.subr.mxu0 0.0
    %1418 = vmatpush1.msra.mxu0 0.0
    %1419 = vmatprep.subr.mxu0 0.0
    %1420 = vmatpush1.msra.mxu0 0.0
    %1421 = vmatprep.subr.mxu0 0.0
    %1422 = vmatpush1.msra.mxu0 0.0
    %1423 = vmatprep.subr.mxu0 0.0
    %1424 = vmatpush1.msra.mxu0 %v1223
    %1425 = vmatprep.subr.mxu0 0.0
    %1426 = vmatpush1.msra.mxu0 %v1222
    %1427 = vmatprep.subr.mxu0 0.0
    %1428 = vmatpush2.msra.mxu0 0.0
    %1429 = vmatprep.subr.mxu0 0.0
    %1430 = vmatpush2.msra.mxu0 0.0
    %1431 = vmatprep.subr.mxu0 0.0
    %1432 = vmatpush2.msra.mxu0 0.0
    %1433 = vmatprep.subr.mxu0 0.0
    %1434 = vmatpush2.msra.mxu0 0.0
    %1435 = vmatprep.subr.mxu0 0.0
    %1436 = vmatpush2.msra.mxu0 0.0
    %1437 = vmatprep.subr.mxu0 0.0
    %1438 = vmatpush2.msra.mxu0 0.0
    %1439 = vmatprep.subr.mxu0 0.0
    %1440 = vmatpush2.msra.mxu0 0.0
    %1441 = vmatprep.subr.mxu0 0.0
    %1442 = vmatpush2.msra.mxu0 0.0
    %1443 = vmatprep.subr.mxu0 0.0
    %1444 = vmatpush2.msra.mxu0 0.0
    %1445 = vmatprep.subr.mxu0 0.0
    %1446 = vmatpush2.msra.mxu0 0.0
    %1447 = vmatprep.subr.mxu0 0.0
    %1448 = vmatpush2.msra.mxu0 0.0
    %1449 = vmatprep.subr.mxu0 0.0
    %1450 = vmatpush2.msra.mxu0 0.0
    %1451 = vmatprep.subr.mxu0 0.0
    %1452 = vmatpush2.msra.mxu0 0.0
    %1453 = vmatprep.subr.mxu0 0.0
    %1454 = vmatpush2.msra.mxu0 0.0
    %1455 = vmatprep.subr.mxu0 0.0
    %1456 = vmatpush2.msra.mxu0 0.0
    %1457 = vmatprep.subr.mxu0 0.0
    %1458 = vmatpush2.msra.mxu0 0.0
    %1459 = vmatprep.mubr.f32.mxu0 0.0
    %1460 = vmatmul.mubr.f32.gmra.mxu0 %v1390
    %v1461 = vpop.f32.mrf.mxu0
    %v1462 = vadd.f32 0.0, %v1461
    %v1463 = vpop.f32.mrf.mxu0
    %1464 = vmatprep.mubr.f32.mxu0 0.0
    %1465 = vmatmul.mubr.f32.gmra.mxu0 %v1393
    %v1466 = vpop.f32.mrf.mxu0
    %v1467 = vadd.f32 0.0, %v1466
    %v1468 = vpop.f32.mrf.mxu0
    %1469 = vdwg.mxu0
    %v1471 = vsel %vm349, %v1368, 0
    %v1474 = vsel %vm349, %v1370, 0
    %1476 = vmatprep.subr.mxu0 0.0
    %1477 = vmatpush1.msra.mxu0 0.0
    %1478 = vmatprep.subr.mxu0 0.0
    %1479 = vmatpush1.msra.mxu0 0.0
    %1480 = vmatprep.subr.mxu0 0.0
    %1481 = vmatpush1.msra.mxu0 0.0
    %1482 = vmatprep.subr.mxu0 0.0
    %1483 = vmatpush1.msra.mxu0 0.0
    %1484 = vmatprep.subr.mxu0 0.0
    %1485 = vmatpush1.msra.mxu0 0.0
    %1486 = vmatprep.subr.mxu0 0.0
    %1487 = vmatpush1.msra.mxu0 0.0
    %1488 = vmatprep.subr.mxu0 0.0
    %1489 = vmatpush1.msra.mxu0 0.0
    %1490 = vmatprep.subr.mxu0 0.0
    %1491 = vmatpush1.msra.mxu0 0.0
    %1492 = vmatprep.subr.mxu0 0.0
    %1493 = vmatpush1.msra.mxu0 0.0
    %1494 = vmatprep.subr.mxu0 0.0
    %1495 = vmatpush1.msra.mxu0 0.0
    %1496 = vmatprep.subr.mxu0 0.0
    %1497 = vmatpush1.msra.mxu0 0.0
    %1498 = vmatprep.subr.mxu0 0.0
    %1499 = vmatpush1.msra.mxu0 0.0
    %1500 = vmatprep.subr.mxu0 0.0
    %1501 = vmatpush1.msra.mxu0 0.0
    %1502 = vmatprep.subr.mxu0 0.0
    %1503 = vmatpush1.msra.mxu0 0.0
    %1504 = vmatprep.subr.mxu0 0.0
    %1505 = vmatpush1.msra.mxu0 %v1223
    %1506 = vmatprep.subr.mxu0 0.0
    %1507 = vmatpush1.msra.mxu0 %v1222
    %1508 = vmatprep.subr.mxu0 0.0
    %1509 = vmatpush2.msra.mxu0 0.0
    %1510 = vmatprep.subr.mxu0 0.0
    %1511 = vmatpush2.msra.mxu0 0.0
    %1512 = vmatprep.subr.mxu0 0.0
    %1513 = vmatpush2.msra.mxu0 0.0
    %1514 = vmatprep.subr.mxu0 0.0
    %1515 = vmatpush2.msra.mxu0 0.0
    %1516 = vmatprep.subr.mxu0 0.0
    %1517 = vmatpush2.msra.mxu0 0.0
    %1518 = vmatprep.subr.mxu0 0.0
    %1519 = vmatpush2.msra.mxu0 0.0
    %1520 = vmatprep.subr.mxu0 0.0
    %1521 = vmatpush2.msra.mxu0 0.0
    %1522 = vmatprep.subr.mxu0 0.0
    %1523 = vmatpush2.msra.mxu0 0.0
    %1524 = vmatprep.subr.mxu0 0.0
    %1525 = vmatpush2.msra.mxu0 0.0
    %1526 = vmatprep.subr.mxu0 0.0
    %1527 = vmatpush2.msra.mxu0 0.0
    %1528 = vmatprep.subr.mxu0 0.0
    %1529 = vmatpush2.msra.mxu0 0.0
    %1530 = vmatprep.subr.mxu0 0.0
    %1531 = vmatpush2.msra.mxu0 0.0
    %1532 = vmatprep.subr.mxu0 0.0
    %1533 = vmatpush2.msra.mxu0 0.0
    %1534 = vmatprep.subr.mxu0 0.0
    %1535 = vmatpush2.msra.mxu0 0.0
    %1536 = vmatprep.subr.mxu0 0.0
    %1537 = vmatpush2.msra.mxu0 0.0
    %1538 = vmatprep.subr.mxu0 0.0
    %1539 = vmatpush2.msra.mxu0 0.0
    %1540 = vmatprep.mubr.f32.mxu0 0.0
    %1541 = vmatmul.mubr.f32.gmra.mxu0 %v1471
    %v1542 = vpop.f32.mrf.mxu0
    %v1543 = vadd.f32 0.0, %v1542
    %v1544 = vpop.f32.mrf.mxu0
    %1545 = vmatprep.mubr.f32.mxu0 0.0
    %1546 = vmatmul.mubr.f32.gmra.mxu0 %v1474
    %v1547 = vpop.f32.mrf.mxu0
    %v1548 = vadd.f32 0.0, %v1547
    %v1549 = vpop.f32.mrf.mxu0
    %1550 = vdwg.mxu0
    %v1552 = vsel %vm349, %v1384, 0
    %v1555 = vsel %vm349, %v1386, 0
    %1557 = vmatprep.subr.mxu0 0.0
    %1558 = vmatpush1.msra.mxu0 0.0
    %1559 = vmatprep.subr.mxu0 0.0
    %1560 = vmatpush1.msra.mxu0 0.0
    %1561 = vmatprep.subr.mxu0 0.0
    %1562 = vmatpush1.msra.mxu0 0.0
    %1563 = vmatprep.subr.mxu0 0.0
    %1564 = vmatpush1.msra.mxu0 0.0
    %1565 = vmatprep.subr.mxu0 0.0
    %1566 = vmatpush1.msra.mxu0 0.0
    %1567 = vmatprep.subr.mxu0 0.0
    %1568 = vmatpush1.msra.mxu0 0.0
    %1569 = vmatprep.subr.mxu0 0.0
    %1570 = vmatpush1.msra.mxu0 0.0
    %1571 = vmatprep.subr.mxu0 0.0
    %1572 = vmatpush1.msra.mxu0 0.0
    %1573 = vmatprep.subr.mxu0 0.0
    %1574 = vmatpush1.msra.mxu0 0.0
    %1575 = vmatprep.subr.mxu0 0.0
    %1576 = vmatpush1.msra.mxu0 0.0
    %1577 = vmatprep.subr.mxu0 0.0
    %1578 = vmatpush1.msra.mxu0 0.0
    %1579 = vmatprep.subr.mxu0 0.0
    %1580 = vmatpush1.msra.mxu0 0.0
    %1581 = vmatprep.subr.mxu0 0.0
    %1582 = vmatpush1.msra.mxu0 0.0
    %1583 = vmatprep.subr.mxu0 0.0
    %1584 = vmatpush1.msra.mxu0 0.0
    %1585 = vmatprep.subr.mxu0 0.0
    %1586 = vmatpush1.msra.mxu0 %v1223
    %1587 = vmatprep.subr.mxu0 0.0
    %1588 = vmatpush1.msra.mxu0 %v1222
    %1589 = vmatprep.subr.mxu0 0.0
    %1590 = vmatpush2.msra.mxu0 0.0
    %1591 = vmatprep.subr.mxu0 0.0
    %1592 = vmatpush2.msra.mxu0 0.0
    %1593 = vmatprep.subr.mxu0 0.0
    %1594 = vmatpush2.msra.mxu0 0.0
    %1595 = vmatprep.subr.mxu0 0.0
    %1596 = vmatpush2.msra.mxu0 0.0
    %1597 = vmatprep.subr.mxu0 0.0
    %1598 = vmatpush2.msra.mxu0 0.0
    %1599 = vmatprep.subr.mxu0 0.0
    %1600 = vmatpush2.msra.mxu0 0.0
    %1601 = vmatprep.subr.mxu0 0.0
    %1602 = vmatpush2.msra.mxu0 0.0
    %1603 = vmatprep.subr.mxu0 0.0
    %1604 = vmatpush2.msra.mxu0 0.0
    %1605 = vmatprep.subr.mxu0 0.0
    %1606 = vmatpush2.msra.mxu0 0.0
    %1607 = vmatprep.subr.mxu0 0.0
    %1608 = vmatpush2.msra.mxu0 0.0
    %1609 = vmatprep.subr.mxu0 0.0
    %1610 = vmatpush2.msra.mxu0 0.0
    %1611 = vmatprep.subr.mxu0 0.0
    %1612 = vmatpush2.msra.mxu0 0.0
    %1613 = vmatprep.subr.mxu0 0.0
    %1614 = vmatpush2.msra.mxu0 0.0
    %1615 = vmatprep.subr.mxu0 0.0
    %1616 = vmatpush2.msra.mxu0 0.0
    %1617 = vmatprep.subr.mxu0 0.0
    %1618 = vmatpush2.msra.mxu0 0.0
    %1619 = vmatprep.subr.mxu0 0.0
    %1620 = vmatpush2.msra.mxu0 0.0
    %1621 = vmatprep.mubr.f32.mxu0 0.0
    %1622 = vmatmul.mubr.f32.gmra.mxu0 %v1552
    %v1623 = vpop.f32.mrf.mxu0
    %v1624 = vadd.f32 0.0, %v1623
    %v1625 = vpop.f32.mrf.mxu0
    %1626 = vmatprep.mubr.f32.mxu0 0.0
    %1627 = vmatmul.mubr.f32.gmra.mxu0 %v1555
    %v1628 = vpop.f32.mrf.mxu0
    %v1629 = vadd.f32 0.0, %v1628
    %v1630 = vpop.f32.mrf.mxu0
    %1631 = vdwg.mxu0
    %v1632 = vadd.f32 %v1462, %v1543
    %v1633 = vadd.f32 %v1467, %v1548
    %v1634 = vadd.f32 %v1632, %v1624
    %v1635 = vadd.f32 %v1633, %v1629
    %1636 = vmatprep.subr.mxu0 0.0
    %1637 = vmatpush1.msra.mxu0 0.0
    %1638 = vmatprep.subr.mxu0 0.0
    %1639 = vmatpush1.msra.mxu0 0.0
    %1640 = vmatprep.subr.mxu0 0.0
    %1641 = vmatpush1.msra.mxu0 0.0
    %1642 = vmatprep.subr.mxu0 0.0
    %1643 = vmatpush1.msra.mxu0 0.0
    %1644 = vmatprep.subr.mxu0 0.0
    %1645 = vmatpush1.msra.mxu0 0.0
    %1646 = vmatprep.subr.mxu0 0.0
    %1647 = vmatpush1.msra.mxu0 0.0
    %1648 = vmatprep.subr.mxu0 0.0
    %1649 = vmatpush1.msra.mxu0 0.0
    %1650 = vmatprep.subr.mxu0 0.0
    %1651 = vmatpush1.msra.mxu0 0.0
    %1652 = vmatprep.subr.mxu0 0.0
    %1653 = vmatpush1.msra.mxu0 0.0
    %1654 = vmatprep.subr.mxu0 0.0
    %1655 = vmatpush1.msra.mxu0 0.0
    %1656 = vmatprep.subr.mxu0 0.0
    %1657 = vmatpush1.msra.mxu0 0.0
    %1658 = vmatprep.subr.mxu0 0.0
    %1659 = vmatpush1.msra.mxu0 0.0
    %1660 = vmatprep.subr.mxu0 0.0
    %1661 = vmatpush1.msra.mxu0 0.0
    %1662 = vmatprep.subr.mxu0 0.0
    %1663 = vmatpush1.msra.mxu0 0.0
    %1664 = vmatprep.subr.mxu0 0.0
    %1665 = vmatpush1.msra.mxu0 %v1548
    %1666 = vmatprep.subr.mxu0 0.0
    %1667 = vmatpush1.msra.mxu0 %v1543
    %1668 = vmatprep.subr.mxu0 0.0
    %1669 = vmatpush2.msra.mxu0 0.0
    %1670 = vmatprep.subr.mxu0 0.0
    %1671 = vmatpush2.msra.mxu0 0.0
    %1672 = vmatprep.subr.mxu0 0.0
    %1673 = vmatpush2.msra.mxu0 0.0
    %1674 = vmatprep.subr.mxu0 0.0
    %1675 = vmatpush2.msra.mxu0 0.0
    %1676 = vmatprep.subr.mxu0 0.0
    %1677 = vmatpush2.msra.mxu0 0.0
    %1678 = vmatprep.subr.mxu0 0.0
    %1679 = vmatpush2.msra.mxu0 0.0
    %1680 = vmatprep.subr.mxu0 0.0
    %1681 = vmatpush2.msra.mxu0 0.0
    %1682 = vmatprep.subr.mxu0 0.0
    %1683 = vmatpush2.msra.mxu0 0.0
    %1684 = vmatprep.subr.mxu0 0.0
    %1685 = vmatpush2.msra.mxu0 0.0
    %1686 = vmatprep.subr.mxu0 0.0
    %1687 = vmatpush2.msra.mxu0 0.0
    %1688 = vmatprep.subr.mxu0 0.0
    %1689 = vmatpush2.msra.mxu0 0.0
    %1690 = vmatprep.subr.mxu0 0.0
    %1691 = vmatpush2.msra.mxu0 0.0
    %1692 = vmatprep.subr.mxu0 0.0
    %1693 = vmatpush2.msra.mxu0 0.0
    %1694 = vmatprep.subr.mxu0 0.0
    %1695 = vmatpush2.msra.mxu0 0.0
    %1696 = vmatprep.subr.mxu0 0.0
    %1697 = vmatpush2.msra.mxu0 0.0
    %1698 = vmatprep.subr.mxu0 0.0
    %1699 = vmatpush2.msra.mxu0 0.0
    %1700 = vmatprep.mubr.f32.mxu0 0.0
    %1701 = vmatmul.mubr.f32.gmra.mxu0 %v1471
    %v1702 = vpop.f32.mrf.mxu0
    %v1703 = vadd.f32 0.0, %v1702
    %v1704 = vpop.f32.mrf.mxu0
    %1705 = vmatprep.mubr.f32.mxu0 0.0
    %1706 = vmatmul.mubr.f32.gmra.mxu0 %v1474
    %v1707 = vpop.f32.mrf.mxu0
    %v1708 = vadd.f32 0.0, %v1707
    %v1709 = vpop.f32.mrf.mxu0
    %1710 = vdwg.mxu0
    %1711 = vmatprep.subr.mxu0 0.0
    %1712 = vmatpush1.msra.mxu0 0.0
    %1713 = vmatprep.subr.mxu0 0.0
    %1714 = vmatpush1.msra.mxu0 0.0
    %1715 = vmatprep.subr.mxu0 0.0
    %1716 = vmatpush1.msra.mxu0 0.0
    %1717 = vmatprep.subr.mxu0 0.0
    %1718 = vmatpush1.msra.mxu0 0.0
    %1719 = vmatprep.subr.mxu0 0.0
    %1720 = vmatpush1.msra.mxu0 0.0
    %1721 = vmatprep.subr.mxu0 0.0
    %1722 = vmatpush1.msra.mxu0 0.0
    %1723 = vmatprep.subr.mxu0 0.0
    %1724 = vmatpush1.msra.mxu0 0.0
    %1725 = vmatprep.subr.mxu0 0.0
    %1726 = vmatpush1.msra.mxu0 0.0
    %1727 = vmatprep.subr.mxu0 0.0
    %1728 = vmatpush1.msra.mxu0 0.0
    %1729 = vmatprep.subr.mxu0 0.0
    %1730 = vmatpush1.msra.mxu0 0.0
    %1731 = vmatprep.subr.mxu0 0.0
    %1732 = vmatpush1.msra.mxu0 0.0
    %1733 = vmatprep.subr.mxu0 0.0
    %1734 = vmatpush1.msra.mxu0 0.0
    %1735 = vmatprep.subr.mxu0 0.0
    %1736 = vmatpush1.msra.mxu0 0.0
    %1737 = vmatprep.subr.mxu0 0.0
    %1738 = vmatpush1.msra.mxu0 0.0
    %1739 = vmatprep.subr.mxu0 0.0
    %1740 = vmatpush1.msra.mxu0 %v1467
    %1741 = vmatprep.subr.mxu0 0.0
    %1742 = vmatpush1.msra.mxu0 %v1462
    %1743 = vmatprep.subr.mxu0 0.0
    %1744 = vmatpush2.msra.mxu0 0.0
    %1745 = vmatprep.subr.mxu0 0.0
    %1746 = vmatpush2.msra.mxu0 0.0
    %1747 = vmatprep.subr.mxu0 0.0
    %1748 = vmatpush2.msra.mxu0 0.0
    %1749 = vmatprep.subr.mxu0 0.0
    %1750 = vmatpush2.msra.mxu0 0.0
    %1751 = vmatprep.subr.mxu0 0.0
    %1752 = vmatpush2.msra.mxu0 0.0
    %1753 = vmatprep.subr.mxu0 0.0
    %1754 = vmatpush2.msra.mxu0 0.0
    %1755 = vmatprep.subr.mxu0 0.0
    %1756 = vmatpush2.msra.mxu0 0.0
    %1757 = vmatprep.subr.mxu0 0.0
    %1758 = vmatpush2.msra.mxu0 0.0
    %1759 = vmatprep.subr.mxu0 0.0
    %1760 = vmatpush2.msra.mxu0 0.0
    %1761 = vmatprep.subr.mxu0 0.0
    %1762 = vmatpush2.msra.mxu0 0.0
    %1763 = vmatprep.subr.mxu0 0.0
    %1764 = vmatpush2.msra.mxu0 0.0
    %1765 = vmatprep.subr.mxu0 0.0
    %1766 = vmatpush2.msra.mxu0 0.0
    %1767 = vmatprep.subr.mxu0 0.0
    %1768 = vmatpush2.msra.mxu0 0.0
    %1769 = vmatprep.subr.mxu0 0.0
    %1770 = vmatpush2.msra.mxu0 0.0
    %1771 = vmatprep.subr.mxu0 0.0
    %1772 = vmatpush2.msra.mxu0 0.0
    %1773 = vmatprep.subr.mxu0 0.0
    %1774 = vmatpush2.msra.mxu0 0.0
    %1775 = vmatprep.mubr.f32.mxu0 0.0
    %1776 = vmatmul.mubr.f32.gmra.mxu0 %v1390
    %v1777 = vpop.f32.mrf.mxu0
    %v1778 = vadd.f32 %v1703, %v1777
    %v1779 = vpop.f32.mrf.mxu0
    %1780 = vmatprep.mubr.f32.mxu0 0.0
    %1781 = vmatmul.mubr.f32.gmra.mxu0 %v1393
    %v1782 = vpop.f32.mrf.mxu0
    %v1783 = vadd.f32 %v1708, %v1782
    %v1784 = vpop.f32.mrf.mxu0
    %1785 = vdwg.mxu0
    %v1786 = vmul.f32 %v1778, 0.5
    %v1787 = vmul.f32 %v1783, 0.5
    %1788 = vmatprep.subr.mxu0 0.0
    %1789 = vmatpush1.msra.mxu0 0.0
    %1790 = vmatprep.subr.mxu0 0.0
    %1791 = vmatpush1.msra.mxu0 0.0
    %1792 = vmatprep.subr.mxu0 0.0
    %1793 = vmatpush1.msra.mxu0 0.0
    %1794 = vmatprep.subr.mxu0 0.0
    %1795 = vmatpush1.msra.mxu0 0.0
    %1796 = vmatprep.subr.mxu0 0.0
    %1797 = vmatpush1.msra.mxu0 0.0
    %1798 = vmatprep.subr.mxu0 0.0
    %1799 = vmatpush1.msra.mxu0 0.0
    %1800 = vmatprep.subr.mxu0 0.0
    %1801 = vmatpush1.msra.mxu0 0.0
    %1802 = vmatprep.subr.mxu0 0.0
    %1803 = vmatpush1.msra.mxu0 0.0
    %1804 = vmatprep.subr.mxu0 0.0
    %1805 = vmatpush1.msra.mxu0 0.0
    %1806 = vmatprep.subr.mxu0 0.0
    %1807 = vmatpush1.msra.mxu0 0.0
    %1808 = vmatprep.subr.mxu0 0.0
    %1809 = vmatpush1.msra.mxu0 0.0
    %1810 = vmatprep.subr.mxu0 0.0
    %1811 = vmatpush1.msra.mxu0 0.0
    %1812 = vmatprep.subr.mxu0 0.0
    %1813 = vmatpush1.msra.mxu0 0.0
    %1814 = vmatprep.subr.mxu0 0.0
    %1815 = vmatpush1.msra.mxu0 0.0
    %1816 = vmatprep.subr.mxu0 0.0
    %1817 = vmatpush1.msra.mxu0 %v1548
    %1818 = vmatprep.subr.mxu0 0.0
    %1819 = vmatpush1.msra.mxu0 %v1543
    %1820 = vmatprep.subr.mxu0 0.0
    %1821 = vmatpush2.msra.mxu0 0.0
    %1822 = vmatprep.subr.mxu0 0.0
    %1823 = vmatpush2.msra.mxu0 0.0
    %1824 = vmatprep.subr.mxu0 0.0
    %1825 = vmatpush2.msra.mxu0 0.0
    %1826 = vmatprep.subr.mxu0 0.0
    %1827 = vmatpush2.msra.mxu0 0.0
    %1828 = vmatprep.subr.mxu0 0.0
    %1829 = vmatpush2.msra.mxu0 0.0
    %1830 = vmatprep.subr.mxu0 0.0
    %1831 = vmatpush2.msra.mxu0 0.0
    %1832 = vmatprep.subr.mxu0 0.0
    %1833 = vmatpush2.msra.mxu0 0.0
    %1834 = vmatprep.subr.mxu0 0.0
    %1835 = vmatpush2.msra.mxu0 0.0
    %1836 = vmatprep.subr.mxu0 0.0
    %1837 = vmatpush2.msra.mxu0 0.0
    %1838 = vmatprep.subr.mxu0 0.0
    %1839 = vmatpush2.msra.mxu0 0.0
    %1840 = vmatprep.subr.mxu0 0.0
    %1841 = vmatpush2.msra.mxu0 0.0
    %1842 = vmatprep.subr.mxu0 0.0
    %1843 = vmatpush2.msra.mxu0 0.0
    %1844 = vmatprep.subr.mxu0 0.0
    %1845 = vmatpush2.msra.mxu0 0.0
    %1846 = vmatprep.subr.mxu0 0.0
    %1847 = vmatpush2.msra.mxu0 0.0
    %1848 = vmatprep.subr.mxu0 0.0
    %1849 = vmatpush2.msra.mxu0 0.0
    %1850 = vmatprep.subr.mxu0 0.0
    %1851 = vmatpush2.msra.mxu0 0.0
    %1852 = vmatprep.mubr.f32.mxu0 0.0
    %1853 = vmatmul.mubr.f32.gmra.mxu0 %v1390
    %v1854 = vpop.f32.mrf.mxu0
    %v1855 = vadd.f32 0.0, %v1854
    %v1856 = vpop.f32.mrf.mxu0
    %1857 = vmatprep.mubr.f32.mxu0 0.0
    %1858 = vmatmul.mubr.f32.gmra.mxu0 %v1393
    %v1859 = vpop.f32.mrf.mxu0
    %v1860 = vadd.f32 0.0, %v1859
    %v1861 = vpop.f32.mrf.mxu0
    %1862 = vdwg.mxu0
    %1863 = vmatprep.subr.mxu0 0.0
    %1864 = vmatpush1.msra.mxu0 0.0
    %1865 = vmatprep.subr.mxu0 0.0
    %1866 = vmatpush1.msra.mxu0 0.0
    %1867 = vmatprep.subr.mxu0 0.0
    %1868 = vmatpush1.msra.mxu0 0.0
    %1869 = vmatprep.subr.mxu0 0.0
    %1870 = vmatpush1.msra.mxu0 0.0
    %1871 = vmatprep.subr.mxu0 0.0
    %1872 = vmatpush1.msra.mxu0 0.0
    %1873 = vmatprep.subr.mxu0 0.0
    %1874 = vmatpush1.msra.mxu0 0.0
    %1875 = vmatprep.subr.mxu0 0.0
    %1876 = vmatpush1.msra.mxu0 0.0
    %1877 = vmatprep.subr.mxu0 0.0
    %1878 = vmatpush1.msra.mxu0 0.0
    %1879 = vmatprep.subr.mxu0 0.0
    %1880 = vmatpush1.msra.mxu0 0.0
    %1881 = vmatprep.subr.mxu0 0.0
    %1882 = vmatpush1.msra.mxu0 0.0
    %1883 = vmatprep.subr.mxu0 0.0
    %1884 = vmatpush1.msra.mxu0 0.0
    %1885 = vmatprep.subr.mxu0 0.0
    %1886 = vmatpush1.msra.mxu0 0.0
    %1887 = vmatprep.subr.mxu0 0.0
    %1888 = vmatpush1.msra.mxu0 0.0
    %1889 = vmatprep.subr.mxu0 0.0
    %1890 = vmatpush1.msra.mxu0 0.0
    %1891 = vmatprep.subr.mxu0 0.0
    %1892 = vmatpush1.msra.mxu0 %v1467
    %1893 = vmatprep.subr.mxu0 0.0
    %1894 = vmatpush1.msra.mxu0 %v1462
    %1895 = vmatprep.subr.mxu0 0.0
    %1896 = vmatpush2.msra.mxu0 0.0
    %1897 = vmatprep.subr.mxu0 0.0
    %1898 = vmatpush2.msra.mxu0 0.0
    %1899 = vmatprep.subr.mxu0 0.0
    %1900 = vmatpush2.msra.mxu0 0.0
    %1901 = vmatprep.subr.mxu0 0.0
    %1902 = vmatpush2.msra.mxu0 0.0
    %1903 = vmatprep.subr.mxu0 0.0
    %1904 = vmatpush2.msra.mxu0 0.0
    %1905 = vmatprep.subr.mxu0 0.0
    %1906 = vmatpush2.msra.mxu0 0.0
    %1907 = vmatprep.subr.mxu0 0.0
    %1908 = vmatpush2.msra.mxu0 0.0
    %1909 = vmatprep.subr.mxu0 0.0
    %1910 = vmatpush2.msra.mxu0 0.0
    %1911 = vmatprep.subr.mxu0 0.0
    %1912 = vmatpush2.msra.mxu0 0.0
    %1913 = vmatprep.subr.mxu0 0.0
    %1914 = vmatpush2.msra.mxu0 0.0
    %1915 = vmatprep.subr.mxu0 0.0
    %1916 = vmatpush2.msra.mxu0 0.0
    %1917 = vmatprep.subr.mxu0 0.0
    %1918 = vmatpush2.msra.mxu0 0.0
    %1919 = vmatprep.subr.mxu0 0.0
    %1920 = vmatpush2.msra.mxu0 0.0
    %1921 = vmatprep.subr.mxu0 0.0
    %1922 = vmatpush2.msra.mxu0 0.0
    %1923 = vmatprep.subr.mxu0 0.0
    %1924 = vmatpush2.msra.mxu0 0.0
    %1925 = vmatprep.subr.mxu0 0.0
    %1926 = vmatpush2.msra.mxu0 0.0
    %1927 = vmatprep.mubr.f32.mxu0 0.0
    %1928 = vmatmul.mubr.f32.gmra.mxu0 %v1471
    %v1929 = vpop.f32.mrf.mxu0
    %v1930 = vadd.f32 %v1855, %v1929
    %v1931 = vpop.f32.mrf.mxu0
    %1932 = vmatprep.mubr.f32.mxu0 0.0
    %1933 = vmatmul.mubr.f32.gmra.mxu0 %v1474
    %v1934 = vpop.f32.mrf.mxu0
    %v1935 = vadd.f32 %v1860, %v1934
    %v1936 = vpop.f32.mrf.mxu0
    %1937 = vdwg.mxu0
    %v1938 = vmul.f32 %v1930, 0.5
    %v1939 = vmul.f32 %v1935, 0.5
    %1940 = vmatprep.subr.mxu0 0.0
    %1941 = vmatpush1.msra.mxu0 0.0
    %1942 = vmatprep.subr.mxu0 0.0
    %1943 = vmatpush1.msra.mxu0 0.0
    %1944 = vmatprep.subr.mxu0 0.0
    %1945 = vmatpush1.msra.mxu0 0.0
    %1946 = vmatprep.subr.mxu0 0.0
    %1947 = vmatpush1.msra.mxu0 0.0
    %1948 = vmatprep.subr.mxu0 0.0
    %1949 = vmatpush1.msra.mxu0 0.0
    %1950 = vmatprep.subr.mxu0 0.0
    %1951 = vmatpush1.msra.mxu0 0.0
    %1952 = vmatprep.subr.mxu0 0.0
    %1953 = vmatpush1.msra.mxu0 0.0
    %1954 = vmatprep.subr.mxu0 0.0
    %1955 = vmatpush1.msra.mxu0 0.0
    %1956 = vmatprep.subr.mxu0 0.0
    %1957 = vmatpush1.msra.mxu0 0.0
    %1958 = vmatprep.subr.mxu0 0.0
    %1959 = vmatpush1.msra.mxu0 0.0
    %1960 = vmatprep.subr.mxu0 0.0
    %1961 = vmatpush1.msra.mxu0 0.0
    %1962 = vmatprep.subr.mxu0 0.0
    %1963 = vmatpush1.msra.mxu0 0.0
    %1964 = vmatprep.subr.mxu0 0.0
    %1965 = vmatpush1.msra.mxu0 0.0
    %1966 = vmatprep.subr.mxu0 0.0
    %1967 = vmatpush1.msra.mxu0 0.0
    %1968 = vmatprep.subr.mxu0 0.0
    %1969 = vmatpush1.msra.mxu0 %v1635
    %1970 = vmatprep.subr.mxu0 0.0
    %1971 = vmatpush1.msra.mxu0 %v1634
    %1972 = vmatprep.subr.mxu0 0.0
    %1973 = vmatpush2.msra.mxu0 0.0
    %1974 = vmatprep.subr.mxu0 0.0
    %1975 = vmatpush2.msra.mxu0 0.0
    %1976 = vmatprep.subr.mxu0 0.0
    %1977 = vmatpush2.msra.mxu0 0.0
    %1978 = vmatprep.subr.mxu0 0.0
    %1979 = vmatpush2.msra.mxu0 0.0
    %1980 = vmatprep.subr.mxu0 0.0
    %1981 = vmatpush2.msra.mxu0 0.0
    %1982 = vmatprep.subr.mxu0 0.0
    %1983 = vmatpush2.msra.mxu0 0.0
    %1984 = vmatprep.subr.mxu0 0.0
    %1985 = vmatpush2.msra.mxu0 0.0
    %1986 = vmatprep.subr.mxu0 0.0
    %1987 = vmatpush2.msra.mxu0 0.0
    %1988 = vmatprep.subr.mxu0 0.0
    %1989 = vmatpush2.msra.mxu0 0.0
    %1990 = vmatprep.subr.mxu0 0.0
    %1991 = vmatpush2.msra.mxu0 0.0
    %1992 = vmatprep.subr.mxu0 0.0
    %1993 = vmatpush2.msra.mxu0 0.0
    %1994 = vmatprep.subr.mxu0 0.0
    %1995 = vmatpush2.msra.mxu0 0.0
    %1996 = vmatprep.subr.mxu0 0.0
    %1997 = vmatpush2.msra.mxu0 0.0
    %1998 = vmatprep.subr.mxu0 0.0
    %1999 = vmatpush2.msra.mxu0 0.0
    %2000 = vmatprep.subr.mxu0 0.0
    %2001 = vmatpush2.msra.mxu0 0.0
    %2002 = vmatprep.subr.mxu0 0.0
    %2003 = vmatpush2.msra.mxu0 0.0
    %2004 = vmatprep.mubr.f32.mxu0 0.0
    %2005 = vmatmul.mubr.f32.gmra.mxu0 %v1552
    %v2006 = vpop.f32.mrf.mxu0
    %v2007 = vadd.f32 0.0, %v2006
    %v2008 = vpop.f32.mrf.mxu0
    %2009 = vmatprep.mubr.f32.mxu0 0.0
    %2010 = vmatmul.mubr.f32.gmra.mxu0 %v1555
    %v2011 = vpop.f32.mrf.mxu0
    %v2012 = vadd.f32 0.0, %v2011
    %v2013 = vpop.f32.mrf.mxu0
    %2014 = vdwg.mxu0
    %v2016 = vsel %vm349, %v1387, 0
    %v2019 = vsel %vm349, %v1388, 0
    %2021 = vmatprep.subr.mxu0 0.0
    %2022 = vmatpush1.msra.mxu0 0.0
    %2023 = vmatprep.subr.mxu0 0.0
    %2024 = vmatpush1.msra.mxu0 0.0
    %2025 = vmatprep.subr.mxu0 0.0
    %2026 = vmatpush1.msra.mxu0 0.0
    %2027 = vmatprep.subr.mxu0 0.0
    %2028 = vmatpush1.msra.mxu0 0.0
    %2029 = vmatprep.subr.mxu0 0.0
    %2030 = vmatpush1.msra.mxu0 0.0
    %2031 = vmatprep.subr.mxu0 0.0
    %2032 = vmatpush1.msra.mxu0 0.0
    %2033 = vmatprep.subr.mxu0 0.0
    %2034 = vmatpush1.msra.mxu0 0.0
    %2035 = vmatprep.subr.mxu0 0.0
    %2036 = vmatpush1.msra.mxu0 0.0
    %2037 = vmatprep.subr.mxu0 0.0
    %2038 = vmatpush1.msra.mxu0 0.0
    %2039 = vmatprep.subr.mxu0 0.0
    %2040 = vmatpush1.msra.mxu0 0.0
    %2041 = vmatprep.subr.mxu0 0.0
    %2042 = vmatpush1.msra.mxu0 0.0
    %2043 = vmatprep.subr.mxu0 0.0
    %2044 = vmatpush1.msra.mxu0 0.0
    %2045 = vmatprep.subr.mxu0 0.0
    %2046 = vmatpush1.msra.mxu0 0.0
    %2047 = vmatprep.subr.mxu0 0.0
    %2048 = vmatpush1.msra.mxu0 0.0
    %2049 = vmatprep.subr.mxu0 0.0
    %2050 = vmatpush1.msra.mxu0 %v1629
    %2051 = vmatprep.subr.mxu0 0.0
    %2052 = vmatpush1.msra.mxu0 %v1624
    %2053 = vmatprep.subr.mxu0 0.0
    %2054 = vmatpush2.msra.mxu0 0.0
    %2055 = vmatprep.subr.mxu0 0.0
    %2056 = vmatpush2.msra.mxu0 0.0
    %2057 = vmatprep.subr.mxu0 0.0
    %2058 = vmatpush2.msra.mxu0 0.0
    %2059 = vmatprep.subr.mxu0 0.0
    %2060 = vmatpush2.msra.mxu0 0.0
    %2061 = vmatprep.subr.mxu0 0.0
    %2062 = vmatpush2.msra.mxu0 0.0
    %2063 = vmatprep.subr.mxu0 0.0
    %2064 = vmatpush2.msra.mxu0 0.0
    %2065 = vmatprep.subr.mxu0 0.0
    %2066 = vmatpush2.msra.mxu0 0.0
    %2067 = vmatprep.subr.mxu0 0.0
    %2068 = vmatpush2.msra.mxu0 0.0
    %2069 = vmatprep.subr.mxu0 0.0
    %2070 = vmatpush2.msra.mxu0 0.0
    %2071 = vmatprep.subr.mxu0 0.0
    %2072 = vmatpush2.msra.mxu0 0.0
    %2073 = vmatprep.subr.mxu0 0.0
    %2074 = vmatpush2.msra.mxu0 0.0
    %2075 = vmatprep.subr.mxu0 0.0
    %2076 = vmatpush2.msra.mxu0 0.0
    %2077 = vmatprep.subr.mxu0 0.0
    %2078 = vmatpush2.msra.mxu0 0.0
    %2079 = vmatprep.subr.mxu0 0.0
    %2080 = vmatpush2.msra.mxu0 0.0
    %2081 = vmatprep.subr.mxu0 0.0
    %2082 = vmatpush2.msra.mxu0 0.0
    %2083 = vmatprep.subr.mxu0 0.0
    %2084 = vmatpush2.msra.mxu0 0.0
    %2085 = vmatprep.mubr.f32.mxu0 0.0
    %2086 = vmatmul.mubr.f32.gmra.mxu0 %v2016
    %v2087 = vpop.f32.mrf.mxu0
    %v2088 = vadd.f32 %v2007, %v2087
    %v2089 = vpop.f32.mrf.mxu0
    %2090 = vmatprep.mubr.f32.mxu0 0.0
    %2091 = vmatmul.mubr.f32.gmra.mxu0 %v2019
    %v2092 = vpop.f32.mrf.mxu0
    %v2093 = vadd.f32 %v2012, %v2092
    %v2094 = vpop.f32.mrf.mxu0
    %2095 = vdwg.mxu0
    %v2096 = vmul.f32 %v2088, 0.2
    %v2097 = vmul.f32 %v2093, 0.2
    %v2098 = vadd.f32 %v1786, %v1938
    %v2099 = vadd.f32 %v1787, %v1939
    %v2100 = vadd.f32 %v2098, %v2096
    %v2101 = vadd.f32 %v2099, %v2097
    %v2102 = vmul.f32 %v2100, 0.33333334
    %v2103 = vmul.f32 %v2101, 0.33333334
    %2104 = vmatprep.subr.mxu0 0.0
    %2105 = vmatpush1.msra.mxu0 0.0
    %2106 = vmatprep.subr.mxu0 0.0
    %2107 = vmatpush1.msra.mxu0 0.0
    %2108 = vmatprep.subr.mxu0 0.0
    %2109 = vmatpush1.msra.mxu0 0.0
    %2110 = vmatprep.subr.mxu0 0.0
    %2111 = vmatpush1.msra.mxu0 0.0
    %2112 = vmatprep.subr.mxu0 0.0
    %2113 = vmatpush1.msra.mxu0 0.0
    %2114 = vmatprep.subr.mxu0 0.0
    %2115 = vmatpush1.msra.mxu0 0.0
    %2116 = vmatprep.subr.mxu0 0.0
    %2117 = vmatpush1.msra.mxu0 0.0
    %2118 = vmatprep.subr.mxu0 0.0
    %2119 = vmatpush1.msra.mxu0 0.0
    %2120 = vmatprep.subr.mxu0 0.0
    %2121 = vmatpush1.msra.mxu0 0.0
    %2122 = vmatprep.subr.mxu0 0.0
    %2123 = vmatpush1.msra.mxu0 0.0
    %2124 = vmatprep.subr.mxu0 0.0
    %2125 = vmatpush1.msra.mxu0 0.0
    %2126 = vmatprep.subr.mxu0 0.0
    %2127 = vmatpush1.msra.mxu0 0.0
    %2128 = vmatprep.subr.mxu0 0.0
    %2129 = vmatpush1.msra.mxu0 0.0
    %2130 = vmatprep.subr.mxu0 0.0
    %2131 = vmatpush1.msra.mxu0 0.0
    %2132 = vmatprep.subr.mxu0 0.0
    %2133 = vmatpush1.msra.mxu0 %v2103
    %2134 = vmatprep.subr.mxu0 0.0
    %2135 = vmatpush1.msra.mxu0 %v2102
    %2136 = vmatprep.subr.mxu0 0.0
    %2137 = vmatpush2.msra.mxu0 0.0
    %2138 = vmatprep.subr.mxu0 0.0
    %2139 = vmatpush2.msra.mxu0 0.0
    %2140 = vmatprep.subr.mxu0 0.0
    %2141 = vmatpush2.msra.mxu0 0.0
    %2142 = vmatprep.subr.mxu0 0.0
    %2143 = vmatpush2.msra.mxu0 0.0
    %2144 = vmatprep.subr.mxu0 0.0
    %2145 = vmatpush2.msra.mxu0 0.0
    %2146 = vmatprep.subr.mxu0 0.0
    %2147 = vmatpush2.msra.mxu0 0.0
    %2148 = vmatprep.subr.mxu0 0.0
    %2149 = vmatpush2.msra.mxu0 0.0
    %2150 = vmatprep.subr.mxu0 0.0
    %2151 = vmatpush2.msra.mxu0 0.0
    %2152 = vmatprep.subr.mxu0 0.0
    %2153 = vmatpush2.msra.mxu0 0.0
    %2154 = vmatprep.subr.mxu0 0.0
    %2155 = vmatpush2.msra.mxu0 0.0
    %2156 = vmatprep.subr.mxu0 0.0
    %2157 = vmatpush2.msra.mxu0 0.0
    %2158 = vmatprep.subr.mxu0 0.0
    %2159 = vmatpush2.msra.mxu0 0.0
    %2160 = vmatprep.subr.mxu0 0.0
    %2161 = vmatpush2.msra.mxu0 0.0
    %2162 = vmatprep.subr.mxu0 0.0
    %2163 = vmatpush2.msra.mxu0 0.0
    %2164 = vmatprep.subr.mxu0 0.0
    %2165 = vmatpush2.msra.mxu0 0.0
    %2166 = vmatprep.subr.mxu0 0.0
    %2167 = vmatpush2.msra.mxu0 0.0
    %2168 = vmatprep.mubr.f32.mxu0 0.0
    %2169 = vmatmul.mubr.f32.gmra.mxu0 %v1390
    %v2170 = vpop.f32.mrf.mxu0
    %v2171 = vadd.f32 0.0, %v2170
    %v2172 = vpop.f32.mrf.mxu0
    %2173 = vmatprep.mubr.f32.mxu0 0.0
    %2174 = vmatmul.mubr.f32.gmra.mxu0 %v1393
    %v2175 = vpop.f32.mrf.mxu0
    %v2176 = vadd.f32 0.0, %v2175
    %v2177 = vpop.f32.mrf.mxu0
    %2178 = vdwg.mxu0
    %2179 = vmatprep.subr.mxu0 0.0
    %2180 = vmatpush1.msra.mxu0 0.0
    %2181 = vmatprep.subr.mxu0 0.0
    %2182 = vmatpush1.msra.mxu0 0.0
    %2183 = vmatprep.subr.mxu0 0.0
    %2184 = vmatpush1.msra.mxu0 0.0
    %2185 = vmatprep.subr.mxu0 0.0
    %2186 = vmatpush1.msra.mxu0 0.0
    %2187 = vmatprep.subr.mxu0 0.0
    %2188 = vmatpush1.msra.mxu0 0.0
    %2189 = vmatprep.subr.mxu0 0.0
    %2190 = vmatpush1.msra.mxu0 0.0
    %2191 = vmatprep.subr.mxu0 0.0
    %2192 = vmatpush1.msra.mxu0 0.0
    %2193 = vmatprep.subr.mxu0 0.0
    %2194 = vmatpush1.msra.mxu0 0.0
    %2195 = vmatprep.subr.mxu0 0.0
    %2196 = vmatpush1.msra.mxu0 0.0
    %2197 = vmatprep.subr.mxu0 0.0
    %2198 = vmatpush1.msra.mxu0 0.0
    %2199 = vmatprep.subr.mxu0 0.0
    %2200 = vmatpush1.msra.mxu0 0.0
    %2201 = vmatprep.subr.mxu0 0.0
    %2202 = vmatpush1.msra.mxu0 0.0
    %2203 = vmatprep.subr.mxu0 0.0
    %2204 = vmatpush1.msra.mxu0 0.0
    %2205 = vmatprep.subr.mxu0 0.0
    %2206 = vmatpush1.msra.mxu0 0.0
    %2207 = vmatprep.subr.mxu0 0.0
    %2208 = vmatpush1.msra.mxu0 %v2103
    %2209 = vmatprep.subr.mxu0 0.0
    %2210 = vmatpush1.msra.mxu0 %v2102
    %2211 = vmatprep.subr.mxu0 0.0
    %2212 = vmatpush2.msra.mxu0 0.0
    %2213 = vmatprep.subr.mxu0 0.0
    %2214 = vmatpush2.msra.mxu0 0.0
    %2215 = vmatprep.subr.mxu0 0.0
    %2216 = vmatpush2.msra.mxu0 0.0
    %2217 = vmatprep.subr.mxu0 0.0
    %2218 = vmatpush2.msra.mxu0 0.0
    %2219 = vmatprep.subr.mxu0 0.0
    %2220 = vmatpush2.msra.mxu0 0.0
    %2221 = vmatprep.subr.mxu0 0.0
    %2222 = vmatpush2.msra.mxu0 0.0
    %2223 = vmatprep.subr.mxu0 0.0
    %2224 = vmatpush2.msra.mxu0 0.0
    %2225 = vmatprep.subr.mxu0 0.0
    %2226 = vmatpush2.msra.mxu0 0.0
    %2227 = vmatprep.subr.mxu0 0.0
    %2228 = vmatpush2.msra.mxu0 0.0
    %2229 = vmatprep.subr.mxu0 0.0
    %2230 = vmatpush2.msra.mxu0 0.0
    %2231 = vmatprep.subr.mxu0 0.0
    %2232 = vmatpush2.msra.mxu0 0.0
    %2233 = vmatprep.subr.mxu0 0.0
    %2234 = vmatpush2.msra.mxu0 0.0
    %2235 = vmatprep.subr.mxu0 0.0
    %2236 = vmatpush2.msra.mxu0 0.0
    %2237 = vmatprep.subr.mxu0 0.0
    %2238 = vmatpush2.msra.mxu0 0.0
    %2239 = vmatprep.subr.mxu0 0.0
    %2240 = vmatpush2.msra.mxu0 0.0
    %2241 = vmatprep.subr.mxu0 0.0
    %2242 = vmatpush2.msra.mxu0 0.0
    %2243 = vmatprep.mubr.f32.mxu0 0.0
    %2244 = vmatmul.mubr.f32.gmra.mxu0 %v1471
    %v2245 = vpop.f32.mrf.mxu0
    %v2246 = vadd.f32 0.0, %v2245
    %v2247 = vpop.f32.mrf.mxu0
    %2248 = vmatprep.mubr.f32.mxu0 0.0
    %2249 = vmatmul.mubr.f32.gmra.mxu0 %v1474
    %v2250 = vpop.f32.mrf.mxu0
    %v2251 = vadd.f32 0.0, %v2250
    %v2252 = vpop.f32.mrf.mxu0
    %2253 = vdwg.mxu0
    %2254 = vmatprep.subr.mxu0 0.0
    %2255 = vmatpush1.msra.mxu0 0.0
    %2256 = vmatprep.subr.mxu0 0.0
    %2257 = vmatpush1.msra.mxu0 0.0
    %2258 = vmatprep.subr.mxu0 0.0
    %2259 = vmatpush1.msra.mxu0 0.0
    %2260 = vmatprep.subr.mxu0 0.0
    %2261 = vmatpush1.msra.mxu0 0.0
    %2262 = vmatprep.subr.mxu0 0.0
    %2263 = vmatpush1.msra.mxu0 0.0
    %2264 = vmatprep.subr.mxu0 0.0
    %2265 = vmatpush1.msra.mxu0 0.0
    %2266 = vmatprep.subr.mxu0 0.0
    %2267 = vmatpush1.msra.mxu0 0.0
    %2268 = vmatprep.subr.mxu0 0.0
    %2269 = vmatpush1.msra.mxu0 0.0
    %2270 = vmatprep.subr.mxu0 0.0
    %2271 = vmatpush1.msra.mxu0 0.0
    %2272 = vmatprep.subr.mxu0 0.0
    %2273 = vmatpush1.msra.mxu0 0.0
    %2274 = vmatprep.subr.mxu0 0.0
    %2275 = vmatpush1.msra.mxu0 0.0
    %2276 = vmatprep.subr.mxu0 0.0
    %2277 = vmatpush1.msra.mxu0 0.0
    %2278 = vmatprep.subr.mxu0 0.0
    %2279 = vmatpush1.msra.mxu0 0.0
    %2280 = vmatprep.subr.mxu0 0.0
    %2281 = vmatpush1.msra.mxu0 0.0
    %2282 = vmatprep.subr.mxu0 0.0
    %2283 = vmatpush1.msra.mxu0 %v2103
    %2284 = vmatprep.subr.mxu0 0.0
    %2285 = vmatpush1.msra.mxu0 %v2102
    %2286 = vmatprep.subr.mxu0 0.0
    %2287 = vmatpush2.msra.mxu0 0.0
    %2288 = vmatprep.subr.mxu0 0.0
    %2289 = vmatpush2.msra.mxu0 0.0
    %2290 = vmatprep.subr.mxu0 0.0
    %2291 = vmatpush2.msra.mxu0 0.0
    %2292 = vmatprep.subr.mxu0 0.0
    %2293 = vmatpush2.msra.mxu0 0.0
    %2294 = vmatprep.subr.mxu0 0.0
    %2295 = vmatpush2.msra.mxu0 0.0
    %2296 = vmatprep.subr.mxu0 0.0
    %2297 = vmatpush2.msra.mxu0 0.0
    %2298 = vmatprep.subr.mxu0 0.0
    %2299 = vmatpush2.msra.mxu0 0.0
    %2300 = vmatprep.subr.mxu0 0.0
    %2301 = vmatpush2.msra.mxu0 0.0
    %2302 = vmatprep.subr.mxu0 0.0
    %2303 = vmatpush2.msra.mxu0 0.0
    %2304 = vmatprep.subr.mxu0 0.0
    %2305 = vmatpush2.msra.mxu0 0.0
    %2306 = vmatprep.subr.mxu0 0.0
    %2307 = vmatpush2.msra.mxu0 0.0
    %2308 = vmatprep.subr.mxu0 0.0
    %2309 = vmatpush2.msra.mxu0 0.0
    %2310 = vmatprep.subr.mxu0 0.0
    %2311 = vmatpush2.msra.mxu0 0.0
    %2312 = vmatprep.subr.mxu0 0.0
    %2313 = vmatpush2.msra.mxu0 0.0
    %2314 = vmatprep.subr.mxu0 0.0
    %2315 = vmatpush2.msra.mxu0 0.0
    %2316 = vmatprep.subr.mxu0 0.0
    %2317 = vmatpush2.msra.mxu0 0.0
    %2318 = vmatprep.mubr.f32.mxu0 0.0
    %2319 = vmatmul.mubr.f32.gmra.mxu0 %v1552
    %v2320 = vpop.f32.mrf.mxu0
    %v2321 = vadd.f32 0.0, %v2320
    %v2322 = vpop.f32.mrf.mxu0
    %2323 = vmatprep.mubr.f32.mxu0 0.0
    %2324 = vmatmul.mubr.f32.gmra.mxu0 %v1555
    %v2325 = vpop.f32.mrf.mxu0
    %v2326 = vadd.f32 0.0, %v2325
    %v2327 = vpop.f32.mrf.mxu0
    %2328 = vdwg.mxu0
    %v2329 = vadd.f32 %v2171, %v2246
    %v2330 = vadd.f32 %v2176, %v2251
    %v2331 = vadd.f32 %v2329, %v2321
    %v2332 = vadd.f32 %v2330, %v2326
    %2333 = vmatprep.subr.mxu0 0.0
    %2334 = vmatpush1.msra.mxu0 0.0
    %2335 = vmatprep.subr.mxu0 0.0
    %2336 = vmatpush1.msra.mxu0 0.0
    %2337 = vmatprep.subr.mxu0 0.0
    %2338 = vmatpush1.msra.mxu0 0.0
    %2339 = vmatprep.subr.mxu0 0.0
    %2340 = vmatpush1.msra.mxu0 0.0
    %2341 = vmatprep.subr.mxu0 0.0
    %2342 = vmatpush1.msra.mxu0 0.0
    %2343 = vmatprep.subr.mxu0 0.0
    %2344 = vmatpush1.msra.mxu0 0.0
    %2345 = vmatprep.subr.mxu0 0.0
    %2346 = vmatpush1.msra.mxu0 0.0
    %2347 = vmatprep.subr.mxu0 0.0
    %2348 = vmatpush1.msra.mxu0 0.0
    %2349 = vmatprep.subr.mxu0 0.0
    %2350 = vmatpush1.msra.mxu0 0.0
    %2351 = vmatprep.subr.mxu0 0.0
    %2352 = vmatpush1.msra.mxu0 0.0
    %2353 = vmatprep.subr.mxu0 0.0
    %2354 = vmatpush1.msra.mxu0 0.0
    %2355 = vmatprep.subr.mxu0 0.0
    %2356 = vmatpush1.msra.mxu0 0.0
    %2357 = vmatprep.subr.mxu0 0.0
    %2358 = vmatpush1.msra.mxu0 0.0
    %2359 = vmatprep.subr.mxu0 0.0
    %2360 = vmatpush1.msra.mxu0 0.0
    %2361 = vmatprep.subr.mxu0 0.0
    %2362 = vmatpush1.msra.mxu0 %v2251
    %2363 = vmatprep.subr.mxu0 0.0
    %2364 = vmatpush1.msra.mxu0 %v2246
    %2365 = vmatprep.subr.mxu0 0.0
    %2366 = vmatpush2.msra.mxu0 0.0
    %2367 = vmatprep.subr.mxu0 0.0
    %2368 = vmatpush2.msra.mxu0 0.0
    %2369 = vmatprep.subr.mxu0 0.0
    %2370 = vmatpush2.msra.mxu0 0.0
    %2371 = vmatprep.subr.mxu0 0.0
    %2372 = vmatpush2.msra.mxu0 0.0
    %2373 = vmatprep.subr.mxu0 0.0
    %2374 = vmatpush2.msra.mxu0 0.0
    %2375 = vmatprep.subr.mxu0 0.0
    %2376 = vmatpush2.msra.mxu0 0.0
    %2377 = vmatprep.subr.mxu0 0.0
    %2378 = vmatpush2.msra.mxu0 0.0
    %2379 = vmatprep.subr.mxu0 0.0
    %2380 = vmatpush2.msra.mxu0 0.0
    %2381 = vmatprep.subr.mxu0 0.0
    %2382 = vmatpush2.msra.mxu0 0.0
    %2383 = vmatprep.subr.mxu0 0.0
    %2384 = vmatpush2.msra.mxu0 0.0
    %2385 = vmatprep.subr.mxu0 0.0
    %2386 = vmatpush2.msra.mxu0 0.0
    %2387 = vmatprep.subr.mxu0 0.0
    %2388 = vmatpush2.msra.mxu0 0.0
    %2389 = vmatprep.subr.mxu0 0.0
    %2390 = vmatpush2.msra.mxu0 0.0
    %2391 = vmatprep.subr.mxu0 0.0
    %2392 = vmatpush2.msra.mxu0 0.0
    %2393 = vmatprep.subr.mxu0 0.0
    %2394 = vmatpush2.msra.mxu0 0.0
    %2395 = vmatprep.subr.mxu0 0.0
    %2396 = vmatpush2.msra.mxu0 0.0
    %2397 = vmatprep.mubr.f32.mxu0 0.0
    %2398 = vmatmul.mubr.f32.gmra.mxu0 %v1471
    %v2399 = vpop.f32.mrf.mxu0
    %v2400 = vadd.f32 0.0, %v2399
    %v2401 = vpop.f32.mrf.mxu0
    %2402 = vmatprep.mubr.f32.mxu0 0.0
    %2403 = vmatmul.mubr.f32.gmra.mxu0 %v1474
    %v2404 = vpop.f32.mrf.mxu0
    %v2405 = vadd.f32 0.0, %v2404
    %v2406 = vpop.f32.mrf.mxu0
    %2407 = vdwg.mxu0
    %2408 = vmatprep.subr.mxu0 0.0
    %2409 = vmatpush1.msra.mxu0 0.0
    %2410 = vmatprep.subr.mxu0 0.0
    %2411 = vmatpush1.msra.mxu0 0.0
    %2412 = vmatprep.subr.mxu0 0.0
    %2413 = vmatpush1.msra.mxu0 0.0
    %2414 = vmatprep.subr.mxu0 0.0
    %2415 = vmatpush1.msra.mxu0 0.0
    %2416 = vmatprep.subr.mxu0 0.0
    %2417 = vmatpush1.msra.mxu0 0.0
    %2418 = vmatprep.subr.mxu0 0.0
    %2419 = vmatpush1.msra.mxu0 0.0
    %2420 = vmatprep.subr.mxu0 0.0
    %2421 = vmatpush1.msra.mxu0 0.0
    %2422 = vmatprep.subr.mxu0 0.0
    %2423 = vmatpush1.msra.mxu0 0.0
    %2424 = vmatprep.subr.mxu0 0.0
    %2425 = vmatpush1.msra.mxu0 0.0
    %2426 = vmatprep.subr.mxu0 0.0
    %2427 = vmatpush1.msra.mxu0 0.0
    %2428 = vmatprep.subr.mxu0 0.0
    %2429 = vmatpush1.msra.mxu0 0.0
    %2430 = vmatprep.subr.mxu0 0.0
    %2431 = vmatpush1.msra.mxu0 0.0
    %2432 = vmatprep.subr.mxu0 0.0
    %2433 = vmatpush1.msra.mxu0 0.0
    %2434 = vmatprep.subr.mxu0 0.0
    %2435 = vmatpush1.msra.mxu0 0.0
    %2436 = vmatprep.subr.mxu0 0.0
    %2437 = vmatpush1.msra.mxu0 %v2176
    %2438 = vmatprep.subr.mxu0 0.0
    %2439 = vmatpush1.msra.mxu0 %v2171
    %2440 = vmatprep.subr.mxu0 0.0
    %2441 = vmatpush2.msra.mxu0 0.0
    %2442 = vmatprep.subr.mxu0 0.0
    %2443 = vmatpush2.msra.mxu0 0.0
    %2444 = vmatprep.subr.mxu0 0.0
    %2445 = vmatpush2.msra.mxu0 0.0
    %2446 = vmatprep.subr.mxu0 0.0
    %2447 = vmatpush2.msra.mxu0 0.0
    %2448 = vmatprep.subr.mxu0 0.0
    %2449 = vmatpush2.msra.mxu0 0.0
    %2450 = vmatprep.subr.mxu0 0.0
    %2451 = vmatpush2.msra.mxu0 0.0
    %2452 = vmatprep.subr.mxu0 0.0
    %2453 = vmatpush2.msra.mxu0 0.0
    %2454 = vmatprep.subr.mxu0 0.0
    %2455 = vmatpush2.msra.mxu0 0.0
    %2456 = vmatprep.subr.mxu0 0.0
    %2457 = vmatpush2.msra.mxu0 0.0
    %2458 = vmatprep.subr.mxu0 0.0
    %2459 = vmatpush2.msra.mxu0 0.0
    %2460 = vmatprep.subr.mxu0 0.0
    %2461 = vmatpush2.msra.mxu0 0.0
    %2462 = vmatprep.subr.mxu0 0.0
    %2463 = vmatpush2.msra.mxu0 0.0
    %2464 = vmatprep.subr.mxu0 0.0
    %2465 = vmatpush2.msra.mxu0 0.0
    %2466 = vmatprep.subr.mxu0 0.0
    %2467 = vmatpush2.msra.mxu0 0.0
    %2468 = vmatprep.subr.mxu0 0.0
    %2469 = vmatpush2.msra.mxu0 0.0
    %2470 = vmatprep.subr.mxu0 0.0
    %2471 = vmatpush2.msra.mxu0 0.0
    %2472 = vmatprep.mubr.f32.mxu0 0.0
    %2473 = vmatmul.mubr.f32.gmra.mxu0 %v1390
    %v2474 = vpop.f32.mrf.mxu0
    %v2475 = vadd.f32 %v2400, %v2474
    %v2476 = vpop.f32.mrf.mxu0
    %2477 = vmatprep.mubr.f32.mxu0 0.0
    %2478 = vmatmul.mubr.f32.gmra.mxu0 %v1393
    %v2479 = vpop.f32.mrf.mxu0
    %v2480 = vadd.f32 %v2405, %v2479
    %v2481 = vpop.f32.mrf.mxu0
    %2482 = vdwg.mxu0
    %v2483 = vmul.f32 %v2475, 0.5
    %v2484 = vmul.f32 %v2480, 0.5
    %2485 = vmatprep.subr.mxu0 0.0
    %2486 = vmatpush1.msra.mxu0 0.0
    %2487 = vmatprep.subr.mxu0 0.0
    %2488 = vmatpush1.msra.mxu0 0.0
    %2489 = vmatprep.subr.mxu0 0.0
    %2490 = vmatpush1.msra.mxu0 0.0
    %2491 = vmatprep.subr.mxu0 0.0
    %2492 = vmatpush1.msra.mxu0 0.0
    %2493 = vmatprep.subr.mxu0 0.0
    %2494 = vmatpush1.msra.mxu0 0.0
    %2495 = vmatprep.subr.mxu0 0.0
    %2496 = vmatpush1.msra.mxu0 0.0
    %2497 = vmatprep.subr.mxu0 0.0
    %2498 = vmatpush1.msra.mxu0 0.0
    %2499 = vmatprep.subr.mxu0 0.0
    %2500 = vmatpush1.msra.mxu0 0.0
    %2501 = vmatprep.subr.mxu0 0.0
    %2502 = vmatpush1.msra.mxu0 0.0
    %2503 = vmatprep.subr.mxu0 0.0
    %2504 = vmatpush1.msra.mxu0 0.0
    %2505 = vmatprep.subr.mxu0 0.0
    %2506 = vmatpush1.msra.mxu0 0.0
    %2507 = vmatprep.subr.mxu0 0.0
    %2508 = vmatpush1.msra.mxu0 0.0
    %2509 = vmatprep.subr.mxu0 0.0
    %2510 = vmatpush1.msra.mxu0 0.0
    %2511 = vmatprep.subr.mxu0 0.0
    %2512 = vmatpush1.msra.mxu0 0.0
    %2513 = vmatprep.subr.mxu0 0.0
    %2514 = vmatpush1.msra.mxu0 %v2251
    %2515 = vmatprep.subr.mxu0 0.0
    %2516 = vmatpush1.msra.mxu0 %v2246
    %2517 = vmatprep.subr.mxu0 0.0
    %2518 = vmatpush2.msra.mxu0 0.0
    %2519 = vmatprep.subr.mxu0 0.0
    %2520 = vmatpush2.msra.mxu0 0.0
    %2521 = vmatprep.subr.mxu0 0.0
    %2522 = vmatpush2.msra.mxu0 0.0
    %2523 = vmatprep.subr.mxu0 0.0
    %2524 = vmatpush2.msra.mxu0 0.0
    %2525 = vmatprep.subr.mxu0 0.0
    %2526 = vmatpush2.msra.mxu0 0.0
    %2527 = vmatprep.subr.mxu0 0.0
    %2528 = vmatpush2.msra.mxu0 0.0
    %2529 = vmatprep.subr.mxu0 0.0
    %2530 = vmatpush2.msra.mxu0 0.0
    %2531 = vmatprep.subr.mxu0 0.0
    %2532 = vmatpush2.msra.mxu0 0.0
    %2533 = vmatprep.subr.mxu0 0.0
    %2534 = vmatpush2.msra.mxu0 0.0
    %2535 = vmatprep.subr.mxu0 0.0
    %2536 = vmatpush2.msra.mxu0 0.0
    %2537 = vmatprep.subr.mxu0 0.0
    %2538 = vmatpush2.msra.mxu0 0.0
    %2539 = vmatprep.subr.mxu0 0.0
    %2540 = vmatpush2.msra.mxu0 0.0
    %2541 = vmatprep.subr.mxu0 0.0
    %2542 = vmatpush2.msra.mxu0 0.0
    %2543 = vmatprep.subr.mxu0 0.0
    %2544 = vmatpush2.msra.mxu0 0.0
    %2545 = vmatprep.subr.mxu0 0.0
    %2546 = vmatpush2.msra.mxu0 0.0
    %2547 = vmatprep.subr.mxu0 0.0
    %2548 = vmatpush2.msra.mxu0 0.0
    %2549 = vmatprep.mubr.f32.mxu0 0.0
    %2550 = vmatmul.mubr.f32.gmra.mxu0 %v1390
    %v2551 = vpop.f32.mrf.mxu0
    %v2552 = vadd.f32 0.0, %v2551
    %v2553 = vpop.f32.mrf.mxu0
    %2554 = vmatprep.mubr.f32.mxu0 0.0
    %2555 = vmatmul.mubr.f32.gmra.mxu0 %v1393
    %v2556 = vpop.f32.mrf.mxu0
    %v2557 = vadd.f32 0.0, %v2556
    %v2558 = vpop.f32.mrf.mxu0
    %2559 = vdwg.mxu0
    %2560 = vmatprep.subr.mxu0 0.0
    %2561 = vmatpush1.msra.mxu0 0.0
    %2562 = vmatprep.subr.mxu0 0.0
    %2563 = vmatpush1.msra.mxu0 0.0
    %2564 = vmatprep.subr.mxu0 0.0
    %2565 = vmatpush1.msra.mxu0 0.0
    %2566 = vmatprep.subr.mxu0 0.0
    %2567 = vmatpush1.msra.mxu0 0.0
    %2568 = vmatprep.subr.mxu0 0.0
    %2569 = vmatpush1.msra.mxu0 0.0
    %2570 = vmatprep.subr.mxu0 0.0
    %2571 = vmatpush1.msra.mxu0 0.0
    %2572 = vmatprep.subr.mxu0 0.0
    %2573 = vmatpush1.msra.mxu0 0.0
    %2574 = vmatprep.subr.mxu0 0.0
    %2575 = vmatpush1.msra.mxu0 0.0
    %2576 = vmatprep.subr.mxu0 0.0
    %2577 = vmatpush1.msra.mxu0 0.0
    %2578 = vmatprep.subr.mxu0 0.0
    %2579 = vmatpush1.msra.mxu0 0.0
    %2580 = vmatprep.subr.mxu0 0.0
    %2581 = vmatpush1.msra.mxu0 0.0
    %2582 = vmatprep.subr.mxu0 0.0
    %2583 = vmatpush1.msra.mxu0 0.0
    %2584 = vmatprep.subr.mxu0 0.0
    %2585 = vmatpush1.msra.mxu0 0.0
    %2586 = vmatprep.subr.mxu0 0.0
    %2587 = vmatpush1.msra.mxu0 0.0
    %2588 = vmatprep.subr.mxu0 0.0
    %2589 = vmatpush1.msra.mxu0 %v2176
    %2590 = vmatprep.subr.mxu0 0.0
    %2591 = vmatpush1.msra.mxu0 %v2171
    %2592 = vmatprep.subr.mxu0 0.0
    %2593 = vmatpush2.msra.mxu0 0.0
    %2594 = vmatprep.subr.mxu0 0.0
    %2595 = vmatpush2.msra.mxu0 0.0
    %2596 = vmatprep.subr.mxu0 0.0
    %2597 = vmatpush2.msra.mxu0 0.0
    %2598 = vmatprep.subr.mxu0 0.0
    %2599 = vmatpush2.msra.mxu0 0.0
    %2600 = vmatprep.subr.mxu0 0.0
    %2601 = vmatpush2.msra.mxu0 0.0
    %2602 = vmatprep.subr.mxu0 0.0
    %2603 = vmatpush2.msra.mxu0 0.0
    %2604 = vmatprep.subr.mxu0 0.0
    %2605 = vmatpush2.msra.mxu0 0.0
    %2606 = vmatprep.subr.mxu0 0.0
    %2607 = vmatpush2.msra.mxu0 0.0
    %2608 = vmatprep.subr.mxu0 0.0
    %2609 = vmatpush2.msra.mxu0 0.0
    %2610 = vmatprep.subr.mxu0 0.0
    %2611 = vmatpush2.msra.mxu0 0.0
    %2612 = vmatprep.subr.mxu0 0.0
    %2613 = vmatpush2.msra.mxu0 0.0
    %2614 = vmatprep.subr.mxu0 0.0
    %2615 = vmatpush2.msra.mxu0 0.0
    %2616 = vmatprep.subr.mxu0 0.0
    %2617 = vmatpush2.msra.mxu0 0.0
    %2618 = vmatprep.subr.mxu0 0.0
    %2619 = vmatpush2.msra.mxu0 0.0
    %2620 = vmatprep.subr.mxu0 0.0
    %2621 = vmatpush2.msra.mxu0 0.0
    %2622 = vmatprep.subr.mxu0 0.0
    %2623 = vmatpush2.msra.mxu0 0.0
    %2624 = vmatprep.mubr.f32.mxu0 0.0
    %2625 = vmatmul.mubr.f32.gmra.mxu0 %v1471
    %v2626 = vpop.f32.mrf.mxu0
    %v2627 = vadd.f32 %v2552, %v2626
    %v2628 = vpop.f32.mrf.mxu0
    %2629 = vmatprep.mubr.f32.mxu0 0.0
    %2630 = vmatmul.mubr.f32.gmra.mxu0 %v1474
    %v2631 = vpop.f32.mrf.mxu0
    %v2632 = vadd.f32 %v2557, %v2631
    %v2633 = vpop.f32.mrf.mxu0
    %2634 = vdwg.mxu0
    %v2635 = vmul.f32 %v2627, 0.5
    %v2636 = vmul.f32 %v2632, 0.5
    %2637 = vmatprep.subr.mxu0 0.0
    %2638 = vmatpush1.msra.mxu0 0.0
    %2639 = vmatprep.subr.mxu0 0.0
    %2640 = vmatpush1.msra.mxu0 0.0
    %2641 = vmatprep.subr.mxu0 0.0
    %2642 = vmatpush1.msra.mxu0 0.0
    %2643 = vmatprep.subr.mxu0 0.0
    %2644 = vmatpush1.msra.mxu0 0.0
    %2645 = vmatprep.subr.mxu0 0.0
    %2646 = vmatpush1.msra.mxu0 0.0
    %2647 = vmatprep.subr.mxu0 0.0
    %2648 = vmatpush1.msra.mxu0 0.0
    %2649 = vmatprep.subr.mxu0 0.0
    %2650 = vmatpush1.msra.mxu0 0.0
    %2651 = vmatprep.subr.mxu0 0.0
    %2652 = vmatpush1.msra.mxu0 0.0
    %2653 = vmatprep.subr.mxu0 0.0
    %2654 = vmatpush1.msra.mxu0 0.0
    %2655 = vmatprep.subr.mxu0 0.0
    %2656 = vmatpush1.msra.mxu0 0.0
    %2657 = vmatprep.subr.mxu0 0.0
    %2658 = vmatpush1.msra.mxu0 0.0
    %2659 = vmatprep.subr.mxu0 0.0
    %2660 = vmatpush1.msra.mxu0 0.0
    %2661 = vmatprep.subr.mxu0 0.0
    %2662 = vmatpush1.msra.mxu0 0.0
    %2663 = vmatprep.subr.mxu0 0.0
    %2664 = vmatpush1.msra.mxu0 0.0
    %2665 = vmatprep.subr.mxu0 0.0
    %2666 = vmatpush1.msra.mxu0 %v2332
    %2667 = vmatprep.subr.mxu0 0.0
    %2668 = vmatpush1.msra.mxu0 %v2331
    %2669 = vmatprep.subr.mxu0 0.0
    %2670 = vmatpush2.msra.mxu0 0.0
    %2671 = vmatprep.subr.mxu0 0.0
    %2672 = vmatpush2.msra.mxu0 0.0
    %2673 = vmatprep.subr.mxu0 0.0
    %2674 = vmatpush2.msra.mxu0 0.0
    %2675 = vmatprep.subr.mxu0 0.0
    %2676 = vmatpush2.msra.mxu0 0.0
    %2677 = vmatprep.subr.mxu0 0.0
    %2678 = vmatpush2.msra.mxu0 0.0
    %2679 = vmatprep.subr.mxu0 0.0
    %2680 = vmatpush2.msra.mxu0 0.0
    %2681 = vmatprep.subr.mxu0 0.0
    %2682 = vmatpush2.msra.mxu0 0.0
    %2683 = vmatprep.subr.mxu0 0.0
    %2684 = vmatpush2.msra.mxu0 0.0
    %2685 = vmatprep.subr.mxu0 0.0
    %2686 = vmatpush2.msra.mxu0 0.0
    %2687 = vmatprep.subr.mxu0 0.0
    %2688 = vmatpush2.msra.mxu0 0.0
    %2689 = vmatprep.subr.mxu0 0.0
    %2690 = vmatpush2.msra.mxu0 0.0
    %2691 = vmatprep.subr.mxu0 0.0
    %2692 = vmatpush2.msra.mxu0 0.0
    %2693 = vmatprep.subr.mxu0 0.0
    %2694 = vmatpush2.msra.mxu0 0.0
    %2695 = vmatprep.subr.mxu0 0.0
    %2696 = vmatpush2.msra.mxu0 0.0
    %2697 = vmatprep.subr.mxu0 0.0
    %2698 = vmatpush2.msra.mxu0 0.0
    %2699 = vmatprep.subr.mxu0 0.0
    %2700 = vmatpush2.msra.mxu0 0.0
    %2701 = vmatprep.mubr.f32.mxu0 0.0
    %2702 = vmatmul.mubr.f32.gmra.mxu0 %v1552
    %v2703 = vpop.f32.mrf.mxu0
    %v2704 = vadd.f32 0.0, %v2703
    %v2705 = vpop.f32.mrf.mxu0
    %2706 = vmatprep.mubr.f32.mxu0 0.0
    %2707 = vmatmul.mubr.f32.gmra.mxu0 %v1555
    %v2708 = vpop.f32.mrf.mxu0
    %v2709 = vadd.f32 0.0, %v2708
    %v2710 = vpop.f32.mrf.mxu0
    %2711 = vdwg.mxu0
    %2712 = vmatprep.subr.mxu0 0.0
    %2713 = vmatpush1.msra.mxu0 0.0
    %2714 = vmatprep.subr.mxu0 0.0
    %2715 = vmatpush1.msra.mxu0 0.0
    %2716 = vmatprep.subr.mxu0 0.0
    %2717 = vmatpush1.msra.mxu0 0.0
    %2718 = vmatprep.subr.mxu0 0.0
    %2719 = vmatpush1.msra.mxu0 0.0
    %2720 = vmatprep.subr.mxu0 0.0
    %2721 = vmatpush1.msra.mxu0 0.0
    %2722 = vmatprep.subr.mxu0 0.0
    %2723 = vmatpush1.msra.mxu0 0.0
    %2724 = vmatprep.subr.mxu0 0.0
    %2725 = vmatpush1.msra.mxu0 0.0
    %2726 = vmatprep.subr.mxu0 0.0
    %2727 = vmatpush1.msra.mxu0 0.0
    %2728 = vmatprep.subr.mxu0 0.0
    %2729 = vmatpush1.msra.mxu0 0.0
    %2730 = vmatprep.subr.mxu0 0.0
    %2731 = vmatpush1.msra.mxu0 0.0
    %2732 = vmatprep.subr.mxu0 0.0
    %2733 = vmatpush1.msra.mxu0 0.0
    %2734 = vmatprep.subr.mxu0 0.0
    %2735 = vmatpush1.msra.mxu0 0.0
    %2736 = vmatprep.subr.mxu0 0.0
    %2737 = vmatpush1.msra.mxu0 0.0
    %2738 = vmatprep.subr.mxu0 0.0
    %2739 = vmatpush1.msra.mxu0 0.0
    %2740 = vmatprep.subr.mxu0 0.0
    %2741 = vmatpush1.msra.mxu0 %v2326
    %2742 = vmatprep.subr.mxu0 0.0
    %2743 = vmatpush1.msra.mxu0 %v2321
    %2744 = vmatprep.subr.mxu0 0.0
    %2745 = vmatpush2.msra.mxu0 0.0
    %2746 = vmatprep.subr.mxu0 0.0
    %2747 = vmatpush2.msra.mxu0 0.0
    %2748 = vmatprep.subr.mxu0 0.0
    %2749 = vmatpush2.msra.mxu0 0.0
    %2750 = vmatprep.subr.mxu0 0.0
    %2751 = vmatpush2.msra.mxu0 0.0
    %2752 = vmatprep.subr.mxu0 0.0
    %2753 = vmatpush2.msra.mxu0 0.0
    %2754 = vmatprep.subr.mxu0 0.0
    %2755 = vmatpush2.msra.mxu0 0.0
    %2756 = vmatprep.subr.mxu0 0.0
    %2757 = vmatpush2.msra.mxu0 0.0
    %2758 = vmatprep.subr.mxu0 0.0
    %2759 = vmatpush2.msra.mxu0 0.0
    %2760 = vmatprep.subr.mxu0 0.0
    %2761 = vmatpush2.msra.mxu0 0.0
    %2762 = vmatprep.subr.mxu0 0.0
    %2763 = vmatpush2.msra.mxu0 0.0
    %2764 = vmatprep.subr.mxu0 0.0
    %2765 = vmatpush2.msra.mxu0 0.0
    %2766 = vmatprep.subr.mxu0 0.0
    %2767 = vmatpush2.msra.mxu0 0.0
    %2768 = vmatprep.subr.mxu0 0.0
    %2769 = vmatpush2.msra.mxu0 0.0
    %2770 = vmatprep.subr.mxu0 0.0
    %2771 = vmatpush2.msra.mxu0 0.0
    %2772 = vmatprep.subr.mxu0 0.0
    %2773 = vmatpush2.msra.mxu0 0.0
    %2774 = vmatprep.subr.mxu0 0.0
    %2775 = vmatpush2.msra.mxu0 0.0
    %2776 = vmatprep.mubr.f32.mxu0 0.0
    %2777 = vmatmul.mubr.f32.gmra.mxu0 %v2016
    %v2778 = vpop.f32.mrf.mxu0
    %v2779 = vadd.f32 %v2704, %v2778
    %v2780 = vpop.f32.mrf.mxu0
    %2781 = vmatprep.mubr.f32.mxu0 0.0
    %2782 = vmatmul.mubr.f32.gmra.mxu0 %v2019
    %v2783 = vpop.f32.mrf.mxu0
    %v2784 = vadd.f32 %v2709, %v2783
    %v2785 = vpop.f32.mrf.mxu0
    %2786 = vdwg.mxu0
    %v2787 = vmul.f32 %v2779, 0.2
    %v2788 = vmul.f32 %v2784, 0.2
    %v2789 = vadd.f32 %v1786, %v2483
    %v2790 = vadd.f32 %v1787, %v2484
    %v2791 = vadd.f32 %v1938, %v2635
    %v2792 = vadd.f32 %v1939, %v2636
    %v2793 = vadd.f32 %v2096, %v2787
    %v2794 = vadd.f32 %v2097, %v2788
    %v2795 = vmul.f32 %v2789, 0.5
    %v2796 = vmul.f32 %v2790, 0.5
    %v2797 = vmul.f32 %v2791, 0.5
    %v2798 = vmul.f32 %v2792, 0.5
    %v2799 = vmul.f32 %v2793, 0.5
    %v2800 = vmul.f32 %v2794, 0.5
    %v2801 = vld [vmem:[%s14] sm:$0xff]
    %v2802 = vld [vmem:[%s14 + $0x8] sm:$0xff]
    %v2803 = vld [vmem:[%s14 + $0x10] sm:$0xff]
    %v2804 = vld [vmem:[%s14 + $0x18] sm:$0xff]
    %v2805 = vld [vmem:[#allocation20] sm:$0xff]
    %v2806 = vld [vmem:[#allocation20 + $0x8] sm:$0xff]
    %v2807 = vld [vmem:[#allocation20 + $0x10] sm:$0xff]
    %v2808 = vld [vmem:[#allocation20 + $0x18] sm:$0xff]
    %v2809 = vld [vmem:[%s16] sm:$0x1]
    %v2811 = vsel %vm528, %v2797, 0
    %v2814 = vsel %vm528, %v2798, 0
    %2816 = vmatprep.subr.mxu0 0.0
    %2817 = vmatpush1.msra.mxu0 0.0
    %2818 = vmatprep.subr.mxu0 0.0
    %2819 = vmatpush1.msra.mxu0 0.0
    %2820 = vmatprep.subr.mxu0 0.0
    %2821 = vmatpush1.msra.mxu0 0.0
    %2822 = vmatprep.subr.mxu0 0.0
    %2823 = vmatpush1.msra.mxu0 0.0
    %2824 = vmatprep.subr.mxu0 0.0
    %2825 = vmatpush1.msra.mxu0 0.0
    %2826 = vmatprep.subr.mxu0 0.0
    %2827 = vmatpush1.msra.mxu0 0.0
    %2828 = vmatprep.subr.mxu0 0.0
    %2829 = vmatpush1.msra.mxu0 0.0
    %2830 = vmatprep.subr.mxu0 0.0
    %2831 = vmatpush1.msra.mxu0 0.0
    %2832 = vmatprep.subr.mxu0 0.0
    %2833 = vmatpush1.msra.mxu0 0.0
    %2834 = vmatprep.subr.mxu0 0.0
    %2835 = vmatpush1.msra.mxu0 0.0
    %2836 = vmatprep.subr.mxu0 0.0
    %2837 = vmatpush1.msra.mxu0 0.0
    %2838 = vmatprep.subr.mxu0 0.0
    %2839 = vmatpush1.msra.mxu0 0.0
    %2840 = vmatprep.subr.mxu0 0.0
    %2841 = vmatpush1.msra.mxu0 %v2808
    %2842 = vmatprep.subr.mxu0 0.0
    %2843 = vmatpush1.msra.mxu0 %v2807
    %2844 = vmatprep.subr.mxu0 0.0
    %2845 = vmatpush1.msra.mxu0 %v2806
    %2846 = vmatprep.subr.mxu0 0.0
    %2847 = vmatpush1.msra.mxu0 %v2805
    %2848 = vmatprep.subr.mxu0 0.0
    %2849 = vmatpush2.msra.mxu0 0.0
    %2850 = vmatprep.subr.mxu0 0.0
    %2851 = vmatpush2.msra.mxu0 0.0
    %2852 = vmatprep.subr.mxu0 0.0
    %2853 = vmatpush2.msra.mxu0 0.0
    %2854 = vmatprep.subr.mxu0 0.0
    %2855 = vmatpush2.msra.mxu0 0.0
    %2856 = vmatprep.subr.mxu0 0.0
    %2857 = vmatpush2.msra.mxu0 0.0
    %2858 = vmatprep.subr.mxu0 0.0
    %2859 = vmatpush2.msra.mxu0 0.0
    %2860 = vmatprep.subr.mxu0 0.0
    %2861 = vmatpush2.msra.mxu0 0.0
    %2862 = vmatprep.subr.mxu0 0.0
    %2863 = vmatpush2.msra.mxu0 0.0
    %2864 = vmatprep.subr.mxu0 0.0
    %2865 = vmatpush2.msra.mxu0 0.0
    %2866 = vmatprep.subr.mxu0 0.0
    %2867 = vmatpush2.msra.mxu0 0.0
    %2868 = vmatprep.subr.mxu0 0.0
    %2869 = vmatpush2.msra.mxu0 0.0
    %2870 = vmatprep.subr.mxu0 0.0
    %2871 = vmatpush2.msra.mxu0 0.0
    %2872 = vmatprep.subr.mxu0 0.0
    %2873 = vmatpush2.msra.mxu0 0.0
    %2874 = vmatprep.subr.mxu0 0.0
    %2875 = vmatpush2.msra.mxu0 0.0
    %2876 = vmatprep.subr.mxu0 0.0
    %2877 = vmatpush2.msra.mxu0 0.0
    %2878 = vmatprep.subr.mxu0 0.0
    %2879 = vmatpush2.msra.mxu0 0.0
    %2880 = vmatprep.mubr.f32.mxu0 0.0
    %2881 = vmatmul.mubr.f32.gmra.mxu0 %v2811
    %v2882 = vpop.f32.mrf.mxu0
    %v2883 = vadd.f32 0.0, %v2882
    %v2884 = vpop.f32.mrf.mxu0
    %2885 = vmatprep.mubr.f32.mxu0 0.0
    %2886 = vmatmul.mubr.f32.gmra.mxu0 %v2814
    %v2887 = vpop.f32.mrf.mxu0
    %v2888 = vadd.f32 0.0, %v2887
    %v2889 = vpop.f32.mrf.mxu0
    %2890 = vdwg.mxu0
    %v2892 = vsel %vm528, %v2795, 0
    %v2895 = vsel %vm528, %v2796, 0
    %2897 = vmatprep.subr.mxu0 0.0
    %2898 = vmatpush1.msra.mxu0 0.0
    %2899 = vmatprep.subr.mxu0 0.0
    %2900 = vmatpush1.msra.mxu0 0.0
    %2901 = vmatprep.subr.mxu0 0.0
    %2902 = vmatpush1.msra.mxu0 0.0
    %2903 = vmatprep.subr.mxu0 0.0
    %2904 = vmatpush1.msra.mxu0 0.0
    %2905 = vmatprep.subr.mxu0 0.0
    %2906 = vmatpush1.msra.mxu0 0.0
    %2907 = vmatprep.subr.mxu0 0.0
    %2908 = vmatpush1.msra.mxu0 0.0
    %2909 = vmatprep.subr.mxu0 0.0
    %2910 = vmatpush1.msra.mxu0 0.0
    %2911 = vmatprep.subr.mxu0 0.0
    %2912 = vmatpush1.msra.mxu0 0.0
    %2913 = vmatprep.subr.mxu0 0.0
    %2914 = vmatpush1.msra.mxu0 0.0
    %2915 = vmatprep.subr.mxu0 0.0
    %2916 = vmatpush1.msra.mxu0 0.0
    %2917 = vmatprep.subr.mxu0 0.0
    %2918 = vmatpush1.msra.mxu0 0.0
    %2919 = vmatprep.subr.mxu0 0.0
    %2920 = vmatpush1.msra.mxu0 0.0
    %2921 = vmatprep.subr.mxu0 0.0
    %2922 = vmatpush1.msra.mxu0 %v2804
    %2923 = vmatprep.subr.mxu0 0.0
    %2924 = vmatpush1.msra.mxu0 %v2803
    %2925 = vmatprep.subr.mxu0 0.0
    %2926 = vmatpush1.msra.mxu0 %v2802
    %2927 = vmatprep.subr.mxu0 0.0
    %2928 = vmatpush1.msra.mxu0 %v2801
    %2929 = vmatprep.subr.mxu0 0.0
    %2930 = vmatpush2.msra.mxu0 0.0
    %2931 = vmatprep.subr.mxu0 0.0
    %2932 = vmatpush2.msra.mxu0 0.0
    %2933 = vmatprep.subr.mxu0 0.0
    %2934 = vmatpush2.msra.mxu0 0.0
    %2935 = vmatprep.subr.mxu0 0.0
    %2936 = vmatpush2.msra.mxu0 0.0
    %2937 = vmatprep.subr.mxu0 0.0
    %2938 = vmatpush2.msra.mxu0 0.0
    %2939 = vmatprep.subr.mxu0 0.0
    %2940 = vmatpush2.msra.mxu0 0.0
    %2941 = vmatprep.subr.mxu0 0.0
    %2942 = vmatpush2.msra.mxu0 0.0
    %2943 = vmatprep.subr.mxu0 0.0
    %2944 = vmatpush2.msra.mxu0 0.0
    %2945 = vmatprep.subr.mxu0 0.0
    %2946 = vmatpush2.msra.mxu0 0.0
    %2947 = vmatprep.subr.mxu0 0.0
    %2948 = vmatpush2.msra.mxu0 0.0
    %2949 = vmatprep.subr.mxu0 0.0
    %2950 = vmatpush2.msra.mxu0 0.0
    %2951 = vmatprep.subr.mxu0 0.0
    %2952 = vmatpush2.msra.mxu0 0.0
    %2953 = vmatprep.subr.mxu0 0.0
    %2954 = vmatpush2.msra.mxu0 0.0
    %2955 = vmatprep.subr.mxu0 0.0
    %2956 = vmatpush2.msra.mxu0 0.0
    %2957 = vmatprep.subr.mxu0 0.0
    %2958 = vmatpush2.msra.mxu0 0.0
    %2959 = vmatprep.subr.mxu0 0.0
    %2960 = vmatpush2.msra.mxu0 0.0
    %2961 = vmatprep.mubr.f32.mxu0 0.0
    %2962 = vmatmul.mubr.f32.gmra.mxu0 %v2892
    %v2963 = vpop.f32.mrf.mxu0
    %v2964 = vadd.f32 %v2883, %v2963
    %v2965 = vpop.f32.mrf.mxu0
    %2966 = vmatprep.mubr.f32.mxu0 0.0
    %2967 = vmatmul.mubr.f32.gmra.mxu0 %v2895
    %v2968 = vpop.f32.mrf.mxu0
    %v2969 = vadd.f32 %v2888, %v2968
    %v2970 = vpop.f32.mrf.mxu0
    %2971 = vdwg.mxu0
    %v2973 = vlaneseq
    %v2974 = vshrl.u32 %v2973, 7
    %v2975 = vsub.s32 0, %v2974
    %v2976 = vrot.slane %v2809, %v2975
    %v2978 = vadd.f32 %v2964, %v2976
    %v2979 = vadd.f32 %v2969, %v2976
    %v2980 = vld [vmem:[#allocation22] sm:$0xff]
    %v2981 = vld [vmem:[#allocation22 + $0x8] sm:$0xff]
    %v2982 = vld [vmem:[#allocation22 + $0x10] sm:$0xff]
    %v2983 = vld [vmem:[#allocation22 + $0x18] sm:$0xff]
    %v2984 = vld [vmem:[#allocation23] sm:$0xff]
    %v2985 = vld [vmem:[#allocation23 + $0x8] sm:$0xff]
    %v2986 = vld [vmem:[#allocation23 + $0x10] sm:$0xff]
    %v2987 = vld [vmem:[#allocation23 + $0x18] sm:$0xff]
    %v2988 = vld [vmem:[%s19] sm:$0x1]
    %v2990 = vsel %vm528, %v2799, 0
    %v2993 = vsel %vm528, %v2800, 0
    %2995 = vmatprep.subr.mxu0 0.0
    %2996 = vmatpush1.msra.mxu0 0.0
    %2997 = vmatprep.subr.mxu0 0.0
    %2998 = vmatpush1.msra.mxu0 0.0
    %2999 = vmatprep.subr.mxu0 0.0
    %3000 = vmatpush1.msra.mxu0 0.0
    %3001 = vmatprep.subr.mxu0 0.0
    %3002 = vmatpush1.msra.mxu0 0.0
    %3003 = vmatprep.subr.mxu0 0.0
    %3004 = vmatpush1.msra.mxu0 0.0
    %3005 = vmatprep.subr.mxu0 0.0
    %3006 = vmatpush1.msra.mxu0 0.0
    %3007 = vmatprep.subr.mxu0 0.0
    %3008 = vmatpush1.msra.mxu0 0.0
    %3009 = vmatprep.subr.mxu0 0.0
    %3010 = vmatpush1.msra.mxu0 0.0
    %3011 = vmatprep.subr.mxu0 0.0
    %3012 = vmatpush1.msra.mxu0 0.0
    %3013 = vmatprep.subr.mxu0 0.0
    %3014 = vmatpush1.msra.mxu0 0.0
    %3015 = vmatprep.subr.mxu0 0.0
    %3016 = vmatpush1.msra.mxu0 0.0
    %3017 = vmatprep.subr.mxu0 0.0
    %3018 = vmatpush1.msra.mxu0 0.0
    %3019 = vmatprep.subr.mxu0 0.0
    %3020 = vmatpush1.msra.mxu0 %v2987
    %3021 = vmatprep.subr.mxu0 0.0
    %3022 = vmatpush1.msra.mxu0 %v2986
    %3023 = vmatprep.subr.mxu0 0.0
    %3024 = vmatpush1.msra.mxu0 %v2985
    %3025 = vmatprep.subr.mxu0 0.0
    %3026 = vmatpush1.msra.mxu0 %v2984
    %3027 = vmatprep.subr.mxu0 0.0
    %3028 = vmatpush2.msra.mxu0 0.0
    %3029 = vmatprep.subr.mxu0 0.0
    %3030 = vmatpush2.msra.mxu0 0.0
    %3031 = vmatprep.subr.mxu0 0.0
    %3032 = vmatpush2.msra.mxu0 0.0
    %3033 = vmatprep.subr.mxu0 0.0
    %3034 = vmatpush2.msra.mxu0 0.0
    %3035 = vmatprep.subr.mxu0 0.0
    %3036 = vmatpush2.msra.mxu0 0.0
    %3037 = vmatprep.subr.mxu0 0.0
    %3038 = vmatpush2.msra.mxu0 0.0
    %3039 = vmatprep.subr.mxu0 0.0
    %3040 = vmatpush2.msra.mxu0 0.0
    %3041 = vmatprep.subr.mxu0 0.0
    %3042 = vmatpush2.msra.mxu0 0.0
    %3043 = vmatprep.subr.mxu0 0.0
    %3044 = vmatpush2.msra.mxu0 0.0
    %3045 = vmatprep.subr.mxu0 0.0
    %3046 = vmatpush2.msra.mxu0 0.0
    %3047 = vmatprep.subr.mxu0 0.0
    %3048 = vmatpush2.msra.mxu0 0.0
    %3049 = vmatprep.subr.mxu0 0.0
    %3050 = vmatpush2.msra.mxu0 0.0
    %3051 = vmatprep.subr.mxu0 0.0
    %3052 = vmatpush2.msra.mxu0 0.0
    %3053 = vmatprep.subr.mxu0 0.0
    %3054 = vmatpush2.msra.mxu0 0.0
    %3055 = vmatprep.subr.mxu0 0.0
    %3056 = vmatpush2.msra.mxu0 0.0
    %3057 = vmatprep.subr.mxu0 0.0
    %3058 = vmatpush2.msra.mxu0 0.0
    %3059 = vmatprep.mubr.f32.mxu0 0.0
    %3060 = vmatmul.mubr.f32.gmra.mxu0 %v2990
    %v3061 = vpop.f32.mrf.mxu0
    %v3062 = vadd.f32 0.0, %v3061
    %v3063 = vpop.f32.mrf.mxu0
    %3064 = vmatprep.mubr.f32.mxu0 0.0
    %3065 = vmatmul.mubr.f32.gmra.mxu0 %v2993
    %v3066 = vpop.f32.mrf.mxu0
    %v3067 = vadd.f32 0.0, %v3066
    %v3068 = vpop.f32.mrf.mxu0
    %3069 = vdwg.mxu0
    %v3071 = vsel %vm528, %v2978, 0
    %v3074 = vsel %vm528, %v2979, 0
    %3076 = vmatprep.subr.mxu0 0.0
    %3077 = vmatpush1.msra.mxu0 0.0
    %3078 = vmatprep.subr.mxu0 0.0
    %3079 = vmatpush1.msra.mxu0 0.0
    %3080 = vmatprep.subr.mxu0 0.0
    %3081 = vmatpush1.msra.mxu0 0.0
    %3082 = vmatprep.subr.mxu0 0.0
    %3083 = vmatpush1.msra.mxu0 0.0
    %3084 = vmatprep.subr.mxu0 0.0
    %3085 = vmatpush1.msra.mxu0 0.0
    %3086 = vmatprep.subr.mxu0 0.0
    %3087 = vmatpush1.msra.mxu0 0.0
    %3088 = vmatprep.subr.mxu0 0.0
    %3089 = vmatpush1.msra.mxu0 0.0
    %3090 = vmatprep.subr.mxu0 0.0
    %3091 = vmatpush1.msra.mxu0 0.0
    %3092 = vmatprep.subr.mxu0 0.0
    %3093 = vmatpush1.msra.mxu0 0.0
    %3094 = vmatprep.subr.mxu0 0.0
    %3095 = vmatpush1.msra.mxu0 0.0
    %3096 = vmatprep.subr.mxu0 0.0
    %3097 = vmatpush1.msra.mxu0 0.0
    %3098 = vmatprep.subr.mxu0 0.0
    %3099 = vmatpush1.msra.mxu0 0.0
    %3100 = vmatprep.subr.mxu0 0.0
    %3101 = vmatpush1.msra.mxu0 %v2983
    %3102 = vmatprep.subr.mxu0 0.0
    %3103 = vmatpush1.msra.mxu0 %v2982
    %3104 = vmatprep.subr.mxu0 0.0
    %3105 = vmatpush1.msra.mxu0 %v2981
    %3106 = vmatprep.subr.mxu0 0.0
    %3107 = vmatpush1.msra.mxu0 %v2980
    %3108 = vmatprep.subr.mxu0 0.0
    %3109 = vmatpush2.msra.mxu0 0.0
    %3110 = vmatprep.subr.mxu0 0.0
    %3111 = vmatpush2.msra.mxu0 0.0
    %3112 = vmatprep.subr.mxu0 0.0
    %3113 = vmatpush2.msra.mxu0 0.0
    %3114 = vmatprep.subr.mxu0 0.0
    %3115 = vmatpush2.msra.mxu0 0.0
    %3116 = vmatprep.subr.mxu0 0.0
    %3117 = vmatpush2.msra.mxu0 0.0
    %3118 = vmatprep.subr.mxu0 0.0
    %3119 = vmatpush2.msra.mxu0 0.0
    %3120 = vmatprep.subr.mxu0 0.0
    %3121 = vmatpush2.msra.mxu0 0.0
    %3122 = vmatprep.subr.mxu0 0.0
    %3123 = vmatpush2.msra.mxu0 0.0
    %3124 = vmatprep.subr.mxu0 0.0
    %3125 = vmatpush2.msra.mxu0 0.0
    %3126 = vmatprep.subr.mxu0 0.0
    %3127 = vmatpush2.msra.mxu0 0.0
    %3128 = vmatprep.subr.mxu0 0.0
    %3129 = vmatpush2.msra.mxu0 0.0
    %3130 = vmatprep.subr.mxu0 0.0
    %3131 = vmatpush2.msra.mxu0 0.0
    %3132 = vmatprep.subr.mxu0 0.0
    %3133 = vmatpush2.msra.mxu0 0.0
    %3134 = vmatprep.subr.mxu0 0.0
    %3135 = vmatpush2.msra.mxu0 0.0
    %3136 = vmatprep.subr.mxu0 0.0
    %3137 = vmatpush2.msra.mxu0 0.0
    %3138 = vmatprep.subr.mxu0 0.0
    %3139 = vmatpush2.msra.mxu0 0.0
    %3140 = vmatprep.mubr.f32.mxu0 0.0
    %3141 = vmatmul.mubr.f32.gmra.mxu0 %v3071
    %v3142 = vpop.f32.mrf.mxu0
    %v3143 = vadd.f32 %v3062, %v3142
    %v3144 = vpop.f32.mrf.mxu0
    %3145 = vmatprep.mubr.f32.mxu0 0.0
    %3146 = vmatmul.mubr.f32.gmra.mxu0 %v3074
    %v3147 = vpop.f32.mrf.mxu0
    %v3148 = vadd.f32 %v3067, %v3147
    %v3149 = vpop.f32.mrf.mxu0
    %3150 = vdwg.mxu0
    %v3152 = vlaneseq
    %v3153 = vshrl.u32 %v3152, 7
    %v3154 = vsub.s32 0, %v3153
    %v3155 = vrot.slane %v2988, %v3154
    %v3157 = vadd.f32 %v3143, %v3155
    %v3158 = vadd.f32 %v3148, %v3155
    %3159 = vst.msk [vmem:[#allocation25] sm:$0xff] %vm528, %v3157
    %3160 = vst.msk [vmem:[#allocation25 + $0x8] sm:$0xff] %vm528, %v3158
    %3161 = vst.msk [vmem:[#allocation26] sm:$0xff] %vm528, %v713
    %3162 = vst.msk [vmem:[#allocation26 + $0x8] sm:$0xff] %vm528, %v714
    %3163 = vst.msk [vmem:[#allocation26 + $0x10] sm:$0xff] %vm528, %v715
    // Predicated region
    $region138: #{tpu_custom_call.1} parent=1 // pred_check
      _
    $region139: #{tpu_custom_call.1} parent=1 // pred_check_branch
      %3165 = sbr.rel (0) target = $region141
    $region140: #{tpu_custom_call.1} parent=1 // pred_region
      %s3167 = ssub.s32 256, 256
      %3168 = vsyncadd [#allocation4], %s3167
      %s3169 = sshll.u32 [#allocation25], 4
      %s3170 = int_to_ptr.vmem [resolvable:$true] %s3169
      %3175 = dma.vmem_to_hbm [thread:$0]  %s3170, 256, %s20, [#allocation4], 128, 128, 8
    $region141: #{tpu_custom_call.1} parent=1 // pred_fallthru
      _
    // Predicated region
    $region142: #{tpu_custom_call.1} parent=1 // pred_check
      _
    $region143: #{tpu_custom_call.1} parent=1 // pred_check_branch
      %3177 = sbr.rel (0) target = $region145
    $region144: #{tpu_custom_call.1} parent=1 // pred_region
      %s3179 = ssub.s32 384, 384
      %3180 = vsyncadd [#allocation27], %s3179
      %s3181 = sshll.u32 [#allocation26], 4
      %s3182 = int_to_ptr.vmem [resolvable:$true] %s3181
      %3187 = dma.vmem_to_hbm [thread:$0]  %s3182, 384, %s21, [#allocation27], 128, 128, 8
    $region145: #{tpu_custom_call.1} parent=1 // pred_fallthru
      _
    // Predicated region
    $region146: #{tpu_custom_call.1} parent=1 // pred_check
      _
    $region147: #{tpu_custom_call.1} parent=1 // pred_check_branch
      %3189 = sbr.rel (0) target = $region149
    $region148: #{tpu_custom_call.1} parent=1 // pred_region
      %3190 = dma.done [#allocation4], 256
    $region149: #{tpu_custom_call.1} parent=1 // pred_fallthru
      _
    // Predicated region
    $region150: #{tpu_custom_call.1} parent=1 // pred_check
      _
    $region151: #{tpu_custom_call.1} parent=1 // pred_check_branch
      %3192 = sbr.rel (0) target = $region153
    $region152: #{tpu_custom_call.1} parent=1 // pred_region
      %3193 = dma.done [#allocation27], 384
    $region153: #{tpu_custom_call.1} parent=1 // pred_fallthru
      _
    %3194 = vsyncpa [#allocation3], 1
    %3195 = vsyncpa [#allocation6], 1
    %3196 = vsyncpa [#allocation9], 1
    %3197 = vsyncpa [#allocation12], 1
    %3198 = vsyncpa [#allocation15], 1
    %3199 = vsyncpa [#allocation18], 1
    %3200 = vsyncpa [#allocation21], 1
    %3201 = vsyncpa [#allocation24], 1
    %3202 = vsyncpa [#allocation4], 1
    %3203 = vsyncpa [#allocation27], 1

</llo_original>
